<compile_context>
chip_gen: v6e
topology: v6e:2x2x1
jax: 0.10.0
libtpu: 0.0.40
codegen_flags: <defaults>
</compile_context>

<pallas_src>
import math
from functools import partial

import numpy as np
import jax
import jax.numpy as jnp
from jax.experimental import pallas as pl
from jax.experimental.pallas import tpu as pltpu  # noqa: F401  (TPU backend assumed)

LN_EPS = 1e-12  # HF BertConfig default layer_norm_eps


# --------------------------- blob layout (shared by pack & kernel) ---------------------------

def _offsets(vocab, H, F, B, S, layers):
    """Static row offsets inside the two packed parameter blobs."""
    Vp = -(-vocab // 16) * 16          # bf16 sublane tile = 16 -> keep row offsets aligned
    per_w = 3 * H + F                  # rows per layer: wqkv(H) + wo(H) + w1(H) + w2(F)
    BS = B * S
    v_pos = -(-(3 + B) // 8) * 8       # align the pos+type block to the f32 sublane tile
    v_l0 = v_pos + BS
    return dict(
        Vp=Vp,
        w_layer=[Vp + l * per_w for l in range(layers)],
        w_total=Vp + layers * per_w,
        w_cols=3 * H,
        v_emb_g=0, v_emb_b=1, v_lin=2, v_cls=3,
        v_pos=v_pos,
        v_layer=[v_l0 + 8 * l for l in range(layers)],
        v_total=v_l0 + 8 * layers,
        v_cols=max(3 * H, BS, F, H),
    )


# --------------------------- fused Pallas kernel ---------------------------

def _bert_fused_kernel(ids_ref, w_ref, v_ref, o_ref, *, B, S, H, F, heads, layers, vocab):
    """Whole forward in one VMEM-resident kernel.

    ids_ref : (B*S, 1) int32   token ids
    w_ref   : (Wrows, 3H) bf16 packed matrices: word_emb + per-layer [wqkv|wo|w1|w2]
    v_ref   : (Vrows, Vc) f32  packed vectors: LN params, biases, lin row, cls
                               selector matrix, pre-tiled pos+type embeddings
    o_ref   : (B, 1) f32       sigmoid(logits)
    """
    f32, bf16 = jnp.float32, jnp.bfloat16
    BS = B * S
    dh = H // heads
    off = _offsets(vocab, H, F, B, S, layers)
    Vp = off["Vp"]

    def vrow(r, w):                       # (1, w) f32 parameter row
        return v_ref[r:r + 1, 0:w]

    def layer_norm(x, g, b):
        mu = jnp.mean(x, axis=-1, keepdims=True)
        var = jnp.mean(jnp.square(x - mu), axis=-1, keepdims=True)
        return (x - mu) * jax.lax.rsqrt(var + LN_EPS) * g + b

    # ---- fused embedding lookup: one-hot matmul gather on the MXU ----
    ids = ids_ref[...]                                                  # (BS, 1) int32
    col = jax.lax.broadcasted_iota(jnp.int32, (BS, Vp), 1)
    onehot = jnp.where(col == ids, 1.0, 0.0).astype(bf16)               # (BS, Vp)
    word = w_ref[0:Vp, 0:H]                                             # (Vp, H) bf16
    x = jnp.dot(onehot, word, preferred_element_type=f32)               # (BS, H) word emb
    x = x + v_ref[off["v_pos"]:off["v_pos"] + BS, 0:H]                  # + pos + type emb
    x = layer_norm(x, vrow(off["v_emb_g"], H), vrow(off["v_emb_b"], H))

    for l in range(layers):                                             # static unroll (L=2)
        wb = off["w_layer"][l]
        vb = off["v_layer"][l]
        wqkv = w_ref[wb:wb + H, 0:3 * H]                                # (H, 3H); Q pre-scaled by 1/sqrt(dh)
        wo = w_ref[wb + H:wb + 2 * H, 0:H]                              # (H, H)
        w1 = w_ref[wb + 2 * H:wb + 3 * H, 0:F]                          # (H, F)
        w2 = w_ref[wb + 3 * H:wb + 3 * H + F, 0:H]                      # (F, H)

        # --- fused QKV projection (single lane-dense matmul) ---
        qkv = jnp.dot(x.astype(bf16), wqkv, preferred_element_type=f32) + vrow(vb + 0, 3 * H)
        qkv3 = qkv.reshape(B, S, 3 * H)                                 # split leading dim (tile-aligned)

        # --- self-attention: batched over batch, static unroll over heads ---
        ctx = []
        for h in range(heads):                                          # heads are independent -> ILP
            q = qkv3[:, :, h * dh:(h + 1) * dh].astype(bf16)            # (B, S, dh)
            k = qkv3[:, :, H + h * dh:H + (h + 1) * dh].astype(bf16)
            v = qkv3[:, :, 2 * H + h * dh:2 * H + (h + 1) * dh].astype(bf16)
            s = jnp.einsum("bqd,bkd->bqk", q, k, preferred_element_type=f32)   # (B, S, S)
            s = s - jnp.max(s, axis=-1, keepdims=True)
            p = jnp.exp(s)
            p = p * pl.reciprocal(jnp.sum(p, axis=-1, keepdims=True), approx=True)
            ctx.append(jnp.einsum("bqk,bkd->bqd", p.astype(bf16), v,
                                  preferred_element_type=f32))          # (B, S, dh)
        ctx = jnp.concatenate(ctx, axis=-1).reshape(BS, H)              # (BS, H)

        attn = jnp.dot(ctx.astype(bf16), wo, preferred_element_type=f32) + vrow(vb + 1, H)
        # attention-output dropout = identity (eval)
        x = layer_norm(attn + x, vrow(vb + 2, H), vrow(vb + 3, H))

        # --- FFN ---
        ffn = jnp.dot(x.astype(bf16), w1, preferred_element_type=f32) + vrow(vb + 4, F)
        # TODO(synk): HF BERT uses exact erf-GELU; tanh approximation used for Mosaic-friendly lowering.
        ffn = jax.nn.gelu(ffn, approximate=True)
        ffn = jnp.dot(ffn.astype(bf16), w2, preferred_element_type=f32) + vrow(vb + 5, H)
        # output dropout = identity (eval)
        x = layer_norm(ffn + x, vrow(vb + 6, H), vrow(vb + 7, H))

    # ---- classification tail (reassociated: keep intermediates lane-dense) ----
    #   logits[b] = sum_{j} cls_w[j] * (x[b, 2+j, :] @ lin_w)
    #             = (cls_mat @ x) @ lin_w      (cls_mat holds the [:, 2:-1] slice + cls weights)
    cls_mat = v_ref[off["v_cls"]:off["v_cls"] + B, 0:BS]                # (B, BS) f32
    t = jnp.dot(cls_mat, x, preferred_element_type=f32)                 # (B, H)
    lin_row = vrow(off["v_lin"], H)                                     # (1, H)
    logits = jnp.sum(t * lin_row, axis=-1, keepdims=True)               # (B, 1)
    o_ref[...] = jax.nn.sigmoid(logits).astype(o_ref.dtype)


# --------------------------- config & params ---------------------------

class Config:
    vocab = 292        # resize_token_embeddings(292)
    hidden = 32        # scaled down from 768
    heads = 4
    ffn = 64           # scaled down from 3072
    layers = 2         # scaled down from 12
    max_pos = 64
    type_vocab = 2
    seq = 16           # scaled down from 512 (head = Linear(seq-3, 1) ~ Linear(509, 1))
    batch = 2


def init_params(key, cfg):
    """Deterministic synthetic weights in the PyTorch nn.Linear [out, in] layout."""
    def nrm(k, shape):
        return 0.02 * jax.random.normal(k, shape, jnp.float32)

    keys = iter(jax.random.split(key, 8 + 16 * cfg.layers))
    H, F = cfg.hidden, cfg.ffn
    p = {
        "word_emb": nrm(next(keys), (cfg.vocab, H)),
        "pos_emb": nrm(next(keys), (cfg.max_pos, H)),
        "type_emb": nrm(next(keys), (cfg.type_vocab, H)),
        "emb_ln_g": jnp.ones((H,), jnp.float32),
        "emb_ln_b": jnp.zeros((H,), jnp.float32),
        "lin_w": nrm(next(keys), (1, H)),             # nn.Linear(hidden, 1, bias=False)
        "cls_w": nrm(next(keys), (1, cfg.seq - 3)),   # nn.Linear(509, 1, bias=False) analogue
        "layers": [],
    }
    for _ in range(cfg.layers):
        p["layers"].append({
            "wq": nrm(next(keys), (H, H)), "bq": jnp.zeros((H,), jnp.float32),
            "wk": nrm(next(keys), (H, H)), "bk": jnp.zeros((H,), jnp.float32),
            "wv": nrm(next(keys), (H, H)), "bv": jnp.zeros((H,), jnp.float32),
            "wo": nrm(next(keys), (H, H)), "bo": jnp.zeros((H,), jnp.float32),
            "ln1_g": jnp.ones((H,), jnp.float32), "ln1_b": jnp.zeros((H,), jnp.float32),
            "w1": nrm(next(keys), (F, H)), "b1": jnp.zeros((F,), jnp.float32),
            "w2": nrm(next(keys), (H, F)), "b2": jnp.zeros((H,), jnp.float32),
            "ln2_g": jnp.ones((H,), jnp.float32), "ln2_b": jnp.zeros((H,), jnp.float32),
        })
    return p


def pack_params(p, cfg):
    """One-time layout plumbing: [in,out] transpose, QKV stack + 1/sqrt(dh) fold,
    pos+type pre-sum/tile, classification-slice fold, and packing into 2 blobs."""
    H, F, S, B, L = cfg.hidden, cfg.ffn, cfg.seq, cfg.batch, cfg.layers
    dh = H // cfg.heads
    BS = B * S
    off = _offsets(cfg.vocab, H, F, B, S, L)
    scale = 1.0 / math.sqrt(dh)

    # ---- matrix blob (bf16): word_emb + per-layer [wqkv | wo | w1 | w2] ----
    wblob = np.zeros((off["w_total"], off["w_cols"]), np.float32)
    wblob[0:cfg.vocab, 0:H] = np.asarray(p["word_emb"])
    for l, lp in enumerate(p["layers"]):
        b0 = off["w_layer"][l]
        wq = np.asarray(lp["wq"]).T * scale                      # fold softmax scale into Q
        wqkv = np.concatenate([wq, np.asarray(lp["wk"]).T, np.asarray(lp["wv"]).T], axis=1)
        wblob[b0:b0 + H, 0:3 * H] = wqkv
        wblob[b0 + H:b0 + 2 * H, 0:H] = np.asarray(lp["wo"]).T
        wblob[b0 + 2 * H:b0 + 3 * H, 0:F] = np.asarray(lp["w1"]).T
        wblob[b0 + 3 * H:b0 + 3 * H + F, 0:H] = np.asarray(lp["w2"]).T

    # ---- vector blob (f32): LN params, biases, lin row, cls selector, pos+type ----
    vblob = np.zeros((off["v_total"], off["v_cols"]), np.float32)
    vblob[off["v_emb_g"], 0:H] = np.asarray(p["emb_ln_g"])
    vblob[off["v_emb_b"], 0:H] = np.asarray(p["emb_ln_b"])
    vblob[off["v_lin"], 0:H] = np.asarray(p["lin_w"]).reshape(H)
    cls_w = np.asarray(p["cls_w"]).reshape(S - 3)
    for b in range(B):                                           # fold the [:, 2:-1] slice
        vblob[off["v_cls"] + b, b * S + 2: b * S + S - 1] = cls_w
    pos_type = np.asarray(p["pos_emb"])[:S] + np.asarray(p["type_emb"])[0]
    vblob[off["v_pos"]:off["v_pos"] + BS, 0:H] = np.tile(pos_type, (B, 1))
    for l, lp in enumerate(p["layers"]):
        b0 = off["v_layer"][l]
        bq = np.asarray(lp["bq"]) * scale                        # fold softmax scale into Q bias
        vblob[b0 + 0, 0:3 * H] = np.concatenate([bq, np.asarray(lp["bk"]), np.asarray(lp["bv"])])
        vblob[b0 + 1, 0:H] = np.asarray(lp["bo"])
        vblob[b0 + 2, 0:H] = np.asarray(lp["ln1_g"])
        vblob[b0 + 3, 0:H] = np.asarray(lp["ln1_b"])
        vblob[b0 + 4, 0:F] = np.asarray(lp["b1"])
        vblob[b0 + 5, 0:H] = np.asarray(lp["b2"])
        vblob[b0 + 6, 0:H] = np.asarray(lp["ln2_g"])
        vblob[b0 + 7, 0:H] = np.asarray(lp["ln2_b"])

    return {"wblob": jnp.asarray(wblob, jnp.bfloat16),
            "vblob": jnp.asarray(vblob, jnp.float32)}


# --------------------------- forward ---------------------------

def forward(packed, input_ids, cfg):
    # mirrors Bert4BinaryClassification.forward (inference mode)
    ids = jnp.squeeze(input_ids, axis=1)                 # input_ids.squeeze(1) -> (B, S)
    B, S = ids.shape
    ids2 = ids.reshape(B * S, 1).astype(jnp.int32)

    kernel = partial(
        _bert_fused_kernel,
        B=B, S=S, H=cfg.hidden, F=cfg.ffn,
        heads=cfg.heads, layers=cfg.layers, vocab=cfg.vocab)

    # Single launch, no grid: 3 input DMAs (ids + 2 parameter blobs), everything
    # VMEM-resident. A batch grid axis ("parallel") only pays off on v7x for
    # much larger batches than B=2.
    return pl.pallas_call(
        kernel,
        out_shape=jax.ShapeDtypeStruct((B, 1), jnp.float32),
    )(ids2, packed["wblob"], packed["vblob"])


if __name__ == "__main__":
    cfg = Config()
    key = jax.random.PRNGKey(0)
    pkey, dkey = jax.random.split(key)
    params = init_params(pkey, cfg)
    packed = pack_params(params, cfg)
    input_ids = jax.random.randint(dkey, (cfg.batch, 1, cfg.seq), 0, cfg.vocab,
                                   dtype=jnp.int32)

    out = jax.jit(partial(forward, cfg=cfg))(packed, input_ids)
    out = jax.block_until_ready(out)
    assert out.shape == (cfg.batch, 1)
    assert bool(jnp.all(jnp.isfinite(out)))
    print("KERNEL_OK")
</pallas_src>

<mosaic_0001>
module attributes {stable_mosaic.version = 11 : i64} {
  func.func @_bert_fused_kernel(%arg0: memref<32x1xi32, #tpu.memory_space<vmem>>, %arg1: memref<624x96xbf16, #tpu.memory_space<vmem>>, %arg2: memref<56x96xf32, #tpu.memory_space<vmem>>, %arg3: memref<2x1xf32, #tpu.memory_space<vmem>>) attributes {dimension_semantics = [], scalar_prefetch = 0 : i64, scratch_operands = 0 : i64, tpu.core_type = #tpu.core_type<tc>} {
    %c0 = arith.constant 0 : index
    %c0_0 = arith.constant 0 : index
    %0 = vector.load %arg0[%c0, %c0_0] : memref<32x1xi32, #tpu.memory_space<vmem>>, vector<32x1xi32>
    %1 = tpu.iota {dimensions = array<i32: 1>} : vector<32x304xi32>
    %2 = vector.broadcast %0 : vector<32x1xi32> to vector<32x304xi32>
    %3 = arith.cmpi eq, %1, %2 : vector<32x304xi32>
    %cst = arith.constant 1.000000e+00 : f32
    %cst_1 = arith.constant 0.000000e+00 : f32
    %4 = vector.broadcast %cst : f32 to vector<32x304xf32>
    %5 = vector.broadcast %cst_1 : f32 to vector<32x304xf32>
    %6 = arith.select %3, %4, %5 : vector<32x304xi1>, vector<32x304xf32>
    %7 = arith.truncf %6 : vector<32x304xf32> to vector<32x304xbf16>
    %c0_2 = arith.constant 0 : index
    %c0_3 = arith.constant 0 : index
    %8 = vector.load %arg1[%c0_2, %c0_3] : memref<624x96xbf16, #tpu.memory_space<vmem>>, vector<304x32xbf16>
    %cst_4 = arith.constant dense<0.000000e+00> : vector<32x32xf32>
    %9 = tpu.matmul %7, %8, %cst_4 {dimension_numbers = #tpu.dot_dimension_numbers<[1], [0], [0], [1], [0, 0, 1, 1], [], []>} : vector<32x304xbf16>, vector<304x32xbf16>, vector<32x32xf32> -> vector<32x32xf32>
    %c8 = arith.constant 8 : index
    %c0_5 = arith.constant 0 : index
    %10 = vector.load %arg2[%c8, %c0_5] : memref<56x96xf32, #tpu.memory_space<vmem>>, vector<32x32xf32>
    %11 = arith.addf %9, %10 : vector<32x32xf32>
    %c0_6 = arith.constant 0 : index
    %c0_7 = arith.constant 0 : index
    %12 = vector.load %arg2[%c0_6, %c0_7] : memref<56x96xf32, #tpu.memory_space<vmem>>, vector<1x32xf32>
    %c1 = arith.constant 1 : index
    %c0_8 = arith.constant 0 : index
    %13 = vector.load %arg2[%c1, %c0_8] : memref<56x96xf32, #tpu.memory_space<vmem>>, vector<1x32xf32>
    %cst_9 = arith.constant dense<0.000000e+00> : vector<32xf32>
    %14 = vector.multi_reduction <add>, %11, %cst_9 [1] : vector<32x32xf32> to vector<32xf32>
    %15 = vector.shape_cast %14 : vector<32xf32> to vector<32x1xf32>
    %cst_10 = arith.constant 3.200000e+01 : f32
    %16 = vector.broadcast %cst_10 : f32 to vector<32x1xf32>
    %17 = arith.divf %15, %16 : vector<32x1xf32>
    %18 = vector.broadcast %17 : vector<32x1xf32> to vector<32x32xf32>
    %19 = arith.subf %11, %18 : vector<32x32xf32>
    %20 = arith.mulf %19, %19 : vector<32x32xf32>
    %cst_11 = arith.constant dense<0.000000e+00> : vector<32xf32>
    %21 = vector.multi_reduction <add>, %20, %cst_11 [1] : vector<32x32xf32> to vector<32xf32>
    %22 = vector.shape_cast %21 : vector<32xf32> to vector<32x1xf32>
    %cst_12 = arith.constant 3.200000e+01 : f32
    %23 = vector.broadcast %cst_12 : f32 to vector<32x1xf32>
    %24 = arith.divf %22, %23 : vector<32x1xf32>
    %25 = vector.broadcast %17 : vector<32x1xf32> to vector<32x32xf32>
    %26 = arith.subf %11, %25 : vector<32x32xf32>
    %cst_13 = arith.constant 9.99999996E-13 : f32
    %27 = vector.broadcast %cst_13 : f32 to vector<32x1xf32>
    %28 = arith.addf %24, %27 : vector<32x1xf32>
    %29 = math.rsqrt %28 : vector<32x1xf32>
    %30 = vector.broadcast %29 : vector<32x1xf32> to vector<32x32xf32>
    %31 = arith.mulf %26, %30 : vector<32x32xf32>
    %32 = vector.broadcast %12 : vector<1x32xf32> to vector<32x32xf32>
    %33 = arith.mulf %31, %32 : vector<32x32xf32>
    %34 = vector.broadcast %13 : vector<1x32xf32> to vector<32x32xf32>
    %35 = arith.addf %33, %34 : vector<32x32xf32>
    %c304 = arith.constant 304 : index
    %c0_14 = arith.constant 0 : index
    %36 = vector.load %arg1[%c304, %c0_14] : memref<624x96xbf16, #tpu.memory_space<vmem>>, vector<32x96xbf16>
    %c336 = arith.constant 336 : index
    %c0_15 = arith.constant 0 : index
    %37 = vector.load %arg1[%c336, %c0_15] : memref<624x96xbf16, #tpu.memory_space<vmem>>, vector<32x32xbf16>
    %c368 = arith.constant 368 : index
    %c0_16 = arith.constant 0 : index
    %38 = vector.load %arg1[%c368, %c0_16] : memref<624x96xbf16, #tpu.memory_space<vmem>>, vector<32x64xbf16>
    %c400 = arith.constant 400 : index
    %c0_17 = arith.constant 0 : index
    %39 = vector.load %arg1[%c400, %c0_17] : memref<624x96xbf16, #tpu.memory_space<vmem>>, vector<64x32xbf16>
    %40 = arith.truncf %35 : vector<32x32xf32> to vector<32x32xbf16>
    %cst_18 = arith.constant dense<0.000000e+00> : vector<32x96xf32>
    %41 = tpu.matmul %40, %36, %cst_18 {dimension_numbers = #tpu.dot_dimension_numbers<[1], [0], [0], [1], [0, 0, 1, 1], [], []>} : vector<32x32xbf16>, vector<32x96xbf16>, vector<32x96xf32> -> vector<32x96xf32>
    %c40 = arith.constant 40 : index
    %c0_19 = arith.constant 0 : index
    %42 = vector.load %arg2[%c40, %c0_19] : memref<56x96xf32, #tpu.memory_space<vmem>>, vector<1x96xf32>
    %43 = vector.broadcast %42 : vector<1x96xf32> to vector<32x96xf32>
    %44 = arith.addf %41, %43 : vector<32x96xf32>
    %45 = vector.shape_cast %44 : vector<32x96xf32> to vector<2x16x96xf32>
    %46 = vector.extract_strided_slice %45 {offsets = [0, 0, 0], sizes = [2, 16, 8], strides = [1, 1, 1]} : vector<2x16x96xf32> to vector<2x16x8xf32>
    %47 = arith.truncf %46 : vector<2x16x8xf32> to vector<2x16x8xbf16>
    %48 = vector.extract_strided_slice %45 {offsets = [0, 0, 32], sizes = [2, 16, 8], strides = [1, 1, 1]} : vector<2x16x96xf32> to vector<2x16x8xf32>
    %49 = arith.truncf %48 : vector<2x16x8xf32> to vector<2x16x8xbf16>
    %50 = vector.extract_strided_slice %45 {offsets = [0, 0, 64], sizes = [2, 16, 8], strides = [1, 1, 1]} : vector<2x16x96xf32> to vector<2x16x8xf32>
    %51 = arith.truncf %50 : vector<2x16x8xf32> to vector<2x16x8xbf16>
    "tpu.trace_start"() <{level = 10 : i32, message = "bqd,bkd->bqk"}> : () -> ()
    %cst_20 = arith.constant dense<0.000000e+00> : vector<2x16x16xf32>
    %52 = tpu.matmul %47, %49, %cst_20 {dimension_numbers = #tpu.dot_dimension_numbers<[2], [2], [1], [1], [0, 0, 0, 1, 1, 1], [0], [0]>} : vector<2x16x8xbf16>, vector<2x16x8xbf16>, vector<2x16x16xf32> -> vector<2x16x16xf32>
    "tpu.trace_stop"() : () -> ()
    %cst_21 = arith.constant dense<0xFF800000> : vector<2x16xf32>
    %53 = vector.multi_reduction <maximumf>, %52, %cst_21 [2] : vector<2x16x16xf32> to vector<2x16xf32>
    %54 = vector.shape_cast %53 : vector<2x16xf32> to vector<2x16x1xf32>
    %55 = vector.broadcast %54 : vector<2x16x1xf32> to vector<2x16x16xf32>
    %56 = arith.subf %52, %55 : vector<2x16x16xf32>
    %57 = math.exp %56 : vector<2x16x16xf32>
    %cst_22 = arith.constant dense<0.000000e+00> : vector<2x16xf32>
    %58 = vector.multi_reduction <add>, %57, %cst_22 [2] : vector<2x16x16xf32> to vector<2x16xf32>
    %59 = vector.shape_cast %58 : vector<2x16xf32> to vector<2x16x1xf32>
    %60 = tpu.reciprocal %59 {approx = true} : vector<2x16x1xf32> -> vector<2x16x1xf32>
    %61 = vector.broadcast %60 : vector<2x16x1xf32> to vector<2x16x16xf32>
    %62 = arith.mulf %57, %61 : vector<2x16x16xf32>
    %63 = arith.truncf %62 : vector<2x16x16xf32> to vector<2x16x16xbf16>
    "tpu.trace_start"() <{level = 10 : i32, message = "bqk,bkd->bqd"}> : () -> ()
    %cst_23 = arith.constant dense<0.000000e+00> : vector<2x16x8xf32>
    %64 = tpu.matmul %63, %51, %cst_23 {dimension_numbers = #tpu.dot_dimension_numbers<[2], [1], [1], [2], [0, 0, 0, 1, 1, 2], [0], [0]>} : vector<2x16x16xbf16>, vector<2x16x8xbf16>, vector<2x16x8xf32> -> vector<2x16x8xf32>
    "tpu.trace_stop"() : () -> ()
    %65 = vector.extract_strided_slice %45 {offsets = [0, 0, 8], sizes = [2, 16, 8], strides = [1, 1, 1]} : vector<2x16x96xf32> to vector<2x16x8xf32>
    %66 = arith.truncf %65 : vector<2x16x8xf32> to vector<2x16x8xbf16>
    %67 = vector.extract_strided_slice %45 {offsets = [0, 0, 40], sizes = [2, 16, 8], strides = [1, 1, 1]} : vector<2x16x96xf32> to vector<2x16x8xf32>
    %68 = arith.truncf %67 : vector<2x16x8xf32> to vector<2x16x8xbf16>
    %69 = vector.extract_strided_slice %45 {offsets = [0, 0, 72], sizes = [2, 16, 8], strides = [1, 1, 1]} : vector<2x16x96xf32> to vector<2x16x8xf32>
    %70 = arith.truncf %69 : vector<2x16x8xf32> to vector<2x16x8xbf16>
    "tpu.trace_start"() <{level = 10 : i32, message = "bqd,bkd->bqk"}> : () -> ()
    %cst_24 = arith.constant dense<0.000000e+00> : vector<2x16x16xf32>
    %71 = tpu.matmul %66, %68, %cst_24 {dimension_numbers = #tpu.dot_dimension_numbers<[2], [2], [1], [1], [0, 0, 0, 1, 1, 1], [0], [0]>} : vector<2x16x8xbf16>, vector<2x16x8xbf16>, vector<2x16x16xf32> -> vector<2x16x16xf32>
    "tpu.trace_stop"() : () -> ()
    %cst_25 = arith.constant dense<0xFF800000> : vector<2x16xf32>
    %72 = vector.multi_reduction <maximumf>, %71, %cst_25 [2] : vector<2x16x16xf32> to vector<2x16xf32>
    %73 = vector.shape_cast %72 : vector<2x16xf32> to vector<2x16x1xf32>
    %74 = vector.broadcast %73 : vector<2x16x1xf32> to vector<2x16x16xf32>
    %75 = arith.subf %71, %74 : vector<2x16x16xf32>
    %76 = math.exp %75 : vector<2x16x16xf32>
    %cst_26 = arith.constant dense<0.000000e+00> : vector<2x16xf32>
    %77 = vector.multi_reduction <add>, %76, %cst_26 [2] : vector<2x16x16xf32> to vector<2x16xf32>
    %78 = vector.shape_cast %77 : vector<2x16xf32> to vector<2x16x1xf32>
    %79 = tpu.reciprocal %78 {approx = true} : vector<2x16x1xf32> -> vector<2x16x1xf32>
    %80 = vector.broadcast %79 : vector<2x16x1xf32> to vector<2x16x16xf32>
    %81 = arith.mulf %76, %80 : vector<2x16x16xf32>
    %82 = arith.truncf %81 : vector<2x16x16xf32> to vector<2x16x16xbf16>
    "tpu.trace_start"() <{level = 10 : i32, message = "bqk,bkd->bqd"}> : () -> ()
    %cst_27 = arith.constant dense<0.000000e+00> : vector<2x16x8xf32>
    %83 = tpu.matmul %82, %70, %cst_27 {dimension_numbers = #tpu.dot_dimension_numbers<[2], [1], [1], [2], [0, 0, 0, 1, 1, 2], [0], [0]>} : vector<2x16x16xbf16>, vector<2x16x8xbf16>, vector<2x16x8xf32> -> vector<2x16x8xf32>
    "tpu.trace_stop"() : () -> ()
    %84 = vector.extract_strided_slice %45 {offsets = [0, 0, 16], sizes = [2, 16, 8], strides = [1, 1, 1]} : vector<2x16x96xf32> to vector<2x16x8xf32>
    %85 = arith.truncf %84 : vector<2x16x8xf32> to vector<2x16x8xbf16>
    %86 = vector.extract_strided_slice %45 {offsets = [0, 0, 48], sizes = [2, 16, 8], strides = [1, 1, 1]} : vector<2x16x96xf32> to vector<2x16x8xf32>
    %87 = arith.truncf %86 : vector<2x16x8xf32> to vector<2x16x8xbf16>
    %88 = vector.extract_strided_slice %45 {offsets = [0, 0, 80], sizes = [2, 16, 8], strides = [1, 1, 1]} : vector<2x16x96xf32> to vector<2x16x8xf32>
    %89 = arith.truncf %88 : vector<2x16x8xf32> to vector<2x16x8xbf16>
    "tpu.trace_start"() <{level = 10 : i32, message = "bqd,bkd->bqk"}> : () -> ()
    %cst_28 = arith.constant dense<0.000000e+00> : vector<2x16x16xf32>
    %90 = tpu.matmul %85, %87, %cst_28 {dimension_numbers = #tpu.dot_dimension_numbers<[2], [2], [1], [1], [0, 0, 0, 1, 1, 1], [0], [0]>} : vector<2x16x8xbf16>, vector<2x16x8xbf16>, vector<2x16x16xf32> -> vector<2x16x16xf32>
    "tpu.trace_stop"() : () -> ()
    %cst_29 = arith.constant dense<0xFF800000> : vector<2x16xf32>
    %91 = vector.multi_reduction <maximumf>, %90, %cst_29 [2] : vector<2x16x16xf32> to vector<2x16xf32>
    %92 = vector.shape_cast %91 : vector<2x16xf32> to vector<2x16x1xf32>
    %93 = vector.broadcast %92 : vector<2x16x1xf32> to vector<2x16x16xf32>
    %94 = arith.subf %90, %93 : vector<2x16x16xf32>
    %95 = math.exp %94 : vector<2x16x16xf32>
    %cst_30 = arith.constant dense<0.000000e+00> : vector<2x16xf32>
    %96 = vector.multi_reduction <add>, %95, %cst_30 [2] : vector<2x16x16xf32> to vector<2x16xf32>
    %97 = vector.shape_cast %96 : vector<2x16xf32> to vector<2x16x1xf32>
    %98 = tpu.reciprocal %97 {approx = true} : vector<2x16x1xf32> -> vector<2x16x1xf32>
    %99 = vector.broadcast %98 : vector<2x16x1xf32> to vector<2x16x16xf32>
    %100 = arith.mulf %95, %99 : vector<2x16x16xf32>
    %101 = arith.truncf %100 : vector<2x16x16xf32> to vector<2x16x16xbf16>
    "tpu.trace_start"() <{level = 10 : i32, message = "bqk,bkd->bqd"}> : () -> ()
    %cst_31 = arith.constant dense<0.000000e+00> : vector<2x16x8xf32>
    %102 = tpu.matmul %101, %89, %cst_31 {dimension_numbers = #tpu.dot_dimension_numbers<[2], [1], [1], [2], [0, 0, 0, 1, 1, 2], [0], [0]>} : vector<2x16x16xbf16>, vector<2x16x8xbf16>, vector<2x16x8xf32> -> vector<2x16x8xf32>
    "tpu.trace_stop"() : () -> ()
    %103 = vector.extract_strided_slice %45 {offsets = [0, 0, 24], sizes = [2, 16, 8], strides = [1, 1, 1]} : vector<2x16x96xf32> to vector<2x16x8xf32>
    %104 = arith.truncf %103 : vector<2x16x8xf32> to vector<2x16x8xbf16>
    %105 = vector.extract_strided_slice %45 {offsets = [0, 0, 56], sizes = [2, 16, 8], strides = [1, 1, 1]} : vector<2x16x96xf32> to vector<2x16x8xf32>
    %106 = arith.truncf %105 : vector<2x16x8xf32> to vector<2x16x8xbf16>
    %107 = vector.extract_strided_slice %45 {offsets = [0, 0, 88], sizes = [2, 16, 8], strides = [1, 1, 1]} : vector<2x16x96xf32> to vector<2x16x8xf32>
    %108 = arith.truncf %107 : vector<2x16x8xf32> to vector<2x16x8xbf16>
    "tpu.trace_start"() <{level = 10 : i32, message = "bqd,bkd->bqk"}> : () -> ()
    %cst_32 = arith.constant dense<0.000000e+00> : vector<2x16x16xf32>
    %109 = tpu.matmul %104, %106, %cst_32 {dimension_numbers = #tpu.dot_dimension_numbers<[2], [2], [1], [1], [0, 0, 0, 1, 1, 1], [0], [0]>} : vector<2x16x8xbf16>, vector<2x16x8xbf16>, vector<2x16x16xf32> -> vector<2x16x16xf32>
    "tpu.trace_stop"() : () -> ()
    %cst_33 = arith.constant dense<0xFF800000> : vector<2x16xf32>
    %110 = vector.multi_reduction <maximumf>, %109, %cst_33 [2] : vector<2x16x16xf32> to vector<2x16xf32>
    %111 = vector.shape_cast %110 : vector<2x16xf32> to vector<2x16x1xf32>
    %112 = vector.broadcast %111 : vector<2x16x1xf32> to vector<2x16x16xf32>
    %113 = arith.subf %109, %112 : vector<2x16x16xf32>
    %114 = math.exp %113 : vector<2x16x16xf32>
    %cst_34 = arith.constant dense<0.000000e+00> : vector<2x16xf32>
    %115 = vector.multi_reduction <add>, %114, %cst_34 [2] : vector<2x16x16xf32> to vector<2x16xf32>
    %116 = vector.shape_cast %115 : vector<2x16xf32> to vector<2x16x1xf32>
    %117 = tpu.reciprocal %116 {approx = true} : vector<2x16x1xf32> -> vector<2x16x1xf32>
    %118 = vector.broadcast %117 : vector<2x16x1xf32> to vector<2x16x16xf32>
    %119 = arith.mulf %114, %118 : vector<2x16x16xf32>
    %120 = arith.truncf %119 : vector<2x16x16xf32> to vector<2x16x16xbf16>
    "tpu.trace_start"() <{level = 10 : i32, message = "bqk,bkd->bqd"}> : () -> ()
    %cst_35 = arith.constant dense<0.000000e+00> : vector<2x16x8xf32>
    %121 = tpu.matmul %120, %108, %cst_35 {dimension_numbers = #tpu.dot_dimension_numbers<[2], [1], [1], [2], [0, 0, 0, 1, 1, 2], [0], [0]>} : vector<2x16x16xbf16>, vector<2x16x8xbf16>, vector<2x16x8xf32> -> vector<2x16x8xf32>
    "tpu.trace_stop"() : () -> ()
    %122 = tpu.concatenate %64, %83, %102, %121 in 2 : vector<2x16x8xf32>, vector<2x16x8xf32>, vector<2x16x8xf32>, vector<2x16x8xf32> -> vector<2x16x32xf32>
    %123 = vector.shape_cast %122 : vector<2x16x32xf32> to vector<32x32xf32>
    %124 = arith.truncf %123 : vector<32x32xf32> to vector<32x32xbf16>
    %cst_36 = arith.constant dense<0.000000e+00> : vector<32x32xf32>
    %125 = tpu.matmul %124, %37, %cst_36 {dimension_numbers = #tpu.dot_dimension_numbers<[1], [0], [0], [1], [0, 0, 1, 1], [], []>} : vector<32x32xbf16>, vector<32x32xbf16>, vector<32x32xf32> -> vector<32x32xf32>
    %c41 = arith.constant 41 : index
    %c0_37 = arith.constant 0 : index
    %126 = vector.load %arg2[%c41, %c0_37] : memref<56x96xf32, #tpu.memory_space<vmem>>, vector<1x32xf32>
    %127 = vector.broadcast %126 : vector<1x32xf32> to vector<32x32xf32>
    %128 = arith.addf %125, %127 : vector<32x32xf32>
    %129 = arith.addf %128, %35 : vector<32x32xf32>
    %c42 = arith.constant 42 : index
    %c0_38 = arith.constant 0 : index
    %130 = vector.load %arg2[%c42, %c0_38] : memref<56x96xf32, #tpu.memory_space<vmem>>, vector<1x32xf32>
    %c43 = arith.constant 43 : index
    %c0_39 = arith.constant 0 : index
    %131 = vector.load %arg2[%c43, %c0_39] : memref<56x96xf32, #tpu.memory_space<vmem>>, vector<1x32xf32>
    %cst_40 = arith.constant dense<0.000000e+00> : vector<32xf32>
    %132 = vector.multi_reduction <add>, %129, %cst_40 [1] : vector<32x32xf32> to vector<32xf32>
    %133 = vector.shape_cast %132 : vector<32xf32> to vector<32x1xf32>
    %cst_41 = arith.constant 3.200000e+01 : f32
    %134 = vector.broadcast %cst_41 : f32 to vector<32x1xf32>
    %135 = arith.divf %133, %134 : vector<32x1xf32>
    %136 = vector.broadcast %135 : vector<32x1xf32> to vector<32x32xf32>
    %137 = arith.subf %129, %136 : vector<32x32xf32>
    %138 = arith.mulf %137, %137 : vector<32x32xf32>
    %cst_42 = arith.constant dense<0.000000e+00> : vector<32xf32>
    %139 = vector.multi_reduction <add>, %138, %cst_42 [1] : vector<32x32xf32> to vector<32xf32>
    %140 = vector.shape_cast %139 : vector<32xf32> to vector<32x1xf32>
    %cst_43 = arith.constant 3.200000e+01 : f32
    %141 = vector.broadcast %cst_43 : f32 to vector<32x1xf32>
    %142 = arith.divf %140, %141 : vector<32x1xf32>
    %143 = vector.broadcast %135 : vector<32x1xf32> to vector<32x32xf32>
    %144 = arith.subf %129, %143 : vector<32x32xf32>
    %cst_44 = arith.constant 9.99999996E-13 : f32
    %145 = vector.broadcast %cst_44 : f32 to vector<32x1xf32>
    %146 = arith.addf %142, %145 : vector<32x1xf32>
    %147 = math.rsqrt %146 : vector<32x1xf32>
    %148 = vector.broadcast %147 : vector<32x1xf32> to vector<32x32xf32>
    %149 = arith.mulf %144, %148 : vector<32x32xf32>
    %150 = vector.broadcast %130 : vector<1x32xf32> to vector<32x32xf32>
    %151 = arith.mulf %149, %150 : vector<32x32xf32>
    %152 = vector.broadcast %131 : vector<1x32xf32> to vector<32x32xf32>
    %153 = arith.addf %151, %152 : vector<32x32xf32>
    %154 = arith.truncf %153 : vector<32x32xf32> to vector<32x32xbf16>
    %cst_45 = arith.constant dense<0.000000e+00> : vector<32x64xf32>
    %155 = tpu.matmul %154, %38, %cst_45 {dimension_numbers = #tpu.dot_dimension_numbers<[1], [0], [0], [1], [0, 0, 1, 1], [], []>} : vector<32x32xbf16>, vector<32x64xbf16>, vector<32x64xf32> -> vector<32x64xf32>
    %c44 = arith.constant 44 : index
    %c0_46 = arith.constant 0 : index
    %156 = vector.load %arg2[%c44, %c0_46] : memref<56x96xf32, #tpu.memory_space<vmem>>, vector<1x64xf32>
    %157 = vector.broadcast %156 : vector<1x64xf32> to vector<32x64xf32>
    %158 = arith.addf %155, %157 : vector<32x64xf32>
    %159 = arith.mulf %158, %158 : vector<32x64xf32>
    %160 = arith.mulf %158, %159 : vector<32x64xf32>
    %cst_47 = arith.constant 4.471500e-02 : f32
    %161 = vector.broadcast %cst_47 : f32 to vector<32x64xf32>
    %162 = arith.mulf %161, %160 : vector<32x64xf32>
    %163 = arith.addf %158, %162 : vector<32x64xf32>
    %cst_48 = arith.constant 0.797884583 : f32
    %164 = vector.broadcast %cst_48 : f32 to vector<32x64xf32>
    %165 = arith.mulf %164, %163 : vector<32x64xf32>
    %166 = math.tanh %165 : vector<32x64xf32>
    %cst_49 = arith.constant 1.000000e+00 : f32
    %167 = vector.broadcast %cst_49 : f32 to vector<32x64xf32>
    %168 = arith.addf %167, %166 : vector<32x64xf32>
    %cst_50 = arith.constant 5.000000e-01 : f32
    %169 = vector.broadcast %cst_50 : f32 to vector<32x64xf32>
    %170 = arith.mulf %169, %168 : vector<32x64xf32>
    %171 = arith.mulf %158, %170 : vector<32x64xf32>
    %172 = arith.truncf %171 : vector<32x64xf32> to vector<32x64xbf16>
    %cst_51 = arith.constant dense<0.000000e+00> : vector<32x32xf32>
    %173 = tpu.matmul %172, %39, %cst_51 {dimension_numbers = #tpu.dot_dimension_numbers<[1], [0], [0], [1], [0, 0, 1, 1], [], []>} : vector<32x64xbf16>, vector<64x32xbf16>, vector<32x32xf32> -> vector<32x32xf32>
    %c45 = arith.constant 45 : index
    %c0_52 = arith.constant 0 : index
    %174 = vector.load %arg2[%c45, %c0_52] : memref<56x96xf32, #tpu.memory_space<vmem>>, vector<1x32xf32>
    %175 = vector.broadcast %174 : vector<1x32xf32> to vector<32x32xf32>
    %176 = arith.addf %173, %175 : vector<32x32xf32>
    %177 = arith.addf %176, %153 : vector<32x32xf32>
    %c46 = arith.constant 46 : index
    %c0_53 = arith.constant 0 : index
    %178 = vector.load %arg2[%c46, %c0_53] : memref<56x96xf32, #tpu.memory_space<vmem>>, vector<1x32xf32>
    %c47 = arith.constant 47 : index
    %c0_54 = arith.constant 0 : index
    %179 = vector.load %arg2[%c47, %c0_54] : memref<56x96xf32, #tpu.memory_space<vmem>>, vector<1x32xf32>
    %cst_55 = arith.constant dense<0.000000e+00> : vector<32xf32>
    %180 = vector.multi_reduction <add>, %177, %cst_55 [1] : vector<32x32xf32> to vector<32xf32>
    %181 = vector.shape_cast %180 : vector<32xf32> to vector<32x1xf32>
    %cst_56 = arith.constant 3.200000e+01 : f32
    %182 = vector.broadcast %cst_56 : f32 to vector<32x1xf32>
    %183 = arith.divf %181, %182 : vector<32x1xf32>
    %184 = vector.broadcast %183 : vector<32x1xf32> to vector<32x32xf32>
    %185 = arith.subf %177, %184 : vector<32x32xf32>
    %186 = arith.mulf %185, %185 : vector<32x32xf32>
    %cst_57 = arith.constant dense<0.000000e+00> : vector<32xf32>
    %187 = vector.multi_reduction <add>, %186, %cst_57 [1] : vector<32x32xf32> to vector<32xf32>
    %188 = vector.shape_cast %187 : vector<32xf32> to vector<32x1xf32>
    %cst_58 = arith.constant 3.200000e+01 : f32
    %189 = vector.broadcast %cst_58 : f32 to vector<32x1xf32>
    %190 = arith.divf %188, %189 : vector<32x1xf32>
    %191 = vector.broadcast %183 : vector<32x1xf32> to vector<32x32xf32>
    %192 = arith.subf %177, %191 : vector<32x32xf32>
    %cst_59 = arith.constant 9.99999996E-13 : f32
    %193 = vector.broadcast %cst_59 : f32 to vector<32x1xf32>
    %194 = arith.addf %190, %193 : vector<32x1xf32>
    %195 = math.rsqrt %194 : vector<32x1xf32>
    %196 = vector.broadcast %195 : vector<32x1xf32> to vector<32x32xf32>
    %197 = arith.mulf %192, %196 : vector<32x32xf32>
    %198 = vector.broadcast %178 : vector<1x32xf32> to vector<32x32xf32>
    %199 = arith.mulf %197, %198 : vector<32x32xf32>
    %200 = vector.broadcast %179 : vector<1x32xf32> to vector<32x32xf32>
    %201 = arith.addf %199, %200 : vector<32x32xf32>
    %c464 = arith.constant 464 : index
    %c0_60 = arith.constant 0 : index
    %202 = vector.load %arg1[%c464, %c0_60] : memref<624x96xbf16, #tpu.memory_space<vmem>>, vector<32x96xbf16>
    %c496 = arith.constant 496 : index
    %c0_61 = arith.constant 0 : index
    %203 = vector.load %arg1[%c496, %c0_61] : memref<624x96xbf16, #tpu.memory_space<vmem>>, vector<32x32xbf16>
    %c528 = arith.constant 528 : index
    %c0_62 = arith.constant 0 : index
    %204 = vector.load %arg1[%c528, %c0_62] : memref<624x96xbf16, #tpu.memory_space<vmem>>, vector<32x64xbf16>
    %c560 = arith.constant 560 : index
    %c0_63 = arith.constant 0 : index
    %205 = vector.load %arg1[%c560, %c0_63] : memref<624x96xbf16, #tpu.memory_space<vmem>>, vector<64x32xbf16>
    %206 = arith.truncf %201 : vector<32x32xf32> to vector<32x32xbf16>
    %cst_64 = arith.constant dense<0.000000e+00> : vector<32x96xf32>
    %207 = tpu.matmul %206, %202, %cst_64 {dimension_numbers = #tpu.dot_dimension_numbers<[1], [0], [0], [1], [0, 0, 1, 1], [], []>} : vector<32x32xbf16>, vector<32x96xbf16>, vector<32x96xf32> -> vector<32x96xf32>
    %c48 = arith.constant 48 : index
    %c0_65 = arith.constant 0 : index
    %208 = vector.load %arg2[%c48, %c0_65] : memref<56x96xf32, #tpu.memory_space<vmem>>, vector<1x96xf32>
    %209 = vector.broadcast %208 : vector<1x96xf32> to vector<32x96xf32>
    %210 = arith.addf %207, %209 : vector<32x96xf32>
    %211 = vector.shape_cast %210 : vector<32x96xf32> to vector<2x16x96xf32>
    %212 = vector.extract_strided_slice %211 {offsets = [0, 0, 0], sizes = [2, 16, 8], strides = [1, 1, 1]} : vector<2x16x96xf32> to vector<2x16x8xf32>
    %213 = arith.truncf %212 : vector<2x16x8xf32> to vector<2x16x8xbf16>
    %214 = vector.extract_strided_slice %211 {offsets = [0, 0, 32], sizes = [2, 16, 8], strides = [1, 1, 1]} : vector<2x16x96xf32> to vector<2x16x8xf32>
    %215 = arith.truncf %214 : vector<2x16x8xf32> to vector<2x16x8xbf16>
    %216 = vector.extract_strided_slice %211 {offsets = [0, 0, 64], sizes = [2, 16, 8], strides = [1, 1, 1]} : vector<2x16x96xf32> to vector<2x16x8xf32>
    %217 = arith.truncf %216 : vector<2x16x8xf32> to vector<2x16x8xbf16>
    "tpu.trace_start"() <{level = 10 : i32, message = "bqd,bkd->bqk"}> : () -> ()
    %cst_66 = arith.constant dense<0.000000e+00> : vector<2x16x16xf32>
    %218 = tpu.matmul %213, %215, %cst_66 {dimension_numbers = #tpu.dot_dimension_numbers<[2], [2], [1], [1], [0, 0, 0, 1, 1, 1], [0], [0]>} : vector<2x16x8xbf16>, vector<2x16x8xbf16>, vector<2x16x16xf32> -> vector<2x16x16xf32>
    "tpu.trace_stop"() : () -> ()
    %cst_67 = arith.constant dense<0xFF800000> : vector<2x16xf32>
    %219 = vector.multi_reduction <maximumf>, %218, %cst_67 [2] : vector<2x16x16xf32> to vector<2x16xf32>
    %220 = vector.shape_cast %219 : vector<2x16xf32> to vector<2x16x1xf32>
    %221 = vector.broadcast %220 : vector<2x16x1xf32> to vector<2x16x16xf32>
    %222 = arith.subf %218, %221 : vector<2x16x16xf32>
    %223 = math.exp %222 : vector<2x16x16xf32>
    %cst_68 = arith.constant dense<0.000000e+00> : vector<2x16xf32>
    %224 = vector.multi_reduction <add>, %223, %cst_68 [2] : vector<2x16x16xf32> to vector<2x16xf32>
    %225 = vector.shape_cast %224 : vector<2x16xf32> to vector<2x16x1xf32>
    %226 = tpu.reciprocal %225 {approx = true} : vector<2x16x1xf32> -> vector<2x16x1xf32>
    %227 = vector.broadcast %226 : vector<2x16x1xf32> to vector<2x16x16xf32>
    %228 = arith.mulf %223, %227 : vector<2x16x16xf32>
    %229 = arith.truncf %228 : vector<2x16x16xf32> to vector<2x16x16xbf16>
    "tpu.trace_start"() <{level = 10 : i32, message = "bqk,bkd->bqd"}> : () -> ()
    %cst_69 = arith.constant dense<0.000000e+00> : vector<2x16x8xf32>
    %230 = tpu.matmul %229, %217, %cst_69 {dimension_numbers = #tpu.dot_dimension_numbers<[2], [1], [1], [2], [0, 0, 0, 1, 1, 2], [0], [0]>} : vector<2x16x16xbf16>, vector<2x16x8xbf16>, vector<2x16x8xf32> -> vector<2x16x8xf32>
    "tpu.trace_stop"() : () -> ()
    %231 = vector.extract_strided_slice %211 {offsets = [0, 0, 8], sizes = [2, 16, 8], strides = [1, 1, 1]} : vector<2x16x96xf32> to vector<2x16x8xf32>
    %232 = arith.truncf %231 : vector<2x16x8xf32> to vector<2x16x8xbf16>
    %233 = vector.extract_strided_slice %211 {offsets = [0, 0, 40], sizes = [2, 16, 8], strides = [1, 1, 1]} : vector<2x16x96xf32> to vector<2x16x8xf32>
    %234 = arith.truncf %233 : vector<2x16x8xf32> to vector<2x16x8xbf16>
    %235 = vector.extract_strided_slice %211 {offsets = [0, 0, 72], sizes = [2, 16, 8], strides = [1, 1, 1]} : vector<2x16x96xf32> to vector<2x16x8xf32>
    %236 = arith.truncf %235 : vector<2x16x8xf32> to vector<2x16x8xbf16>
    "tpu.trace_start"() <{level = 10 : i32, message = "bqd,bkd->bqk"}> : () -> ()
    %cst_70 = arith.constant dense<0.000000e+00> : vector<2x16x16xf32>
    %237 = tpu.matmul %232, %234, %cst_70 {dimension_numbers = #tpu.dot_dimension_numbers<[2], [2], [1], [1], [0, 0, 0, 1, 1, 1], [0], [0]>} : vector<2x16x8xbf16>, vector<2x16x8xbf16>, vector<2x16x16xf32> -> vector<2x16x16xf32>
    "tpu.trace_stop"() : () -> ()
    %cst_71 = arith.constant dense<0xFF800000> : vector<2x16xf32>
    %238 = vector.multi_reduction <maximumf>, %237, %cst_71 [2] : vector<2x16x16xf32> to vector<2x16xf32>
    %239 = vector.shape_cast %238 : vector<2x16xf32> to vector<2x16x1xf32>
    %240 = vector.broadcast %239 : vector<2x16x1xf32> to vector<2x16x16xf32>
    %241 = arith.subf %237, %240 : vector<2x16x16xf32>
    %242 = math.exp %241 : vector<2x16x16xf32>
    %cst_72 = arith.constant dense<0.000000e+00> : vector<2x16xf32>
    %243 = vector.multi_reduction <add>, %242, %cst_72 [2] : vector<2x16x16xf32> to vector<2x16xf32>
    %244 = vector.shape_cast %243 : vector<2x16xf32> to vector<2x16x1xf32>
    %245 = tpu.reciprocal %244 {approx = true} : vector<2x16x1xf32> -> vector<2x16x1xf32>
    %246 = vector.broadcast %245 : vector<2x16x1xf32> to vector<2x16x16xf32>
    %247 = arith.mulf %242, %246 : vector<2x16x16xf32>
    %248 = arith.truncf %247 : vector<2x16x16xf32> to vector<2x16x16xbf16>
    "tpu.trace_start"() <{level = 10 : i32, message = "bqk,bkd->bqd"}> : () -> ()
    %cst_73 = arith.constant dense<0.000000e+00> : vector<2x16x8xf32>
    %249 = tpu.matmul %248, %236, %cst_73 {dimension_numbers = #tpu.dot_dimension_numbers<[2], [1], [1], [2], [0, 0, 0, 1, 1, 2], [0], [0]>} : vector<2x16x16xbf16>, vector<2x16x8xbf16>, vector<2x16x8xf32> -> vector<2x16x8xf32>
    "tpu.trace_stop"() : () -> ()
    %250 = vector.extract_strided_slice %211 {offsets = [0, 0, 16], sizes = [2, 16, 8], strides = [1, 1, 1]} : vector<2x16x96xf32> to vector<2x16x8xf32>
    %251 = arith.truncf %250 : vector<2x16x8xf32> to vector<2x16x8xbf16>
    %252 = vector.extract_strided_slice %211 {offsets = [0, 0, 48], sizes = [2, 16, 8], strides = [1, 1, 1]} : vector<2x16x96xf32> to vector<2x16x8xf32>
    %253 = arith.truncf %252 : vector<2x16x8xf32> to vector<2x16x8xbf16>
    %254 = vector.extract_strided_slice %211 {offsets = [0, 0, 80], sizes = [2, 16, 8], strides = [1, 1, 1]} : vector<2x16x96xf32> to vector<2x16x8xf32>
    %255 = arith.truncf %254 : vector<2x16x8xf32> to vector<2x16x8xbf16>
    "tpu.trace_start"() <{level = 10 : i32, message = "bqd,bkd->bqk"}> : () -> ()
    %cst_74 = arith.constant dense<0.000000e+00> : vector<2x16x16xf32>
    %256 = tpu.matmul %251, %253, %cst_74 {dimension_numbers = #tpu.dot_dimension_numbers<[2], [2], [1], [1], [0, 0, 0, 1, 1, 1], [0], [0]>} : vector<2x16x8xbf16>, vector<2x16x8xbf16>, vector<2x16x16xf32> -> vector<2x16x16xf32>
    "tpu.trace_stop"() : () -> ()
    %cst_75 = arith.constant dense<0xFF800000> : vector<2x16xf32>
    %257 = vector.multi_reduction <maximumf>, %256, %cst_75 [2] : vector<2x16x16xf32> to vector<2x16xf32>
    %258 = vector.shape_cast %257 : vector<2x16xf32> to vector<2x16x1xf32>
    %259 = vector.broadcast %258 : vector<2x16x1xf32> to vector<2x16x16xf32>
    %260 = arith.subf %256, %259 : vector<2x16x16xf32>
    %261 = math.exp %260 : vector<2x16x16xf32>
    %cst_76 = arith.constant dense<0.000000e+00> : vector<2x16xf32>
    %262 = vector.multi_reduction <add>, %261, %cst_76 [2] : vector<2x16x16xf32> to vector<2x16xf32>
    %263 = vector.shape_cast %262 : vector<2x16xf32> to vector<2x16x1xf32>
    %264 = tpu.reciprocal %263 {approx = true} : vector<2x16x1xf32> -> vector<2x16x1xf32>
    %265 = vector.broadcast %264 : vector<2x16x1xf32> to vector<2x16x16xf32>
    %266 = arith.mulf %261, %265 : vector<2x16x16xf32>
    %267 = arith.truncf %266 : vector<2x16x16xf32> to vector<2x16x16xbf16>
    "tpu.trace_start"() <{level = 10 : i32, message = "bqk,bkd->bqd"}> : () -> ()
    %cst_77 = arith.constant dense<0.000000e+00> : vector<2x16x8xf32>
    %268 = tpu.matmul %267, %255, %cst_77 {dimension_numbers = #tpu.dot_dimension_numbers<[2], [1], [1], [2], [0, 0, 0, 1, 1, 2], [0], [0]>} : vector<2x16x16xbf16>, vector<2x16x8xbf16>, vector<2x16x8xf32> -> vector<2x16x8xf32>
    "tpu.trace_stop"() : () -> ()
    %269 = vector.extract_strided_slice %211 {offsets = [0, 0, 24], sizes = [2, 16, 8], strides = [1, 1, 1]} : vector<2x16x96xf32> to vector<2x16x8xf32>
    %270 = arith.truncf %269 : vector<2x16x8xf32> to vector<2x16x8xbf16>
    %271 = vector.extract_strided_slice %211 {offsets = [0, 0, 56], sizes = [2, 16, 8], strides = [1, 1, 1]} : vector<2x16x96xf32> to vector<2x16x8xf32>
    %272 = arith.truncf %271 : vector<2x16x8xf32> to vector<2x16x8xbf16>
    %273 = vector.extract_strided_slice %211 {offsets = [0, 0, 88], sizes = [2, 16, 8], strides = [1, 1, 1]} : vector<2x16x96xf32> to vector<2x16x8xf32>
    %274 = arith.truncf %273 : vector<2x16x8xf32> to vector<2x16x8xbf16>
    "tpu.trace_start"() <{level = 10 : i32, message = "bqd,bkd->bqk"}> : () -> ()
    %cst_78 = arith.constant dense<0.000000e+00> : vector<2x16x16xf32>
    %275 = tpu.matmul %270, %272, %cst_78 {dimension_numbers = #tpu.dot_dimension_numbers<[2], [2], [1], [1], [0, 0, 0, 1, 1, 1], [0], [0]>} : vector<2x16x8xbf16>, vector<2x16x8xbf16>, vector<2x16x16xf32> -> vector<2x16x16xf32>
    "tpu.trace_stop"() : () -> ()
    %cst_79 = arith.constant dense<0xFF800000> : vector<2x16xf32>
    %276 = vector.multi_reduction <maximumf>, %275, %cst_79 [2] : vector<2x16x16xf32> to vector<2x16xf32>
    %277 = vector.shape_cast %276 : vector<2x16xf32> to vector<2x16x1xf32>
    %278 = vector.broadcast %277 : vector<2x16x1xf32> to vector<2x16x16xf32>
    %279 = arith.subf %275, %278 : vector<2x16x16xf32>
    %280 = math.exp %279 : vector<2x16x16xf32>
    %cst_80 = arith.constant dense<0.000000e+00> : vector<2x16xf32>
    %281 = vector.multi_reduction <add>, %280, %cst_80 [2] : vector<2x16x16xf32> to vector<2x16xf32>
    %282 = vector.shape_cast %281 : vector<2x16xf32> to vector<2x16x1xf32>
    %283 = tpu.reciprocal %282 {approx = true} : vector<2x16x1xf32> -> vector<2x16x1xf32>
    %284 = vector.broadcast %283 : vector<2x16x1xf32> to vector<2x16x16xf32>
    %285 = arith.mulf %280, %284 : vector<2x16x16xf32>
    %286 = arith.truncf %285 : vector<2x16x16xf32> to vector<2x16x16xbf16>
    "tpu.trace_start"() <{level = 10 : i32, message = "bqk,bkd->bqd"}> : () -> ()
    %cst_81 = arith.constant dense<0.000000e+00> : vector<2x16x8xf32>
    %287 = tpu.matmul %286, %274, %cst_81 {dimension_numbers = #tpu.dot_dimension_numbers<[2], [1], [1], [2], [0, 0, 0, 1, 1, 2], [0], [0]>} : vector<2x16x16xbf16>, vector<2x16x8xbf16>, vector<2x16x8xf32> -> vector<2x16x8xf32>
    "tpu.trace_stop"() : () -> ()
    %288 = tpu.concatenate %230, %249, %268, %287 in 2 : vector<2x16x8xf32>, vector<2x16x8xf32>, vector<2x16x8xf32>, vector<2x16x8xf32> -> vector<2x16x32xf32>
    %289 = vector.shape_cast %288 : vector<2x16x32xf32> to vector<32x32xf32>
    %290 = arith.truncf %289 : vector<32x32xf32> to vector<32x32xbf16>
    %cst_82 = arith.constant dense<0.000000e+00> : vector<32x32xf32>
    %291 = tpu.matmul %290, %203, %cst_82 {dimension_numbers = #tpu.dot_dimension_numbers<[1], [0], [0], [1], [0, 0, 1, 1], [], []>} : vector<32x32xbf16>, vector<32x32xbf16>, vector<32x32xf32> -> vector<32x32xf32>
    %c49 = arith.constant 49 : index
    %c0_83 = arith.constant 0 : index
    %292 = vector.load %arg2[%c49, %c0_83] : memref<56x96xf32, #tpu.memory_space<vmem>>, vector<1x32xf32>
    %293 = vector.broadcast %292 : vector<1x32xf32> to vector<32x32xf32>
    %294 = arith.addf %291, %293 : vector<32x32xf32>
    %295 = arith.addf %294, %201 : vector<32x32xf32>
    %c50 = arith.constant 50 : index
    %c0_84 = arith.constant 0 : index
    %296 = vector.load %arg2[%c50, %c0_84] : memref<56x96xf32, #tpu.memory_space<vmem>>, vector<1x32xf32>
    %c51 = arith.constant 51 : index
    %c0_85 = arith.constant 0 : index
    %297 = vector.load %arg2[%c51, %c0_85] : memref<56x96xf32, #tpu.memory_space<vmem>>, vector<1x32xf32>
    %cst_86 = arith.constant dense<0.000000e+00> : vector<32xf32>
    %298 = vector.multi_reduction <add>, %295, %cst_86 [1] : vector<32x32xf32> to vector<32xf32>
    %299 = vector.shape_cast %298 : vector<32xf32> to vector<32x1xf32>
    %cst_87 = arith.constant 3.200000e+01 : f32
    %300 = vector.broadcast %cst_87 : f32 to vector<32x1xf32>
    %301 = arith.divf %299, %300 : vector<32x1xf32>
    %302 = vector.broadcast %301 : vector<32x1xf32> to vector<32x32xf32>
    %303 = arith.subf %295, %302 : vector<32x32xf32>
    %304 = arith.mulf %303, %303 : vector<32x32xf32>
    %cst_88 = arith.constant dense<0.000000e+00> : vector<32xf32>
    %305 = vector.multi_reduction <add>, %304, %cst_88 [1] : vector<32x32xf32> to vector<32xf32>
    %306 = vector.shape_cast %305 : vector<32xf32> to vector<32x1xf32>
    %cst_89 = arith.constant 3.200000e+01 : f32
    %307 = vector.broadcast %cst_89 : f32 to vector<32x1xf32>
    %308 = arith.divf %306, %307 : vector<32x1xf32>
    %309 = vector.broadcast %301 : vector<32x1xf32> to vector<32x32xf32>
    %310 = arith.subf %295, %309 : vector<32x32xf32>
    %cst_90 = arith.constant 9.99999996E-13 : f32
    %311 = vector.broadcast %cst_90 : f32 to vector<32x1xf32>
    %312 = arith.addf %308, %311 : vector<32x1xf32>
    %313 = math.rsqrt %312 : vector<32x1xf32>
    %314 = vector.broadcast %313 : vector<32x1xf32> to vector<32x32xf32>
    %315 = arith.mulf %310, %314 : vector<32x32xf32>
    %316 = vector.broadcast %296 : vector<1x32xf32> to vector<32x32xf32>
    %317 = arith.mulf %315, %316 : vector<32x32xf32>
    %318 = vector.broadcast %297 : vector<1x32xf32> to vector<32x32xf32>
    %319 = arith.addf %317, %318 : vector<32x32xf32>
    %320 = arith.truncf %319 : vector<32x32xf32> to vector<32x32xbf16>
    %cst_91 = arith.constant dense<0.000000e+00> : vector<32x64xf32>
    %321 = tpu.matmul %320, %204, %cst_91 {dimension_numbers = #tpu.dot_dimension_numbers<[1], [0], [0], [1], [0, 0, 1, 1], [], []>} : vector<32x32xbf16>, vector<32x64xbf16>, vector<32x64xf32> -> vector<32x64xf32>
    %c52 = arith.constant 52 : index
    %c0_92 = arith.constant 0 : index
    %322 = vector.load %arg2[%c52, %c0_92] : memref<56x96xf32, #tpu.memory_space<vmem>>, vector<1x64xf32>
    %323 = vector.broadcast %322 : vector<1x64xf32> to vector<32x64xf32>
    %324 = arith.addf %321, %323 : vector<32x64xf32>
    %325 = arith.mulf %324, %324 : vector<32x64xf32>
    %326 = arith.mulf %324, %325 : vector<32x64xf32>
    %cst_93 = arith.constant 4.471500e-02 : f32
    %327 = vector.broadcast %cst_93 : f32 to vector<32x64xf32>
    %328 = arith.mulf %327, %326 : vector<32x64xf32>
    %329 = arith.addf %324, %328 : vector<32x64xf32>
    %cst_94 = arith.constant 0.797884583 : f32
    %330 = vector.broadcast %cst_94 : f32 to vector<32x64xf32>
    %331 = arith.mulf %330, %329 : vector<32x64xf32>
    %332 = math.tanh %331 : vector<32x64xf32>
    %cst_95 = arith.constant 1.000000e+00 : f32
    %333 = vector.broadcast %cst_95 : f32 to vector<32x64xf32>
    %334 = arith.addf %333, %332 : vector<32x64xf32>
    %cst_96 = arith.constant 5.000000e-01 : f32
    %335 = vector.broadcast %cst_96 : f32 to vector<32x64xf32>
    %336 = arith.mulf %335, %334 : vector<32x64xf32>
    %337 = arith.mulf %324, %336 : vector<32x64xf32>
    %338 = arith.truncf %337 : vector<32x64xf32> to vector<32x64xbf16>
    %cst_97 = arith.constant dense<0.000000e+00> : vector<32x32xf32>
    %339 = tpu.matmul %338, %205, %cst_97 {dimension_numbers = #tpu.dot_dimension_numbers<[1], [0], [0], [1], [0, 0, 1, 1], [], []>} : vector<32x64xbf16>, vector<64x32xbf16>, vector<32x32xf32> -> vector<32x32xf32>
    %c53 = arith.constant 53 : index
    %c0_98 = arith.constant 0 : index
    %340 = vector.load %arg2[%c53, %c0_98] : memref<56x96xf32, #tpu.memory_space<vmem>>, vector<1x32xf32>
    %341 = vector.broadcast %340 : vector<1x32xf32> to vector<32x32xf32>
    %342 = arith.addf %339, %341 : vector<32x32xf32>
    %343 = arith.addf %342, %319 : vector<32x32xf32>
    %c54 = arith.constant 54 : index
    %c0_99 = arith.constant 0 : index
    %344 = vector.load %arg2[%c54, %c0_99] : memref<56x96xf32, #tpu.memory_space<vmem>>, vector<1x32xf32>
    %c55 = arith.constant 55 : index
    %c0_100 = arith.constant 0 : index
    %345 = vector.load %arg2[%c55, %c0_100] : memref<56x96xf32, #tpu.memory_space<vmem>>, vector<1x32xf32>
    %cst_101 = arith.constant dense<0.000000e+00> : vector<32xf32>
    %346 = vector.multi_reduction <add>, %343, %cst_101 [1] : vector<32x32xf32> to vector<32xf32>
    %347 = vector.shape_cast %346 : vector<32xf32> to vector<32x1xf32>
    %cst_102 = arith.constant 3.200000e+01 : f32
    %348 = vector.broadcast %cst_102 : f32 to vector<32x1xf32>
    %349 = arith.divf %347, %348 : vector<32x1xf32>
    %350 = vector.broadcast %349 : vector<32x1xf32> to vector<32x32xf32>
    %351 = arith.subf %343, %350 : vector<32x32xf32>
    %352 = arith.mulf %351, %351 : vector<32x32xf32>
    %cst_103 = arith.constant dense<0.000000e+00> : vector<32xf32>
    %353 = vector.multi_reduction <add>, %352, %cst_103 [1] : vector<32x32xf32> to vector<32xf32>
    %354 = vector.shape_cast %353 : vector<32xf32> to vector<32x1xf32>
    %cst_104 = arith.constant 3.200000e+01 : f32
    %355 = vector.broadcast %cst_104 : f32 to vector<32x1xf32>
    %356 = arith.divf %354, %355 : vector<32x1xf32>
    %357 = vector.broadcast %349 : vector<32x1xf32> to vector<32x32xf32>
    %358 = arith.subf %343, %357 : vector<32x32xf32>
    %cst_105 = arith.constant 9.99999996E-13 : f32
    %359 = vector.broadcast %cst_105 : f32 to vector<32x1xf32>
    %360 = arith.addf %356, %359 : vector<32x1xf32>
    %361 = math.rsqrt %360 : vector<32x1xf32>
    %362 = vector.broadcast %361 : vector<32x1xf32> to vector<32x32xf32>
    %363 = arith.mulf %358, %362 : vector<32x32xf32>
    %364 = vector.broadcast %344 : vector<1x32xf32> to vector<32x32xf32>
    %365 = arith.mulf %363, %364 : vector<32x32xf32>
    %366 = vector.broadcast %345 : vector<1x32xf32> to vector<32x32xf32>
    %367 = arith.addf %365, %366 : vector<32x32xf32>
    %c3 = arith.constant 3 : index
    %c0_106 = arith.constant 0 : index
    %368 = vector.load %arg2[%c3, %c0_106] : memref<56x96xf32, #tpu.memory_space<vmem>>, vector<2x32xf32>
    %cst_107 = arith.constant dense<0.000000e+00> : vector<2x32xf32>
    %369 = tpu.matmul %368, %367, %cst_107 {dimension_numbers = #tpu.dot_dimension_numbers<[1], [0], [0], [1], [0, 0, 1, 1], [], []>} : vector<2x32xf32>, vector<32x32xf32>, vector<2x32xf32> -> vector<2x32xf32>
    %c2 = arith.constant 2 : index
    %c0_108 = arith.constant 0 : index
    %370 = vector.load %arg2[%c2, %c0_108] : memref<56x96xf32, #tpu.memory_space<vmem>>, vector<1x32xf32>
    %371 = vector.broadcast %370 : vector<1x32xf32> to vector<2x32xf32>
    %372 = arith.mulf %369, %371 : vector<2x32xf32>
    %cst_109 = arith.constant dense<0.000000e+00> : vector<2xf32>
    %373 = vector.multi_reduction <add>, %372, %cst_109 [1] : vector<2x32xf32> to vector<2xf32>
    %374 = vector.shape_cast %373 : vector<2xf32> to vector<2x1xf32>
    %375 = arith.negf %374 : vector<2x1xf32>
    %376 = math.exp %375 : vector<2x1xf32>
    %cst_110 = arith.constant 1.000000e+00 : f32
    %377 = vector.broadcast %cst_110 : f32 to vector<2x1xf32>
    %378 = arith.addf %377, %376 : vector<2x1xf32>
    %379 = arith.divf %377, %378 : vector<2x1xf32>
    %c0_111 = arith.constant 0 : index
    %c0_112 = arith.constant 0 : index
    %380 = vector.load %arg3[%c0_111, %c0_112] : memref<2x1xf32, #tpu.memory_space<vmem>>, vector<2x1xf32>
    tpu.vector_store %arg3[%c0_111, %c0_112], %379 {strides = array<i32>} : memref<2x1xf32, #tpu.memory_space<vmem>>, vector<2x1xf32>,
    return
  }
}

</mosaic_0001>

<llo_original>
// kernel: squeeze.0
$region0: #{squeeze.0}
  %s0 = inlined_call_operand.vmem [shape: s32[2,16], index: 0, kind: input, shape index: {}]
  %s1 = inlined_call_operand.vmem [shape: s32[32,1], index: 1, kind: output, shape index: {}]
  $region1: #{squeeze.0} parent=0
    #allocation0 [shape = 'u8[4096]{0}', space=vmem, size = 0x1000, scoped, tag = 'scoped mem for input reshape']
    %s3 = sshll.u32 1, 2
    %s4 = ssub.s32 %s3, 1
    %v5 = vld [vmem:[%s0] sm:%s4]
    %6 = vst [vmem:[#allocation0] sm:%s4] %v5
    %v7 = vld [vmem:[#allocation0] sm:$0x3]
    %vm8 = vcmask 7168
    %9 = vst.msk [vmem:[%s1] ss:$16 sm:$0x3] %vm8, %v7
    %v10 = vld [vmem:[#allocation0] sm:$0x3]
    %11 = vrot.lane.b32.xlu0 %v10, 127
    %v12 = vpop.permute.xlu0 %11
    %vm13 = vcmask 7168
    %s14 = scalar_lea.vmem %s1, 1
    %15 = vst.msk [vmem:[%s14] ss:$16 sm:$0x3] %vm13, %v12
    %v16 = vld [vmem:[#allocation0] sm:$0x3]
    %17 = vrot.lane.b32.xlu0 %v16, 126
    %v18 = vpop.permute.xlu0 %17
    %vm19 = vcmask 7168
    %s20 = scalar_lea.vmem %s1, 2
    %21 = vst.msk [vmem:[%s20] ss:$16 sm:$0x3] %vm19, %v18
    %v22 = vld [vmem:[#allocation0] sm:$0x3]
    %23 = vrot.lane.b32.xlu0 %v22, 125
    %v24 = vpop.permute.xlu0 %23
    %vm25 = vcmask 7168
    %s26 = scalar_lea.vmem %s1, 3
    %27 = vst.msk [vmem:[%s26] ss:$16 sm:$0x3] %vm25, %v24
    %v28 = vld [vmem:[#allocation0] sm:$0x3]
    %29 = vrot.lane.b32.xlu0 %v28, 124
    %v30 = vpop.permute.xlu0 %29
    %vm31 = vcmask 7168
    %s32 = scalar_lea.vmem %s1, 4
    %33 = vst.msk [vmem:[%s32] ss:$16 sm:$0x3] %vm31, %v30
    %v34 = vld [vmem:[#allocation0] sm:$0x3]
    %35 = vrot.lane.b32.xlu0 %v34, 123
    %v36 = vpop.permute.xlu0 %35
    %vm37 = vcmask 7168
    %s38 = scalar_lea.vmem %s1, 5
    %39 = vst.msk [vmem:[%s38] ss:$16 sm:$0x3] %vm37, %v36
    %v40 = vld [vmem:[#allocation0] sm:$0x3]
    %41 = vrot.lane.b32.xlu0 %v40, 122
    %v42 = vpop.permute.xlu0 %41
    %vm43 = vcmask 7168
    %s44 = scalar_lea.vmem %s1, 6
    %45 = vst.msk [vmem:[%s44] ss:$16 sm:$0x3] %vm43, %v42
    %v46 = vld [vmem:[#allocation0] sm:$0x3]
    %47 = vrot.lane.b32.xlu0 %v46, 121
    %v48 = vpop.permute.xlu0 %47
    %vm49 = vcmask 7168
    %s50 = scalar_lea.vmem %s1, 7
    %51 = vst.msk [vmem:[%s50] ss:$16 sm:$0x3] %vm49, %v48
    %v52 = vld [vmem:[#allocation0] sm:$0x3]
    %53 = vrot.lane.b32.xlu0 %v52, 120
    %v54 = vpop.permute.xlu0 %53
    %vm55 = vcmask 7168
    %s56 = scalar_lea.vmem %s1, 8
    %57 = vst.msk [vmem:[%s56] ss:$16 sm:$0x3] %vm55, %v54
    %v58 = vld [vmem:[#allocation0] sm:$0x3]
    %59 = vrot.lane.b32.xlu0 %v58, 119
    %v60 = vpop.permute.xlu0 %59
    %vm61 = vcmask 7168
    %s62 = scalar_lea.vmem %s1, 9
    %63 = vst.msk [vmem:[%s62] ss:$16 sm:$0x3] %vm61, %v60
    %v64 = vld [vmem:[#allocation0] sm:$0x3]
    %65 = vrot.lane.b32.xlu0 %v64, 118
    %v66 = vpop.permute.xlu0 %65
    %vm67 = vcmask 7168
    %s68 = scalar_lea.vmem %s1, 10
    %69 = vst.msk [vmem:[%s68] ss:$16 sm:$0x3] %vm67, %v66
    %v70 = vld [vmem:[#allocation0] sm:$0x3]
    %71 = vrot.lane.b32.xlu0 %v70, 117
    %v72 = vpop.permute.xlu0 %71
    %vm73 = vcmask 7168
    %s74 = scalar_lea.vmem %s1, 11
    %75 = vst.msk [vmem:[%s74] ss:$16 sm:$0x3] %vm73, %v72
    %v76 = vld [vmem:[#allocation0] sm:$0x3]
    %77 = vrot.lane.b32.xlu0 %v76, 116
    %v78 = vpop.permute.xlu0 %77
    %vm79 = vcmask 7168
    %s80 = scalar_lea.vmem %s1, 12
    %81 = vst.msk [vmem:[%s80] ss:$16 sm:$0x3] %vm79, %v78
    %v82 = vld [vmem:[#allocation0] sm:$0x3]
    %83 = vrot.lane.b32.xlu0 %v82, 115
    %v84 = vpop.permute.xlu0 %83
    %vm85 = vcmask 7168
    %s86 = scalar_lea.vmem %s1, 13
    %87 = vst.msk [vmem:[%s86] ss:$16 sm:$0x3] %vm85, %v84
    %v88 = vld [vmem:[#allocation0] sm:$0x3]
    %89 = vrot.lane.b32.xlu0 %v88, 114
    %v90 = vpop.permute.xlu0 %89
    %vm91 = vcmask 7168
    %s92 = scalar_lea.vmem %s1, 14
    %93 = vst.msk [vmem:[%s92] ss:$16 sm:$0x3] %vm91, %v90
    %v94 = vld [vmem:[#allocation0] sm:$0x3]
    %95 = vrot.lane.b32.xlu0 %v94, 113
    %v96 = vpop.permute.xlu0 %95
    %vm97 = vcmask 7168
    %s98 = scalar_lea.vmem %s1, 15
    %99 = vst.msk [vmem:[%s98] ss:$16 sm:$0x3] %vm97, %v96

// kernel: forward.1
$region0: #{forward.1}
  #allocation0 [shape = 'u32[]', space=smem, size = 0x4, offset = 0x4, fixed_abs, tag = 'smem constant byte address 0x4 - core index']
  #allocation1 [shape = 'u32[144,128]{1,0:T(1,128)}', space=vmem, size = 0x12000, scoped, tag = 'internal scratch']
  %s0 = inlined_call_operand.vmem [shape: s32[32,1], index: 0, kind: input, shape index: {}]
  %s1 = inlined_call_operand.vmem [shape: bf16[624,96], index: 1, kind: input, shape index: {}]
  %s2 = inlined_call_operand.vmem [shape: f32[56,96], index: 2, kind: input, shape index: {}]
  %s3 = inlined_call_operand.vmem [shape: f32[2,1], index: 3, kind: output, shape index: {}]
  %s4 = sld [smem:[#allocation0]]
  $region22: #{forward.1} parent=0
    _
  %s6 = ssub.s32 1, %s4
  %s7 = scalar_select 0, %s6, %s4
  // Predicated region
  $region2: #{forward.1} parent=0 // pred_check
    _
  $region3: #{forward.1} parent=0 // pred_check_branch
    %9 = sbr.rel (0) target = $region5
  $region4: #{forward.1} parent=0 // pred_region
    _
  $region5: #{forward.1} parent=0 // pred_fallthru
    _
  // Predicated region
  $region6: #{forward.1} parent=0 // pred_check
    _
  $region7: #{forward.1} parent=0 // pred_check_branch
    %11 = sbr.rel (0) target = $region9
  $region8: #{forward.1} parent=0 // pred_region
    _
  $region9: #{forward.1} parent=0 // pred_fallthru
    _
  // Predicated region
  $region10: #{forward.1} parent=0 // pred_check
    _
  $region11: #{forward.1} parent=0 // pred_check_branch
    %13 = sbr.rel (0) target = $region13
  $region12: #{forward.1} parent=0 // pred_region
    _
  $region13: #{forward.1} parent=0 // pred_fallthru
    _
  %v15 = vld [vmem:[%s0] sm:$0xff]
  %v16 = vld [vmem:[%s0 + $0x8] sm:$0xff]
  %v17 = vld [vmem:[%s0 + $0x10] sm:$0xff]
  %v18 = vld [vmem:[%s0 + $0x18] sm:$0xff]
  %v19 = vlaneseq
  %v20 = vand.u32 %v19, 127
  %v21 = vadd.s32 %v20, 128
  %v22 = vadd.s32 %v20, 256
  %23 = vset.pattern.permute.xlu0 0
  %24 = vperm.xlu0 %23, %v15
  %v25 = vpop.permute.xlu0 %24
  %26 = vset.pattern.permute.xlu0 0
  %27 = vperm.xlu0 %26, %v16
  %v28 = vpop.permute.xlu0 %27
  %29 = vset.pattern.permute.xlu0 0
  %30 = vperm.xlu0 %29, %v17
  %v31 = vpop.permute.xlu0 %30
  %32 = vset.pattern.permute.xlu0 0
  %33 = vperm.xlu0 %32, %v18
  %v34 = vpop.permute.xlu0 %33
  %vm35 = vcmp.eq.s32.totalorder %v20, %v25
  %vm36 = vcmp.eq.s32.totalorder %v21, %v25
  %vm37 = vcmp.eq.s32.totalorder %v22, %v25
  %vm38 = vcmp.eq.s32.totalorder %v20, %v28
  %vm39 = vcmp.eq.s32.totalorder %v21, %v28
  %vm40 = vcmp.eq.s32.totalorder %v22, %v28
  %vm41 = vcmp.eq.s32.totalorder %v20, %v31
  %vm42 = vcmp.eq.s32.totalorder %v21, %v31
  %vm43 = vcmp.eq.s32.totalorder %v22, %v31
  %vm44 = vcmp.eq.s32.totalorder %v20, %v34
  %vm45 = vcmp.eq.s32.totalorder %v21, %v34
  %vm46 = vcmp.eq.s32.totalorder %v22, %v34
  %v47 = vsel %vm35, 1.0, 0.0
  %v48 = vsel %vm36, 1.0, 0.0
  %v49 = vsel %vm37, 1.0, 0.0
  %v50 = vsel %vm38, 1.0, 0.0
  %v51 = vsel %vm39, 1.0, 0.0
  %v52 = vsel %vm40, 1.0, 0.0
  %v53 = vsel %vm41, 1.0, 0.0
  %v54 = vsel %vm42, 1.0, 0.0
  %v55 = vsel %vm43, 1.0, 0.0
  %v56 = vsel %vm44, 1.0, 0.0
  %v57 = vsel %vm45, 1.0, 0.0
  %v58 = vsel %vm46, 1.0, 0.0
  %v59 = vpack.c.bf16 %v50, %v47
  %v60 = vpack.c.bf16 %v51, %v48
  %v61 = vpack.c.bf16 %v52, %v49
  %v62 = vpack.c.bf16 %v56, %v53
  %v63 = vpack.c.bf16 %v57, %v54
  %v64 = vpack.c.bf16 %v58, %v55
  %v65 = vld [vmem:[%s1] sm:$0xf]
  %v66 = vld [vmem:[%s1 + $0x4] sm:$0xf]
  %v67 = vld [vmem:[%s1 + $0x8] sm:$0xf]
  %v68 = vld [vmem:[%s1 + $0xc] sm:$0xf]
  %v69 = vld [vmem:[%s1 + $0x10] sm:$0xf]
  %v70 = vld [vmem:[%s1 + $0x14] sm:$0xf]
  %v71 = vld [vmem:[%s1 + $0x18] sm:$0xf]
  %v72 = vld [vmem:[%s1 + $0x1c] sm:$0xf]
  %v73 = vld [vmem:[%s1 + $0x20] sm:$0xf]
  %v74 = vld [vmem:[%s1 + $0x24] sm:$0xf]
  %v75 = vld [vmem:[%s1 + $0x28] sm:$0xf]
  %v76 = vld [vmem:[%s1 + $0x2c] sm:$0xf]
  %v77 = vld [vmem:[%s1 + $0x30] sm:$0xf]
  %v78 = vld [vmem:[%s1 + $0x34] sm:$0xf]
  %v79 = vld [vmem:[%s1 + $0x38] sm:$0xf]
  %v80 = vld [vmem:[%s1 + $0x3c] sm:$0xf]
  %v81 = vld [vmem:[%s1 + $0x40] sm:$0xf]
  %v82 = vld [vmem:[%s1 + $0x44] sm:$0xf]
  %v83 = vld [vmem:[%s1 + $0x48] sm:$0xf]
  %v84 = vld [vmem:[%s1 + $0x4c] sm:$0xf]
  %v85 = vld [vmem:[%s1 + $0x50] sm:$0xf]
  %v86 = vld [vmem:[%s1 + $0x54] sm:$0xf]
  %v87 = vld [vmem:[%s1 + $0x58] sm:$0xf]
  %v88 = vld [vmem:[%s1 + $0x5c] sm:$0xf]
  %v89 = vld [vmem:[%s1 + $0x60] sm:$0xf]
  %v90 = vld [vmem:[%s1 + $0x64] sm:$0xf]
  %v91 = vld [vmem:[%s1 + $0x68] sm:$0xf]
  %v92 = vld [vmem:[%s1 + $0x6c] sm:$0xf]
  %v93 = vld [vmem:[%s1 + $0x70] sm:$0xf]
  %v94 = vld [vmem:[%s1 + $0x74] sm:$0xf]
  %v95 = vld [vmem:[%s1 + $0x78] sm:$0xf]
  %v96 = vld [vmem:[%s1 + $0x7c] sm:$0xf]
  %v97 = vld [vmem:[%s1 + $0x80] sm:$0xf]
  %v98 = vld [vmem:[%s1 + $0x84] sm:$0xf]
  %v99 = vld [vmem:[%s1 + $0x88] sm:$0xf]
  %v100 = vld [vmem:[%s1 + $0x8c] sm:$0xf]
  %v101 = vld [vmem:[%s1 + $0x90] sm:$0xf]
  %v102 = vld [vmem:[%s1 + $0x94] sm:$0xf]
  %v103 = vld [vmem:[%s2 + $0x8] sm:$0xff]
  %v104 = vld [vmem:[%s2 + $0x10] sm:$0xff]
  %v105 = vld [vmem:[%s2 + $0x18] sm:$0xff]
  %v106 = vld [vmem:[%s2 + $0x20] sm:$0xff]
  %v145 = vunpack.c.l.b16 %v65
  %v146 = vunpack.c.l.b16 %v66
  %v147 = vunpack.c.l.b16 %v67
  %v148 = vunpack.c.l.b16 %v68
  %v149 = vunpack.c.l.b16 %v69
  %v150 = vunpack.c.l.b16 %v70
  %v151 = vunpack.c.l.b16 %v71
  %v152 = vunpack.c.l.b16 %v72
  %v153 = vunpack.c.l.b16 %v73
  %v154 = vunpack.c.l.b16 %v74
  %v155 = vunpack.c.l.b16 %v75
  %v156 = vunpack.c.l.b16 %v76
  %v157 = vunpack.c.l.b16 %v77
  %v158 = vunpack.c.l.b16 %v78
  %v159 = vunpack.c.l.b16 %v79
  %v160 = vunpack.c.l.b16 %v80
  %v161 = vunpack.c.l.b16 %v81
  %v162 = vunpack.c.l.b16 %v82
  %v163 = vunpack.c.l.b16 %v83
  %v164 = vunpack.c.l.b16 %v84
  %v165 = vunpack.c.l.b16 %v85
  %v166 = vunpack.c.l.b16 %v86
  %v167 = vunpack.c.l.b16 %v87
  %v168 = vunpack.c.l.b16 %v88
  %v169 = vunpack.c.l.b16 %v89
  %v170 = vunpack.c.l.b16 %v90
  %v171 = vunpack.c.l.b16 %v91
  %v172 = vunpack.c.l.b16 %v92
  %v173 = vunpack.c.l.b16 %v93
  %v174 = vunpack.c.l.b16 %v94
  %v175 = vunpack.c.l.b16 %v95
  %v176 = vunpack.c.l.b16 %v96
  %v177 = vunpack.c.l.b16 %v97
  %v178 = vunpack.c.l.b16 %v98
  %v179 = vunpack.c.l.b16 %v99
  %v180 = vunpack.c.l.b16 %v100
  %v181 = vunpack.c.l.b16 %v101
  %v182 = vunpack.c.l.b16 %v102
  %v183 = vpack.c.b16 %v146, %v145
  %v184 = vpack.c.b16 %v148, %v147
  %v185 = vpack.c.b16 %v150, %v149
  %v186 = vpack.c.b16 %v152, %v151
  %v187 = vpack.c.b16 %v154, %v153
  %v188 = vpack.c.b16 %v156, %v155
  %v189 = vpack.c.b16 %v158, %v157
  %v190 = vpack.c.b16 %v160, %v159
  %v191 = vpack.c.b16 %v162, %v161
  %v192 = vpack.c.b16 %v164, %v163
  %v193 = vpack.c.b16 %v166, %v165
  %v194 = vpack.c.b16 %v168, %v167
  %v195 = vpack.c.b16 %v170, %v169
  %v196 = vpack.c.b16 %v172, %v171
  %v197 = vpack.c.b16 %v174, %v173
  %v198 = vpack.c.b16 %v176, %v175
  %v199 = vpack.c.b16 %v178, %v177
  %v200 = vpack.c.b16 %v180, %v179
  %v201 = vpack.c.b16 %v182, %v181
  %vm221 = vcmask 392192
  %v223 = vsel %vm221, %v61, 0
  %v226 = vsel %vm221, %v64, 0
  %228 = vmatprep.subr.bf16.mxu0 0
  %229 = vmatpush1.bf16.msra.mxu0 %v190
  %230 = vmatprep.subr.bf16.mxu0 0
  %231 = vmatpush1.bf16.msra.mxu0 %v189
  %232 = vmatprep.subr.bf16.mxu0 0
  %233 = vmatpush1.bf16.msra.mxu0 %v188
  %234 = vmatprep.subr.bf16.mxu0 0
  %235 = vmatpush1.bf16.msra.mxu0 %v187
  %236 = vmatprep.subr.bf16.mxu0 0
  %237 = vmatpush1.bf16.msra.mxu0 %v186
  %238 = vmatprep.subr.bf16.mxu0 0
  %239 = vmatpush1.bf16.msra.mxu0 %v185
  %240 = vmatprep.subr.bf16.mxu0 0
  %241 = vmatpush1.bf16.msra.mxu0 %v184
  %242 = vmatprep.subr.bf16.mxu0 0
  %243 = vmatpush1.bf16.msra.mxu0 %v183
  %244 = vmatprep.subr.bf16.mxu0 0
  %245 = vmatpush2.bf16.msra.mxu0 %v198
  %246 = vmatprep.subr.bf16.mxu0 0
  %247 = vmatpush2.bf16.msra.mxu0 %v197
  %248 = vmatprep.subr.bf16.mxu0 0
  %249 = vmatpush2.bf16.msra.mxu0 %v196
  %250 = vmatprep.subr.bf16.mxu0 0
  %251 = vmatpush2.bf16.msra.mxu0 %v195
  %252 = vmatprep.subr.bf16.mxu0 0
  %253 = vmatpush2.bf16.msra.mxu0 %v194
  %254 = vmatprep.subr.bf16.mxu0 0
  %255 = vmatpush2.bf16.msra.mxu0 %v193
  %256 = vmatprep.subr.bf16.mxu0 0
  %257 = vmatpush2.bf16.msra.mxu0 %v192
  %258 = vmatprep.subr.bf16.mxu0 0
  %259 = vmatpush2.bf16.msra.mxu0 %v191
  %260 = vmatprep.mubr.bf16.mxu0 %v60
  %261 = vmatmul.mubr.bf16.gmra.mxu0 %v59
  %v262 = vpop.f32.mrf.mxu0
  %v263 = vadd.f32 %v103, %v262
  %v264 = vpop.f32.mrf.mxu0
  %v265 = vpop.f32.mrf.mxu0
  %v266 = vadd.f32 %v104, %v265
  %v267 = vpop.f32.mrf.mxu0
  %268 = vmatprep.mubr.bf16.mxu0 %v63
  %269 = vmatmul.mubr.bf16.gmra.mxu0 %v62
  %v270 = vpop.f32.mrf.mxu0
  %v271 = vadd.f32 %v105, %v270
  %v272 = vpop.f32.mrf.mxu0
  %v273 = vpop.f32.mrf.mxu0
  %v274 = vadd.f32 %v106, %v273
  %v275 = vpop.f32.mrf.mxu0
  %276 = vdwg.mxu0
  %277 = vmatprep.subr.bf16.mxu0 0
  %278 = vmatpush1.bf16.msra.mxu0 0
  %279 = vmatprep.subr.bf16.mxu0 0
  %280 = vmatpush1.bf16.msra.mxu0 0
  %281 = vmatprep.subr.bf16.mxu0 0
  %282 = vmatpush1.bf16.msra.mxu0 0
  %283 = vmatprep.subr.bf16.mxu0 0
  %284 = vmatpush1.bf16.msra.mxu0 0
  %285 = vmatprep.subr.bf16.mxu0 0
  %286 = vmatpush1.bf16.msra.mxu0 0
  %287 = vmatprep.subr.bf16.mxu0 0
  %288 = vmatpush1.bf16.msra.mxu0 %v201
  %289 = vmatprep.subr.bf16.mxu0 0
  %290 = vmatpush1.bf16.msra.mxu0 %v200
  %291 = vmatprep.subr.bf16.mxu0 0
  %292 = vmatpush1.bf16.msra.mxu0 %v199
  %293 = vmatprep.subr.bf16.mxu0 0
  %294 = vmatpush2.bf16.msra.mxu0 0
  %295 = vmatprep.subr.bf16.mxu0 0
  %296 = vmatpush2.bf16.msra.mxu0 0
  %297 = vmatprep.subr.bf16.mxu0 0
  %298 = vmatpush2.bf16.msra.mxu0 0
  %299 = vmatprep.subr.bf16.mxu0 0
  %300 = vmatpush2.bf16.msra.mxu0 0
  %301 = vmatprep.subr.bf16.mxu0 0
  %302 = vmatpush2.bf16.msra.mxu0 0
  %303 = vmatprep.subr.bf16.mxu0 0
  %304 = vmatpush2.bf16.msra.mxu0 0
  %305 = vmatprep.subr.bf16.mxu0 0
  %306 = vmatpush2.bf16.msra.mxu0 0
  %307 = vmatprep.subr.bf16.mxu0 0
  %308 = vmatpush2.bf16.msra.mxu0 0
  %309 = vmatprep.mubr.bf16.mxu0 0
  %310 = vmatmul.mubr.bf16.gmra.mxu0 %v223
  %v311 = vpop.f32.mrf.mxu0
  %v312 = vadd.f32 %v263, %v311
  %v313 = vpop.f32.mrf.mxu0
  %v314 = vpop.f32.mrf.mxu0
  %v315 = vadd.f32 %v266, %v314
  %v316 = vpop.f32.mrf.mxu0
  %317 = vmatprep.mubr.bf16.mxu0 0
  %318 = vmatmul.mubr.bf16.gmra.mxu0 %v226
  %v319 = vpop.f32.mrf.mxu0
  %v320 = vadd.f32 %v271, %v319
  %v321 = vpop.f32.mrf.mxu0
  %v322 = vpop.f32.mrf.mxu0
  %v323 = vadd.f32 %v274, %v322
  %v324 = vpop.f32.mrf.mxu0
  %325 = vdwg.mxu0
  %v326 = vld [vmem:[%s2] sm:$0x1]
  %v327 = vld [vmem:[%s2 + $0x1] sm:$0x1]
  %vm328 = vcmask 261120
  %v329 = vsel %vm328, %v312, 0.0
  %330 = vadd.xlane.f32.xlu0 %v329
  %v331 = vpop.xlane.xlu0 %330
  %v332 = vsel %vm328, %v315, 0.0
  %333 = vadd.xlane.f32.xlu0 %v332
  %v334 = vpop.xlane.xlu0 %333
  %v335 = vsel %vm328, %v320, 0.0
  %336 = vadd.xlane.f32.xlu0 %v335
  %v337 = vpop.xlane.xlu0 %336
  %v338 = vsel %vm328, %v323, 0.0
  %339 = vadd.xlane.f32.xlu0 %v338
  %v340 = vpop.xlane.xlu0 %339
  %v341 = vrcp.pop 32.0
  %v342 = vmul.f32 %v331, %v341
  %v343 = vmul.f32 %v334, %v341
  %v344 = vmul.f32 %v337, %v341
  %v345 = vmul.f32 %v340, %v341
  %v346 = vsub.f32 %v312, %v342
  %v347 = vsub.f32 %v315, %v343
  %v348 = vsub.f32 %v320, %v344
  %v349 = vsub.f32 %v323, %v345
  %v350 = vmul.f32 %v346, %v346
  %v351 = vmul.f32 %v347, %v347
  %v352 = vmul.f32 %v348, %v348
  %v353 = vmul.f32 %v349, %v349
  %v354 = vsel %vm328, %v350, 0.0
  %355 = vadd.xlane.f32.xlu0 %v354
  %v356 = vpop.xlane.xlu0 %355
  %v357 = vsel %vm328, %v351, 0.0
  %358 = vadd.xlane.f32.xlu0 %v357
  %v359 = vpop.xlane.xlu0 %358
  %v360 = vsel %vm328, %v352, 0.0
  %361 = vadd.xlane.f32.xlu0 %v360
  %v362 = vpop.xlane.xlu0 %361
  %v363 = vsel %vm328, %v353, 0.0
  %364 = vadd.xlane.f32.xlu0 %v363
  %v365 = vpop.xlane.xlu0 %364
  %v366 = vmul.f32 %v356, %v341
  %v367 = vmul.f32 %v359, %v341
  %v368 = vmul.f32 %v362, %v341
  %v369 = vmul.f32 %v365, %v341
  %v370 = vadd.f32 %v366, 1e-12
  %v371 = vadd.f32 %v367, 1e-12
  %v372 = vadd.f32 %v368, 1e-12
  %v373 = vadd.f32 %v369, 1e-12
  %v374 = vrsqrt.pop %v370
  %v375 = vrsqrt.pop %v371
  %v376 = vrsqrt.pop %v372
  %v377 = vrsqrt.pop %v373
  %v378 = vmul.f32 %v346, %v374
  %v379 = vmul.f32 %v347, %v375
  %v380 = vmul.f32 %v348, %v376
  %v381 = vmul.f32 %v349, %v377
  %v382 = vlaneseq
  %v383 = vshrl.u32 %v382, 7
  %v384 = vsub.s32 0, %v383
  %v385 = vrot.slane %v326, %v384
  %v386 = vmul.f32 %v378, %v385
  %v387 = vmul.f32 %v379, %v385
  %v388 = vmul.f32 %v380, %v385
  %v389 = vmul.f32 %v381, %v385
  %v390 = vlaneseq
  %v391 = vshrl.u32 %v390, 7
  %v392 = vsub.s32 0, %v391
  %v393 = vrot.slane %v327, %v392
  %v394 = vadd.f32 %v386, %v393
  %v395 = vadd.f32 %v387, %v393
  %v396 = vadd.f32 %v388, %v393
  %v397 = vadd.f32 %v389, %v393
  %v398 = vld [vmem:[%s1 + $0x98] sm:$0xf]
  %v399 = vld [vmem:[%s1 + $0x9c] sm:$0xf]
  %v400 = vld [vmem:[%s1 + $0xa0] sm:$0xf]
  %v401 = vld [vmem:[%s1 + $0xa4] sm:$0xf]
  %v402 = vld [vmem:[%s1 + $0xa8] sm:$0xf]
  %v403 = vld [vmem:[%s1 + $0xac] sm:$0xf]
  %v404 = vld [vmem:[%s1 + $0xb0] sm:$0xf]
  %v405 = vld [vmem:[%s1 + $0xb4] sm:$0xf]
  %v406 = vld [vmem:[%s1 + $0xb8] sm:$0xf]
  %v407 = vld [vmem:[%s1 + $0xbc] sm:$0xf]
  %v408 = vld [vmem:[%s1 + $0xc0] sm:$0xf]
  %v409 = vld [vmem:[%s1 + $0xc4] sm:$0xf]
  %v410 = vld [vmem:[%s1 + $0xc8] sm:$0xf]
  %v411 = vld [vmem:[%s1 + $0xcc] sm:$0xf]
  %v412 = vld [vmem:[%s1 + $0xd0] sm:$0xf]
  %v413 = vld [vmem:[%s1 + $0xd4] sm:$0xf]
  %v414 = vld [vmem:[%s1 + $0xd8] sm:$0xf]
  %v415 = vld [vmem:[%s1 + $0xdc] sm:$0xf]
  %v416 = vld [vmem:[%s1 + $0xe0] sm:$0xf]
  %v417 = vld [vmem:[%s1 + $0xe4] sm:$0xf]
  %v418 = vpack.c.bf16 %v395, %v394
  %v419 = vpack.c.bf16 %v397, %v396
  %v420 = vld [vmem:[%s2 + $0x28] sm:$0x1]
  %v421 = vlaneseq
  %v422 = vshrl.u32 %v421, 7
  %v423 = vsub.s32 0, %v422
  %v424 = vrot.slane %v420, %v423
  %v429 = vunpack.c.l.b16 %v398
  %v430 = vunpack.c.l.b16 %v399
  %v431 = vunpack.c.l.b16 %v400
  %v432 = vunpack.c.l.b16 %v401
  %v433 = vpack.c.b16 %v430, %v429
  %v434 = vpack.c.b16 %v432, %v431
  %v438 = vsel %vm328, %v418, 0
  %v441 = vsel %vm328, %v419, 0
  %443 = vmatprep.subr.bf16.mxu0 0
  %444 = vmatpush1.bf16.msra.mxu0 0
  %445 = vmatprep.subr.bf16.mxu0 0
  %446 = vmatpush1.bf16.msra.mxu0 0
  %447 = vmatprep.subr.bf16.mxu0 0
  %448 = vmatpush1.bf16.msra.mxu0 0
  %449 = vmatprep.subr.bf16.mxu0 0
  %450 = vmatpush1.bf16.msra.mxu0 0
  %451 = vmatprep.subr.bf16.mxu0 0
  %452 = vmatpush1.bf16.msra.mxu0 0
  %453 = vmatprep.subr.bf16.mxu0 0
  %454 = vmatpush1.bf16.msra.mxu0 0
  %455 = vmatprep.subr.bf16.mxu0 0
  %456 = vmatpush1.bf16.msra.mxu0 %v434
  %457 = vmatprep.subr.bf16.mxu0 0
  %458 = vmatpush1.bf16.msra.mxu0 %v433
  %459 = vmatprep.subr.bf16.mxu0 0
  %460 = vmatpush2.bf16.msra.mxu0 0
  %461 = vmatprep.subr.bf16.mxu0 0
  %462 = vmatpush2.bf16.msra.mxu0 0
  %463 = vmatprep.subr.bf16.mxu0 0
  %464 = vmatpush2.bf16.msra.mxu0 0
  %465 = vmatprep.subr.bf16.mxu0 0
  %466 = vmatpush2.bf16.msra.mxu0 0
  %467 = vmatprep.subr.bf16.mxu0 0
  %468 = vmatpush2.bf16.msra.mxu0 0
  %469 = vmatprep.subr.bf16.mxu0 0
  %470 = vmatpush2.bf16.msra.mxu0 0
  %471 = vmatprep.subr.bf16.mxu0 0
  %472 = vmatpush2.bf16.msra.mxu0 0
  %473 = vmatprep.subr.bf16.mxu0 0
  %474 = vmatpush2.bf16.msra.mxu0 0
  %475 = vmatprep.mubr.bf16.mxu0 0
  %476 = vmatmul.mubr.bf16.gmra.mxu0 %v438
  %v477 = vpop.f32.mrf.mxu0
  %v478 = vadd.f32 %v424, %v477
  %v479 = vpop.f32.mrf.mxu0
  %v480 = vpop.f32.mrf.mxu0
  %v481 = vadd.f32 %v424, %v480
  %v482 = vpop.f32.mrf.mxu0
  %483 = vmatprep.mubr.bf16.mxu0 0
  %484 = vmatmul.mubr.bf16.gmra.mxu0 %v441
  %v485 = vpop.f32.mrf.mxu0
  %v486 = vadd.f32 %v424, %v485
  %v487 = vpop.f32.mrf.mxu0
  %v488 = vpop.f32.mrf.mxu0
  %v489 = vadd.f32 %v424, %v488
  %v490 = vpop.f32.mrf.mxu0
  %491 = vdwg.mxu0
  %v492 = vpack.c.bf16 %v481, %v478
  %v493 = vpack.c.bf16 %v489, %v486
  %495 = vrot.lane.b32.xlu0 %v492, 96
  %v496 = vpop.permute.xlu0 %495
  %vm497 = vcmask 64512
  %v499 = vsel %vm497, %v492, 0
  %v502 = vsel %vm497, %v496, 0
  %504 = vmatprep.subr.bf16.mxu0 0
  %505 = vmatpush1.bf16.xpose.msra.mxu0 0
  %506 = vmatprep.subr.bf16.mxu0 0
  %507 = vmatpush1.bf16.xpose.msra.mxu0 0
  %508 = vmatprep.subr.bf16.mxu0 0
  %509 = vmatpush1.bf16.xpose.msra.mxu0 0
  %510 = vmatprep.subr.bf16.mxu0 0
  %511 = vmatpush1.bf16.xpose.msra.mxu0 0
  %512 = vmatprep.subr.bf16.mxu0 0
  %513 = vmatpush1.bf16.xpose.msra.mxu0 0
  %514 = vmatprep.subr.bf16.mxu0 0
  %515 = vmatpush1.bf16.xpose.msra.mxu0 0
  %516 = vmatprep.subr.bf16.mxu0 0
  %517 = vmatpush1.bf16.xpose.msra.mxu0 0
  %518 = vmatprep.subr.bf16.mxu0 0
  %519 = vmatpush1.bf16.xpose.msra.mxu0 %v502
  %520 = vmatprep.subr.bf16.mxu0 0
  %521 = vmatpush2.bf16.xpose.msra.mxu0 0
  %522 = vmatprep.subr.bf16.mxu0 0
  %523 = vmatpush2.bf16.xpose.msra.mxu0 0
  %524 = vmatprep.subr.bf16.mxu0 0
  %525 = vmatpush2.bf16.xpose.msra.mxu0 0
  %526 = vmatprep.subr.bf16.mxu0 0
  %527 = vmatpush2.bf16.xpose.msra.mxu0 0
  %528 = vmatprep.subr.bf16.mxu0 0
  %529 = vmatpush2.bf16.xpose.msra.mxu0 0
  %530 = vmatprep.subr.bf16.mxu0 0
  %531 = vmatpush2.bf16.xpose.msra.mxu0 0
  %532 = vmatprep.subr.bf16.mxu0 0
  %533 = vmatpush2.bf16.xpose.msra.mxu0 0
  %534 = vmatprep.subr.bf16.mxu0 0
  %535 = vmatpush2.bf16.xpose.msra.mxu0 0
  %536 = vmatprep.mubr.bf16.mxu0 0
  %537 = vmatmul.mubr.bf16.gmra.mxu0 %v499
  %v538 = vpop.f32.mrf.mxu0
  %v539 = vadd.f32 0.0, %v538
  %v540 = vpop.f32.mrf.mxu0
  %v541 = vpop.f32.mrf.mxu0
  %v542 = vadd.f32 0.0, %v541
  %v543 = vpop.f32.mrf.mxu0
  %544 = vdwg.mxu0
  %546 = vrot.lane.b32.xlu0 %v493, 96
  %v547 = vpop.permute.xlu0 %546
  %v549 = vsel %vm497, %v493, 0
  %v552 = vsel %vm497, %v547, 0
  %554 = vmatprep.subr.bf16.mxu0 0
  %555 = vmatpush1.bf16.xpose.msra.mxu0 0
  %556 = vmatprep.subr.bf16.mxu0 0
  %557 = vmatpush1.bf16.xpose.msra.mxu0 0
  %558 = vmatprep.subr.bf16.mxu0 0
  %559 = vmatpush1.bf16.xpose.msra.mxu0 0
  %560 = vmatprep.subr.bf16.mxu0 0
  %561 = vmatpush1.bf16.xpose.msra.mxu0 0
  %562 = vmatprep.subr.bf16.mxu0 0
  %563 = vmatpush1.bf16.xpose.msra.mxu0 0
  %564 = vmatprep.subr.bf16.mxu0 0
  %565 = vmatpush1.bf16.xpose.msra.mxu0 0
  %566 = vmatprep.subr.bf16.mxu0 0
  %567 = vmatpush1.bf16.xpose.msra.mxu0 0
  %568 = vmatprep.subr.bf16.mxu0 0
  %569 = vmatpush1.bf16.xpose.msra.mxu0 %v552
  %570 = vmatprep.subr.bf16.mxu0 0
  %571 = vmatpush2.bf16.xpose.msra.mxu0 0
  %572 = vmatprep.subr.bf16.mxu0 0
  %573 = vmatpush2.bf16.xpose.msra.mxu0 0
  %574 = vmatprep.subr.bf16.mxu0 0
  %575 = vmatpush2.bf16.xpose.msra.mxu0 0
  %576 = vmatprep.subr.bf16.mxu0 0
  %577 = vmatpush2.bf16.xpose.msra.mxu0 0
  %578 = vmatprep.subr.bf16.mxu0 0
  %579 = vmatpush2.bf16.xpose.msra.mxu0 0
  %580 = vmatprep.subr.bf16.mxu0 0
  %581 = vmatpush2.bf16.xpose.msra.mxu0 0
  %582 = vmatprep.subr.bf16.mxu0 0
  %583 = vmatpush2.bf16.xpose.msra.mxu0 0
  %584 = vmatprep.subr.bf16.mxu0 0
  %585 = vmatpush2.bf16.xpose.msra.mxu0 0
  %586 = vmatprep.mubr.bf16.mxu0 0
  %587 = vmatmul.mubr.bf16.gmra.mxu0 %v549
  %v588 = vpop.f32.mrf.mxu0
  %v589 = vadd.f32 0.0, %v588
  %v590 = vpop.f32.mrf.mxu0
  %v591 = vpop.f32.mrf.mxu0
  %v592 = vadd.f32 0.0, %v591
  %v593 = vpop.f32.mrf.mxu0
  %594 = vdwg.mxu0
  %vm595 = vcmask 130048
  %v596 = vsel %vm595, %v539, -inf
  %597 = vmax.xlane.f32.xlu0 %v596
  %v598 = vpop.xlane.xlu0 %597
  %v599 = vsel %vm595, %v542, -inf
  %600 = vmax.xlane.f32.xlu0 %v599
  %v601 = vpop.xlane.xlu0 %600
  %v602 = vsel %vm595, %v589, -inf
  %603 = vmax.xlane.f32.xlu0 %v602
  %v604 = vpop.xlane.xlu0 %603
  %v605 = vsel %vm595, %v592, -inf
  %606 = vmax.xlane.f32.xlu0 %v605
  %v607 = vpop.xlane.xlu0 %606
  %v608 = vsub.f32 %v539, %v598
  %v609 = vsub.f32 %v542, %v601
  %v610 = vsub.f32 %v589, %v604
  %v611 = vsub.f32 %v592, %v607
  %v612 = vmul.f32 %v608, 1.442695
  %v613 = vpow.pop %v612
  %v614 = vmul.f32 %v609, 1.442695
  %v615 = vpow.pop %v614
  %v616 = vmul.f32 %v610, 1.442695
  %v617 = vpow.pop %v616
  %v618 = vmul.f32 %v611, 1.442695
  %v619 = vpow.pop %v618
  %v620 = vsel %vm595, %v613, 0.0
  %621 = vadd.xlane.f32.xlu0 %v620
  %v622 = vpop.xlane.xlu0 %621
  %v623 = vsel %vm595, %v615, 0.0
  %624 = vadd.xlane.f32.xlu0 %v623
  %v625 = vpop.xlane.xlu0 %624
  %v626 = vsel %vm595, %v617, 0.0
  %627 = vadd.xlane.f32.xlu0 %v626
  %v628 = vpop.xlane.xlu0 %627
  %v629 = vsel %vm595, %v619, 0.0
  %630 = vadd.xlane.f32.xlu0 %v629
  %v631 = vpop.xlane.xlu0 %630
  %v632 = vrcp.pop %v622
  %v633 = vrcp.pop %v625
  %v634 = vrcp.pop %v628
  %v635 = vrcp.pop %v631
  %v636 = vmul.f32 %v613, %v632
  %v637 = vmul.f32 %v615, %v633
  %v638 = vmul.f32 %v617, %v634
  %v639 = vmul.f32 %v619, %v635
  %v640 = vpack.c.bf16 %v637, %v636
  %v641 = vpack.c.bf16 %v639, %v638
  %642 = vrot.lane.b32.xlu0 %v492, 64
  %v643 = vpop.permute.xlu0 %642
  %v646 = vsel %vm595, %v640, 0
  %648 = vmatprep.subr.bf16.mxu0 0
  %649 = vmatpush1.bf16.msra.mxu0 0
  %650 = vmatprep.subr.bf16.mxu0 0
  %651 = vmatpush1.bf16.msra.mxu0 0
  %652 = vmatprep.subr.bf16.mxu0 0
  %653 = vmatpush1.bf16.msra.mxu0 0
  %654 = vmatprep.subr.bf16.mxu0 0
  %655 = vmatpush1.bf16.msra.mxu0 0
  %656 = vmatprep.subr.bf16.mxu0 0
  %657 = vmatpush1.bf16.msra.mxu0 0
  %658 = vmatprep.subr.bf16.mxu0 0
  %659 = vmatpush1.bf16.msra.mxu0 0
  %660 = vmatprep.subr.bf16.mxu0 0
  %661 = vmatpush1.bf16.msra.mxu0 0
  %662 = vmatprep.subr.bf16.mxu0 0
  %663 = vmatpush1.bf16.msra.mxu0 %v643
  %664 = vmatprep.subr.bf16.mxu0 0
  %665 = vmatpush2.bf16.msra.mxu0 0
  %666 = vmatprep.subr.bf16.mxu0 0
  %667 = vmatpush2.bf16.msra.mxu0 0
  %668 = vmatprep.subr.bf16.mxu0 0
  %669 = vmatpush2.bf16.msra.mxu0 0
  %670 = vmatprep.subr.bf16.mxu0 0
  %671 = vmatpush2.bf16.msra.mxu0 0
  %672 = vmatprep.subr.bf16.mxu0 0
  %673 = vmatpush2.bf16.msra.mxu0 0
  %674 = vmatprep.subr.bf16.mxu0 0
  %675 = vmatpush2.bf16.msra.mxu0 0
  %676 = vmatprep.subr.bf16.mxu0 0
  %677 = vmatpush2.bf16.msra.mxu0 0
  %678 = vmatprep.subr.bf16.mxu0 0
  %679 = vmatpush2.bf16.msra.mxu0 0
  %680 = vmatprep.mubr.bf16.mxu0 0
  %681 = vmatmul.mubr.bf16.gmra.mxu0 %v646
  %v682 = vpop.f32.mrf.mxu0
  %v683 = vadd.f32 0.0, %v682
  %v684 = vpop.f32.mrf.mxu0
  %v685 = vpop.f32.mrf.mxu0
  %v686 = vadd.f32 0.0, %v685
  %v687 = vpop.f32.mrf.mxu0
  %688 = vdwg.mxu0
  %689 = vrot.lane.b32.xlu0 %v493, 64
  %v690 = vpop.permute.xlu0 %689
  %v693 = vsel %vm595, %v641, 0
  %695 = vmatprep.subr.bf16.mxu0 0
  %696 = vmatpush1.bf16.msra.mxu0 0
  %697 = vmatprep.subr.bf16.mxu0 0
  %698 = vmatpush1.bf16.msra.mxu0 0
  %699 = vmatprep.subr.bf16.mxu0 0
  %700 = vmatpush1.bf16.msra.mxu0 0
  %701 = vmatprep.subr.bf16.mxu0 0
  %702 = vmatpush1.bf16.msra.mxu0 0
  %703 = vmatprep.subr.bf16.mxu0 0
  %704 = vmatpush1.bf16.msra.mxu0 0
  %705 = vmatprep.subr.bf16.mxu0 0
  %706 = vmatpush1.bf16.msra.mxu0 0
  %707 = vmatprep.subr.bf16.mxu0 0
  %708 = vmatpush1.bf16.msra.mxu0 0
  %709 = vmatprep.subr.bf16.mxu0 0
  %710 = vmatpush1.bf16.msra.mxu0 %v690
  %711 = vmatprep.subr.bf16.mxu0 0
  %712 = vmatpush2.bf16.msra.mxu0 0
  %713 = vmatprep.subr.bf16.mxu0 0
  %714 = vmatpush2.bf16.msra.mxu0 0
  %715 = vmatprep.subr.bf16.mxu0 0
  %716 = vmatpush2.bf16.msra.mxu0 0
  %717 = vmatprep.subr.bf16.mxu0 0
  %718 = vmatpush2.bf16.msra.mxu0 0
  %719 = vmatprep.subr.bf16.mxu0 0
  %720 = vmatpush2.bf16.msra.mxu0 0
  %721 = vmatprep.subr.bf16.mxu0 0
  %722 = vmatpush2.bf16.msra.mxu0 0
  %723 = vmatprep.subr.bf16.mxu0 0
  %724 = vmatpush2.bf16.msra.mxu0 0
  %725 = vmatprep.subr.bf16.mxu0 0
  %726 = vmatpush2.bf16.msra.mxu0 0
  %727 = vmatprep.mubr.bf16.mxu0 0
  %728 = vmatmul.mubr.bf16.gmra.mxu0 %v693
  %v729 = vpop.f32.mrf.mxu0
  %v730 = vadd.f32 0.0, %v729
  %v731 = vpop.f32.mrf.mxu0
  %v732 = vpop.f32.mrf.mxu0
  %v733 = vadd.f32 0.0, %v732
  %v734 = vpop.f32.mrf.mxu0
  %735 = vdwg.mxu0
  %736 = vrot.lane.b32.xlu0 %v492, 120
  %v737 = vpop.permute.xlu0 %736
  %738 = vrot.lane.b32.xlu0 %v492, 88
  %v739 = vpop.permute.xlu0 %738
  %v741 = vsel %vm497, %v737, 0
  %v744 = vsel %vm497, %v739, 0
  %746 = vmatprep.subr.bf16.mxu0 0
  %747 = vmatpush1.bf16.xpose.msra.mxu0 0
  %748 = vmatprep.subr.bf16.mxu0 0
  %749 = vmatpush1.bf16.xpose.msra.mxu0 0
  %750 = vmatprep.subr.bf16.mxu0 0
  %751 = vmatpush1.bf16.xpose.msra.mxu0 0
  %752 = vmatprep.subr.bf16.mxu0 0
  %753 = vmatpush1.bf16.xpose.msra.mxu0 0
  %754 = vmatprep.subr.bf16.mxu0 0
  %755 = vmatpush1.bf16.xpose.msra.mxu0 0
  %756 = vmatprep.subr.bf16.mxu0 0
  %757 = vmatpush1.bf16.xpose.msra.mxu0 0
  %758 = vmatprep.subr.bf16.mxu0 0
  %759 = vmatpush1.bf16.xpose.msra.mxu0 0
  %760 = vmatprep.subr.bf16.mxu0 0
  %761 = vmatpush1.bf16.xpose.msra.mxu0 %v744
  %762 = vmatprep.subr.bf16.mxu0 0
  %763 = vmatpush2.bf16.xpose.msra.mxu0 0
  %764 = vmatprep.subr.bf16.mxu0 0
  %765 = vmatpush2.bf16.xpose.msra.mxu0 0
  %766 = vmatprep.subr.bf16.mxu0 0
  %767 = vmatpush2.bf16.xpose.msra.mxu0 0
  %768 = vmatprep.subr.bf16.mxu0 0
  %769 = vmatpush2.bf16.xpose.msra.mxu0 0
  %770 = vmatprep.subr.bf16.mxu0 0
  %771 = vmatpush2.bf16.xpose.msra.mxu0 0
  %772 = vmatprep.subr.bf16.mxu0 0
  %773 = vmatpush2.bf16.xpose.msra.mxu0 0
  %774 = vmatprep.subr.bf16.mxu0 0
  %775 = vmatpush2.bf16.xpose.msra.mxu0 0
  %776 = vmatprep.subr.bf16.mxu0 0
  %777 = vmatpush2.bf16.xpose.msra.mxu0 0
  %778 = vmatprep.mubr.bf16.mxu0 0
  %779 = vmatmul.mubr.bf16.gmra.mxu0 %v741
  %v780 = vpop.f32.mrf.mxu0
  %v781 = vadd.f32 0.0, %v780
  %v782 = vpop.f32.mrf.mxu0
  %v783 = vpop.f32.mrf.mxu0
  %v784 = vadd.f32 0.0, %v783
  %v785 = vpop.f32.mrf.mxu0
  %786 = vdwg.mxu0
  %787 = vrot.lane.b32.xlu0 %v493, 120
  %v788 = vpop.permute.xlu0 %787
  %789 = vrot.lane.b32.xlu0 %v493, 88
  %v790 = vpop.permute.xlu0 %789
  %v792 = vsel %vm497, %v788, 0
  %v795 = vsel %vm497, %v790, 0
  %797 = vmatprep.subr.bf16.mxu0 0
  %798 = vmatpush1.bf16.xpose.msra.mxu0 0
  %799 = vmatprep.subr.bf16.mxu0 0
  %800 = vmatpush1.bf16.xpose.msra.mxu0 0
  %801 = vmatprep.subr.bf16.mxu0 0
  %802 = vmatpush1.bf16.xpose.msra.mxu0 0
  %803 = vmatprep.subr.bf16.mxu0 0
  %804 = vmatpush1.bf16.xpose.msra.mxu0 0
  %805 = vmatprep.subr.bf16.mxu0 0
  %806 = vmatpush1.bf16.xpose.msra.mxu0 0
  %807 = vmatprep.subr.bf16.mxu0 0
  %808 = vmatpush1.bf16.xpose.msra.mxu0 0
  %809 = vmatprep.subr.bf16.mxu0 0
  %810 = vmatpush1.bf16.xpose.msra.mxu0 0
  %811 = vmatprep.subr.bf16.mxu0 0
  %812 = vmatpush1.bf16.xpose.msra.mxu0 %v795
  %813 = vmatprep.subr.bf16.mxu0 0
  %814 = vmatpush2.bf16.xpose.msra.mxu0 0
  %815 = vmatprep.subr.bf16.mxu0 0
  %816 = vmatpush2.bf16.xpose.msra.mxu0 0
  %817 = vmatprep.subr.bf16.mxu0 0
  %818 = vmatpush2.bf16.xpose.msra.mxu0 0
  %819 = vmatprep.subr.bf16.mxu0 0
  %820 = vmatpush2.bf16.xpose.msra.mxu0 0
  %821 = vmatprep.subr.bf16.mxu0 0
  %822 = vmatpush2.bf16.xpose.msra.mxu0 0
  %823 = vmatprep.subr.bf16.mxu0 0
  %824 = vmatpush2.bf16.xpose.msra.mxu0 0
  %825 = vmatprep.subr.bf16.mxu0 0
  %826 = vmatpush2.bf16.xpose.msra.mxu0 0
  %827 = vmatprep.subr.bf16.mxu0 0
  %828 = vmatpush2.bf16.xpose.msra.mxu0 0
  %829 = vmatprep.mubr.bf16.mxu0 0
  %830 = vmatmul.mubr.bf16.gmra.mxu0 %v792
  %v831 = vpop.f32.mrf.mxu0
  %v832 = vadd.f32 0.0, %v831
  %v833 = vpop.f32.mrf.mxu0
  %v834 = vpop.f32.mrf.mxu0
  %v835 = vadd.f32 0.0, %v834
  %v836 = vpop.f32.mrf.mxu0
  %837 = vdwg.mxu0
  %v838 = vsel %vm595, %v781, -inf
  %839 = vmax.xlane.f32.xlu0 %v838
  %v840 = vpop.xlane.xlu0 %839
  %v841 = vsel %vm595, %v784, -inf
  %842 = vmax.xlane.f32.xlu0 %v841
  %v843 = vpop.xlane.xlu0 %842
  %v844 = vsel %vm595, %v832, -inf
  %845 = vmax.xlane.f32.xlu0 %v844
  %v846 = vpop.xlane.xlu0 %845
  %v847 = vsel %vm595, %v835, -inf
  %848 = vmax.xlane.f32.xlu0 %v847
  %v849 = vpop.xlane.xlu0 %848
  %v850 = vsub.f32 %v781, %v840
  %v851 = vsub.f32 %v784, %v843
  %v852 = vsub.f32 %v832, %v846
  %v853 = vsub.f32 %v835, %v849
  %v854 = vmul.f32 %v850, 1.442695
  %v855 = vpow.pop %v854
  %v856 = vmul.f32 %v851, 1.442695
  %v857 = vpow.pop %v856
  %v858 = vmul.f32 %v852, 1.442695
  %v859 = vpow.pop %v858
  %v860 = vmul.f32 %v853, 1.442695
  %v861 = vpow.pop %v860
  %v862 = vsel %vm595, %v855, 0.0
  %863 = vadd.xlane.f32.xlu0 %v862
  %v864 = vpop.xlane.xlu0 %863
  %v865 = vsel %vm595, %v857, 0.0
  %866 = vadd.xlane.f32.xlu0 %v865
  %v867 = vpop.xlane.xlu0 %866
  %v868 = vsel %vm595, %v859, 0.0
  %869 = vadd.xlane.f32.xlu0 %v868
  %v870 = vpop.xlane.xlu0 %869
  %v871 = vsel %vm595, %v861, 0.0
  %872 = vadd.xlane.f32.xlu0 %v871
  %v873 = vpop.xlane.xlu0 %872
  %v874 = vrcp.pop %v864
  %v875 = vrcp.pop %v867
  %v876 = vrcp.pop %v870
  %v877 = vrcp.pop %v873
  %v878 = vmul.f32 %v855, %v874
  %v879 = vmul.f32 %v857, %v875
  %v880 = vmul.f32 %v859, %v876
  %v881 = vmul.f32 %v861, %v877
  %v882 = vpack.c.bf16 %v879, %v878
  %v883 = vpack.c.bf16 %v881, %v880
  %884 = vrot.lane.b32.xlu0 %v492, 56
  %v885 = vpop.permute.xlu0 %884
  %v888 = vsel %vm595, %v882, 0
  %890 = vmatprep.subr.bf16.mxu0 0
  %891 = vmatpush1.bf16.msra.mxu0 0
  %892 = vmatprep.subr.bf16.mxu0 0
  %893 = vmatpush1.bf16.msra.mxu0 0
  %894 = vmatprep.subr.bf16.mxu0 0
  %895 = vmatpush1.bf16.msra.mxu0 0
  %896 = vmatprep.subr.bf16.mxu0 0
  %897 = vmatpush1.bf16.msra.mxu0 0
  %898 = vmatprep.subr.bf16.mxu0 0
  %899 = vmatpush1.bf16.msra.mxu0 0
  %900 = vmatprep.subr.bf16.mxu0 0
  %901 = vmatpush1.bf16.msra.mxu0 0
  %902 = vmatprep.subr.bf16.mxu0 0
  %903 = vmatpush1.bf16.msra.mxu0 0
  %904 = vmatprep.subr.bf16.mxu0 0
  %905 = vmatpush1.bf16.msra.mxu0 %v885
  %906 = vmatprep.subr.bf16.mxu0 0
  %907 = vmatpush2.bf16.msra.mxu0 0
  %908 = vmatprep.subr.bf16.mxu0 0
  %909 = vmatpush2.bf16.msra.mxu0 0
  %910 = vmatprep.subr.bf16.mxu0 0
  %911 = vmatpush2.bf16.msra.mxu0 0
  %912 = vmatprep.subr.bf16.mxu0 0
  %913 = vmatpush2.bf16.msra.mxu0 0
  %914 = vmatprep.subr.bf16.mxu0 0
  %915 = vmatpush2.bf16.msra.mxu0 0
  %916 = vmatprep.subr.bf16.mxu0 0
  %917 = vmatpush2.bf16.msra.mxu0 0
  %918 = vmatprep.subr.bf16.mxu0 0
  %919 = vmatpush2.bf16.msra.mxu0 0
  %920 = vmatprep.subr.bf16.mxu0 0
  %921 = vmatpush2.bf16.msra.mxu0 0
  %922 = vmatprep.mubr.bf16.mxu0 0
  %923 = vmatmul.mubr.bf16.gmra.mxu0 %v888
  %v924 = vpop.f32.mrf.mxu0
  %v925 = vadd.f32 0.0, %v924
  %v926 = vpop.f32.mrf.mxu0
  %v927 = vpop.f32.mrf.mxu0
  %v928 = vadd.f32 0.0, %v927
  %v929 = vpop.f32.mrf.mxu0
  %930 = vdwg.mxu0
  %931 = vrot.lane.b32.xlu0 %v493, 56
  %v932 = vpop.permute.xlu0 %931
  %v935 = vsel %vm595, %v883, 0
  %937 = vmatprep.subr.bf16.mxu0 0
  %938 = vmatpush1.bf16.msra.mxu0 0
  %939 = vmatprep.subr.bf16.mxu0 0
  %940 = vmatpush1.bf16.msra.mxu0 0
  %941 = vmatprep.subr.bf16.mxu0 0
  %942 = vmatpush1.bf16.msra.mxu0 0
  %943 = vmatprep.subr.bf16.mxu0 0
  %944 = vmatpush1.bf16.msra.mxu0 0
  %945 = vmatprep.subr.bf16.mxu0 0
  %946 = vmatpush1.bf16.msra.mxu0 0
  %947 = vmatprep.subr.bf16.mxu0 0
  %948 = vmatpush1.bf16.msra.mxu0 0
  %949 = vmatprep.subr.bf16.mxu0 0
  %950 = vmatpush1.bf16.msra.mxu0 0
  %951 = vmatprep.subr.bf16.mxu0 0
  %952 = vmatpush1.bf16.msra.mxu0 %v932
  %953 = vmatprep.subr.bf16.mxu0 0
  %954 = vmatpush2.bf16.msra.mxu0 0
  %955 = vmatprep.subr.bf16.mxu0 0
  %956 = vmatpush2.bf16.msra.mxu0 0
  %957 = vmatprep.subr.bf16.mxu0 0
  %958 = vmatpush2.bf16.msra.mxu0 0
  %959 = vmatprep.subr.bf16.mxu0 0
  %960 = vmatpush2.bf16.msra.mxu0 0
  %961 = vmatprep.subr.bf16.mxu0 0
  %962 = vmatpush2.bf16.msra.mxu0 0
  %963 = vmatprep.subr.bf16.mxu0 0
  %964 = vmatpush2.bf16.msra.mxu0 0
  %965 = vmatprep.subr.bf16.mxu0 0
  %966 = vmatpush2.bf16.msra.mxu0 0
  %967 = vmatprep.subr.bf16.mxu0 0
  %968 = vmatpush2.bf16.msra.mxu0 0
  %969 = vmatprep.mubr.bf16.mxu0 0
  %970 = vmatmul.mubr.bf16.gmra.mxu0 %v935
  %v971 = vpop.f32.mrf.mxu0
  %v972 = vadd.f32 0.0, %v971
  %v973 = vpop.f32.mrf.mxu0
  %v974 = vpop.f32.mrf.mxu0
  %v975 = vadd.f32 0.0, %v974
  %v976 = vpop.f32.mrf.mxu0
  %977 = vdwg.mxu0
  %978 = vrot.lane.b32.xlu0 %v492, 112
  %v979 = vpop.permute.xlu0 %978
  %980 = vrot.lane.b32.xlu0 %v492, 80
  %v981 = vpop.permute.xlu0 %980
  %v983 = vsel %vm497, %v979, 0
  %v986 = vsel %vm497, %v981, 0
  %988 = vmatprep.subr.bf16.mxu0 0
  %989 = vmatpush1.bf16.xpose.msra.mxu0 0
  %990 = vmatprep.subr.bf16.mxu0 0
  %991 = vmatpush1.bf16.xpose.msra.mxu0 0
  %992 = vmatprep.subr.bf16.mxu0 0
  %993 = vmatpush1.bf16.xpose.msra.mxu0 0
  %994 = vmatprep.subr.bf16.mxu0 0
  %995 = vmatpush1.bf16.xpose.msra.mxu0 0
  %996 = vmatprep.subr.bf16.mxu0 0
  %997 = vmatpush1.bf16.xpose.msra.mxu0 0
  %998 = vmatprep.subr.bf16.mxu0 0
  %999 = vmatpush1.bf16.xpose.msra.mxu0 0
  %1000 = vmatprep.subr.bf16.mxu0 0
  %1001 = vmatpush1.bf16.xpose.msra.mxu0 0
  %1002 = vmatprep.subr.bf16.mxu0 0
  %1003 = vmatpush1.bf16.xpose.msra.mxu0 %v986
  %1004 = vmatprep.subr.bf16.mxu0 0
  %1005 = vmatpush2.bf16.xpose.msra.mxu0 0
  %1006 = vmatprep.subr.bf16.mxu0 0
  %1007 = vmatpush2.bf16.xpose.msra.mxu0 0
  %1008 = vmatprep.subr.bf16.mxu0 0
  %1009 = vmatpush2.bf16.xpose.msra.mxu0 0
  %1010 = vmatprep.subr.bf16.mxu0 0
  %1011 = vmatpush2.bf16.xpose.msra.mxu0 0
  %1012 = vmatprep.subr.bf16.mxu0 0
  %1013 = vmatpush2.bf16.xpose.msra.mxu0 0
  %1014 = vmatprep.subr.bf16.mxu0 0
  %1015 = vmatpush2.bf16.xpose.msra.mxu0 0
  %1016 = vmatprep.subr.bf16.mxu0 0
  %1017 = vmatpush2.bf16.xpose.msra.mxu0 0
  %1018 = vmatprep.subr.bf16.mxu0 0
  %1019 = vmatpush2.bf16.xpose.msra.mxu0 0
  %1020 = vmatprep.mubr.bf16.mxu0 0
  %1021 = vmatmul.mubr.bf16.gmra.mxu0 %v983
  %v1022 = vpop.f32.mrf.mxu0
  %v1023 = vadd.f32 0.0, %v1022
  %v1024 = vpop.f32.mrf.mxu0
  %v1025 = vpop.f32.mrf.mxu0
  %v1026 = vadd.f32 0.0, %v1025
  %v1027 = vpop.f32.mrf.mxu0
  %1028 = vdwg.mxu0
  %1029 = vrot.lane.b32.xlu0 %v493, 112
  %v1030 = vpop.permute.xlu0 %1029
  %1031 = vrot.lane.b32.xlu0 %v493, 80
  %v1032 = vpop.permute.xlu0 %1031
  %v1034 = vsel %vm497, %v1030, 0
  %v1037 = vsel %vm497, %v1032, 0
  %1039 = vmatprep.subr.bf16.mxu0 0
  %1040 = vmatpush1.bf16.xpose.msra.mxu0 0
  %1041 = vmatprep.subr.bf16.mxu0 0
  %1042 = vmatpush1.bf16.xpose.msra.mxu0 0
  %1043 = vmatprep.subr.bf16.mxu0 0
  %1044 = vmatpush1.bf16.xpose.msra.mxu0 0
  %1045 = vmatprep.subr.bf16.mxu0 0
  %1046 = vmatpush1.bf16.xpose.msra.mxu0 0
  %1047 = vmatprep.subr.bf16.mxu0 0
  %1048 = vmatpush1.bf16.xpose.msra.mxu0 0
  %1049 = vmatprep.subr.bf16.mxu0 0
  %1050 = vmatpush1.bf16.xpose.msra.mxu0 0
  %1051 = vmatprep.subr.bf16.mxu0 0
  %1052 = vmatpush1.bf16.xpose.msra.mxu0 0
  %1053 = vmatprep.subr.bf16.mxu0 0
  %1054 = vmatpush1.bf16.xpose.msra.mxu0 %v1037
  %1055 = vmatprep.subr.bf16.mxu0 0
  %1056 = vmatpush2.bf16.xpose.msra.mxu0 0
  %1057 = vmatprep.subr.bf16.mxu0 0
  %1058 = vmatpush2.bf16.xpose.msra.mxu0 0
  %1059 = vmatprep.subr.bf16.mxu0 0
  %1060 = vmatpush2.bf16.xpose.msra.mxu0 0
  %1061 = vmatprep.subr.bf16.mxu0 0
  %1062 = vmatpush2.bf16.xpose.msra.mxu0 0
  %1063 = vmatprep.subr.bf16.mxu0 0
  %1064 = vmatpush2.bf16.xpose.msra.mxu0 0
  %1065 = vmatprep.subr.bf16.mxu0 0
  %1066 = vmatpush2.bf16.xpose.msra.mxu0 0
  %1067 = vmatprep.subr.bf16.mxu0 0
  %1068 = vmatpush2.bf16.xpose.msra.mxu0 0
  %1069 = vmatprep.subr.bf16.mxu0 0
  %1070 = vmatpush2.bf16.xpose.msra.mxu0 0
  %1071 = vmatprep.mubr.bf16.mxu0 0
  %1072 = vmatmul.mubr.bf16.gmra.mxu0 %v1034
  %v1073 = vpop.f32.mrf.mxu0
  %v1074 = vadd.f32 0.0, %v1073
  %v1075 = vpop.f32.mrf.mxu0
  %v1076 = vpop.f32.mrf.mxu0
  %v1077 = vadd.f32 0.0, %v1076
  %v1078 = vpop.f32.mrf.mxu0
  %1079 = vdwg.mxu0
  %v1080 = vsel %vm595, %v1023, -inf
  %1081 = vmax.xlane.f32.xlu0 %v1080
  %v1082 = vpop.xlane.xlu0 %1081
  %v1083 = vsel %vm595, %v1026, -inf
  %1084 = vmax.xlane.f32.xlu0 %v1083
  %v1085 = vpop.xlane.xlu0 %1084
  %v1086 = vsel %vm595, %v1074, -inf
  %1087 = vmax.xlane.f32.xlu0 %v1086
  %v1088 = vpop.xlane.xlu0 %1087
  %v1089 = vsel %vm595, %v1077, -inf
  %1090 = vmax.xlane.f32.xlu0 %v1089
  %v1091 = vpop.xlane.xlu0 %1090
  %v1092 = vsub.f32 %v1023, %v1082
  %v1093 = vsub.f32 %v1026, %v1085
  %v1094 = vsub.f32 %v1074, %v1088
  %v1095 = vsub.f32 %v1077, %v1091
  %v1096 = vmul.f32 %v1092, 1.442695
  %v1097 = vpow.pop %v1096
  %v1098 = vmul.f32 %v1093, 1.442695
  %v1099 = vpow.pop %v1098
  %v1100 = vmul.f32 %v1094, 1.442695
  %v1101 = vpow.pop %v1100
  %v1102 = vmul.f32 %v1095, 1.442695
  %v1103 = vpow.pop %v1102
  %v1104 = vsel %vm595, %v1097, 0.0
  %1105 = vadd.xlane.f32.xlu0 %v1104
  %v1106 = vpop.xlane.xlu0 %1105
  %v1107 = vsel %vm595, %v1099, 0.0
  %1108 = vadd.xlane.f32.xlu0 %v1107
  %v1109 = vpop.xlane.xlu0 %1108
  %v1110 = vsel %vm595, %v1101, 0.0
  %1111 = vadd.xlane.f32.xlu0 %v1110
  %v1112 = vpop.xlane.xlu0 %1111
  %v1113 = vsel %vm595, %v1103, 0.0
  %1114 = vadd.xlane.f32.xlu0 %v1113
  %v1115 = vpop.xlane.xlu0 %1114
  %v1116 = vrcp.pop %v1106
  %v1117 = vrcp.pop %v1109
  %v1118 = vrcp.pop %v1112
  %v1119 = vrcp.pop %v1115
  %v1120 = vmul.f32 %v1097, %v1116
  %v1121 = vmul.f32 %v1099, %v1117
  %v1122 = vmul.f32 %v1101, %v1118
  %v1123 = vmul.f32 %v1103, %v1119
  %v1124 = vpack.c.bf16 %v1121, %v1120
  %v1125 = vpack.c.bf16 %v1123, %v1122
  %1126 = vrot.lane.b32.xlu0 %v492, 48
  %v1127 = vpop.permute.xlu0 %1126
  %v1130 = vsel %vm595, %v1124, 0
  %1132 = vmatprep.subr.bf16.mxu0 0
  %1133 = vmatpush1.bf16.msra.mxu0 0
  %1134 = vmatprep.subr.bf16.mxu0 0
  %1135 = vmatpush1.bf16.msra.mxu0 0
  %1136 = vmatprep.subr.bf16.mxu0 0
  %1137 = vmatpush1.bf16.msra.mxu0 0
  %1138 = vmatprep.subr.bf16.mxu0 0
  %1139 = vmatpush1.bf16.msra.mxu0 0
  %1140 = vmatprep.subr.bf16.mxu0 0
  %1141 = vmatpush1.bf16.msra.mxu0 0
  %1142 = vmatprep.subr.bf16.mxu0 0
  %1143 = vmatpush1.bf16.msra.mxu0 0
  %1144 = vmatprep.subr.bf16.mxu0 0
  %1145 = vmatpush1.bf16.msra.mxu0 0
  %1146 = vmatprep.subr.bf16.mxu0 0
  %1147 = vmatpush1.bf16.msra.mxu0 %v1127
  %1148 = vmatprep.subr.bf16.mxu0 0
  %1149 = vmatpush2.bf16.msra.mxu0 0
  %1150 = vmatprep.subr.bf16.mxu0 0
  %1151 = vmatpush2.bf16.msra.mxu0 0
  %1152 = vmatprep.subr.bf16.mxu0 0
  %1153 = vmatpush2.bf16.msra.mxu0 0
  %1154 = vmatprep.subr.bf16.mxu0 0
  %1155 = vmatpush2.bf16.msra.mxu0 0
  %1156 = vmatprep.subr.bf16.mxu0 0
  %1157 = vmatpush2.bf16.msra.mxu0 0
  %1158 = vmatprep.subr.bf16.mxu0 0
  %1159 = vmatpush2.bf16.msra.mxu0 0
  %1160 = vmatprep.subr.bf16.mxu0 0
  %1161 = vmatpush2.bf16.msra.mxu0 0
  %1162 = vmatprep.subr.bf16.mxu0 0
  %1163 = vmatpush2.bf16.msra.mxu0 0
  %1164 = vmatprep.mubr.bf16.mxu0 0
  %1165 = vmatmul.mubr.bf16.gmra.mxu0 %v1130
  %v1166 = vpop.f32.mrf.mxu0
  %v1167 = vadd.f32 0.0, %v1166
  %v1168 = vpop.f32.mrf.mxu0
  %v1169 = vpop.f32.mrf.mxu0
  %v1170 = vadd.f32 0.0, %v1169
  %v1171 = vpop.f32.mrf.mxu0
  %1172 = vdwg.mxu0
  %1173 = vrot.lane.b32.xlu0 %v493, 48
  %v1174 = vpop.permute.xlu0 %1173
  %v1177 = vsel %vm595, %v1125, 0
  %1179 = vmatprep.subr.bf16.mxu0 0
  %1180 = vmatpush1.bf16.msra.mxu0 0
  %1181 = vmatprep.subr.bf16.mxu0 0
  %1182 = vmatpush1.bf16.msra.mxu0 0
  %1183 = vmatprep.subr.bf16.mxu0 0
  %1184 = vmatpush1.bf16.msra.mxu0 0
  %1185 = vmatprep.subr.bf16.mxu0 0
  %1186 = vmatpush1.bf16.msra.mxu0 0
  %1187 = vmatprep.subr.bf16.mxu0 0
  %1188 = vmatpush1.bf16.msra.mxu0 0
  %1189 = vmatprep.subr.bf16.mxu0 0
  %1190 = vmatpush1.bf16.msra.mxu0 0
  %1191 = vmatprep.subr.bf16.mxu0 0
  %1192 = vmatpush1.bf16.msra.mxu0 0
  %1193 = vmatprep.subr.bf16.mxu0 0
  %1194 = vmatpush1.bf16.msra.mxu0 %v1174
  %1195 = vmatprep.subr.bf16.mxu0 0
  %1196 = vmatpush2.bf16.msra.mxu0 0
  %1197 = vmatprep.subr.bf16.mxu0 0
  %1198 = vmatpush2.bf16.msra.mxu0 0
  %1199 = vmatprep.subr.bf16.mxu0 0
  %1200 = vmatpush2.bf16.msra.mxu0 0
  %1201 = vmatprep.subr.bf16.mxu0 0
  %1202 = vmatpush2.bf16.msra.mxu0 0
  %1203 = vmatprep.subr.bf16.mxu0 0
  %1204 = vmatpush2.bf16.msra.mxu0 0
  %1205 = vmatprep.subr.bf16.mxu0 0
  %1206 = vmatpush2.bf16.msra.mxu0 0
  %1207 = vmatprep.subr.bf16.mxu0 0
  %1208 = vmatpush2.bf16.msra.mxu0 0
  %1209 = vmatprep.subr.bf16.mxu0 0
  %1210 = vmatpush2.bf16.msra.mxu0 0
  %1211 = vmatprep.mubr.bf16.mxu0 0
  %1212 = vmatmul.mubr.bf16.gmra.mxu0 %v1177
  %v1213 = vpop.f32.mrf.mxu0
  %v1214 = vadd.f32 0.0, %v1213
  %v1215 = vpop.f32.mrf.mxu0
  %v1216 = vpop.f32.mrf.mxu0
  %v1217 = vadd.f32 0.0, %v1216
  %v1218 = vpop.f32.mrf.mxu0
  %1219 = vdwg.mxu0
  %1220 = vrot.lane.b32.xlu0 %v492, 104
  %v1221 = vpop.permute.xlu0 %1220
  %1222 = vrot.lane.b32.xlu0 %v492, 72
  %v1223 = vpop.permute.xlu0 %1222
  %v1225 = vsel %vm497, %v1221, 0
  %v1228 = vsel %vm497, %v1223, 0
  %1230 = vmatprep.subr.bf16.mxu0 0
  %1231 = vmatpush1.bf16.xpose.msra.mxu0 0
  %1232 = vmatprep.subr.bf16.mxu0 0
  %1233 = vmatpush1.bf16.xpose.msra.mxu0 0
  %1234 = vmatprep.subr.bf16.mxu0 0
  %1235 = vmatpush1.bf16.xpose.msra.mxu0 0
  %1236 = vmatprep.subr.bf16.mxu0 0
  %1237 = vmatpush1.bf16.xpose.msra.mxu0 0
  %1238 = vmatprep.subr.bf16.mxu0 0
  %1239 = vmatpush1.bf16.xpose.msra.mxu0 0
  %1240 = vmatprep.subr.bf16.mxu0 0
  %1241 = vmatpush1.bf16.xpose.msra.mxu0 0
  %1242 = vmatprep.subr.bf16.mxu0 0
  %1243 = vmatpush1.bf16.xpose.msra.mxu0 0
  %1244 = vmatprep.subr.bf16.mxu0 0
  %1245 = vmatpush1.bf16.xpose.msra.mxu0 %v1228
  %1246 = vmatprep.subr.bf16.mxu0 0
  %1247 = vmatpush2.bf16.xpose.msra.mxu0 0
  %1248 = vmatprep.subr.bf16.mxu0 0
  %1249 = vmatpush2.bf16.xpose.msra.mxu0 0
  %1250 = vmatprep.subr.bf16.mxu0 0
  %1251 = vmatpush2.bf16.xpose.msra.mxu0 0
  %1252 = vmatprep.subr.bf16.mxu0 0
  %1253 = vmatpush2.bf16.xpose.msra.mxu0 0
  %1254 = vmatprep.subr.bf16.mxu0 0
  %1255 = vmatpush2.bf16.xpose.msra.mxu0 0
  %1256 = vmatprep.subr.bf16.mxu0 0
  %1257 = vmatpush2.bf16.xpose.msra.mxu0 0
  %1258 = vmatprep.subr.bf16.mxu0 0
  %1259 = vmatpush2.bf16.xpose.msra.mxu0 0
  %1260 = vmatprep.subr.bf16.mxu0 0
  %1261 = vmatpush2.bf16.xpose.msra.mxu0 0
  %1262 = vmatprep.mubr.bf16.mxu0 0
  %1263 = vmatmul.mubr.bf16.gmra.mxu0 %v1225
  %v1264 = vpop.f32.mrf.mxu0
  %v1265 = vadd.f32 0.0, %v1264
  %v1266 = vpop.f32.mrf.mxu0
  %v1267 = vpop.f32.mrf.mxu0
  %v1268 = vadd.f32 0.0, %v1267
  %v1269 = vpop.f32.mrf.mxu0
  %1270 = vdwg.mxu0
  %1271 = vrot.lane.b32.xlu0 %v493, 104
  %v1272 = vpop.permute.xlu0 %1271
  %1273 = vrot.lane.b32.xlu0 %v493, 72
  %v1274 = vpop.permute.xlu0 %1273
  %v1276 = vsel %vm497, %v1272, 0
  %v1279 = vsel %vm497, %v1274, 0
  %1281 = vmatprep.subr.bf16.mxu0 0
  %1282 = vmatpush1.bf16.xpose.msra.mxu0 0
  %1283 = vmatprep.subr.bf16.mxu0 0
  %1284 = vmatpush1.bf16.xpose.msra.mxu0 0
  %1285 = vmatprep.subr.bf16.mxu0 0
  %1286 = vmatpush1.bf16.xpose.msra.mxu0 0
  %1287 = vmatprep.subr.bf16.mxu0 0
  %1288 = vmatpush1.bf16.xpose.msra.mxu0 0
  %1289 = vmatprep.subr.bf16.mxu0 0
  %1290 = vmatpush1.bf16.xpose.msra.mxu0 0
  %1291 = vmatprep.subr.bf16.mxu0 0
  %1292 = vmatpush1.bf16.xpose.msra.mxu0 0
  %1293 = vmatprep.subr.bf16.mxu0 0
  %1294 = vmatpush1.bf16.xpose.msra.mxu0 0
  %1295 = vmatprep.subr.bf16.mxu0 0
  %1296 = vmatpush1.bf16.xpose.msra.mxu0 %v1279
  %1297 = vmatprep.subr.bf16.mxu0 0
  %1298 = vmatpush2.bf16.xpose.msra.mxu0 0
  %1299 = vmatprep.subr.bf16.mxu0 0
  %1300 = vmatpush2.bf16.xpose.msra.mxu0 0
  %1301 = vmatprep.subr.bf16.mxu0 0
  %1302 = vmatpush2.bf16.xpose.msra.mxu0 0
  %1303 = vmatprep.subr.bf16.mxu0 0
  %1304 = vmatpush2.bf16.xpose.msra.mxu0 0
  %1305 = vmatprep.subr.bf16.mxu0 0
  %1306 = vmatpush2.bf16.xpose.msra.mxu0 0
  %1307 = vmatprep.subr.bf16.mxu0 0
  %1308 = vmatpush2.bf16.xpose.msra.mxu0 0
  %1309 = vmatprep.subr.bf16.mxu0 0
  %1310 = vmatpush2.bf16.xpose.msra.mxu0 0
  %1311 = vmatprep.subr.bf16.mxu0 0
  %1312 = vmatpush2.bf16.xpose.msra.mxu0 0
  %1313 = vmatprep.mubr.bf16.mxu0 0
  %1314 = vmatmul.mubr.bf16.gmra.mxu0 %v1276
  %v1315 = vpop.f32.mrf.mxu0
  %v1316 = vadd.f32 0.0, %v1315
  %v1317 = vpop.f32.mrf.mxu0
  %v1318 = vpop.f32.mrf.mxu0
  %v1319 = vadd.f32 0.0, %v1318
  %v1320 = vpop.f32.mrf.mxu0
  %1321 = vdwg.mxu0
  %v1322 = vsel %vm595, %v1265, -inf
  %1323 = vmax.xlane.f32.xlu0 %v1322
  %v1324 = vpop.xlane.xlu0 %1323
  %v1325 = vsel %vm595, %v1268, -inf
  %1326 = vmax.xlane.f32.xlu0 %v1325
  %v1327 = vpop.xlane.xlu0 %1326
  %v1328 = vsel %vm595, %v1316, -inf
  %1329 = vmax.xlane.f32.xlu0 %v1328
  %v1330 = vpop.xlane.xlu0 %1329
  %v1331 = vsel %vm595, %v1319, -inf
  %1332 = vmax.xlane.f32.xlu0 %v1331
  %v1333 = vpop.xlane.xlu0 %1332
  %v1334 = vsub.f32 %v1265, %v1324
  %v1335 = vsub.f32 %v1268, %v1327
  %v1336 = vsub.f32 %v1316, %v1330
  %v1337 = vsub.f32 %v1319, %v1333
  %v1338 = vmul.f32 %v1334, 1.442695
  %v1339 = vpow.pop %v1338
  %v1340 = vmul.f32 %v1335, 1.442695
  %v1341 = vpow.pop %v1340
  %v1342 = vmul.f32 %v1336, 1.442695
  %v1343 = vpow.pop %v1342
  %v1344 = vmul.f32 %v1337, 1.442695
  %v1345 = vpow.pop %v1344
  %v1346 = vsel %vm595, %v1339, 0.0
  %1347 = vadd.xlane.f32.xlu0 %v1346
  %v1348 = vpop.xlane.xlu0 %1347
  %v1349 = vsel %vm595, %v1341, 0.0
  %1350 = vadd.xlane.f32.xlu0 %v1349
  %v1351 = vpop.xlane.xlu0 %1350
  %v1352 = vsel %vm595, %v1343, 0.0
  %1353 = vadd.xlane.f32.xlu0 %v1352
  %v1354 = vpop.xlane.xlu0 %1353
  %v1355 = vsel %vm595, %v1345, 0.0
  %1356 = vadd.xlane.f32.xlu0 %v1355
  %v1357 = vpop.xlane.xlu0 %1356
  %v1358 = vrcp.pop %v1348
  %v1359 = vrcp.pop %v1351
  %v1360 = vrcp.pop %v1354
  %v1361 = vrcp.pop %v1357
  %v1362 = vmul.f32 %v1339, %v1358
  %v1363 = vmul.f32 %v1341, %v1359
  %v1364 = vmul.f32 %v1343, %v1360
  %v1365 = vmul.f32 %v1345, %v1361
  %v1366 = vpack.c.bf16 %v1363, %v1362
  %v1367 = vpack.c.bf16 %v1365, %v1364
  %1368 = vrot.lane.b32.xlu0 %v492, 40
  %v1369 = vpop.permute.xlu0 %1368
  %v1372 = vsel %vm595, %v1366, 0
  %1374 = vmatprep.subr.bf16.mxu0 0
  %1375 = vmatpush1.bf16.msra.mxu0 0
  %1376 = vmatprep.subr.bf16.mxu0 0
  %1377 = vmatpush1.bf16.msra.mxu0 0
  %1378 = vmatprep.subr.bf16.mxu0 0
  %1379 = vmatpush1.bf16.msra.mxu0 0
  %1380 = vmatprep.subr.bf16.mxu0 0
  %1381 = vmatpush1.bf16.msra.mxu0 0
  %1382 = vmatprep.subr.bf16.mxu0 0
  %1383 = vmatpush1.bf16.msra.mxu0 0
  %1384 = vmatprep.subr.bf16.mxu0 0
  %1385 = vmatpush1.bf16.msra.mxu0 0
  %1386 = vmatprep.subr.bf16.mxu0 0
  %1387 = vmatpush1.bf16.msra.mxu0 0
  %1388 = vmatprep.subr.bf16.mxu0 0
  %1389 = vmatpush1.bf16.msra.mxu0 %v1369
  %1390 = vmatprep.subr.bf16.mxu0 0
  %1391 = vmatpush2.bf16.msra.mxu0 0
  %1392 = vmatprep.subr.bf16.mxu0 0
  %1393 = vmatpush2.bf16.msra.mxu0 0
  %1394 = vmatprep.subr.bf16.mxu0 0
  %1395 = vmatpush2.bf16.msra.mxu0 0
  %1396 = vmatprep.subr.bf16.mxu0 0
  %1397 = vmatpush2.bf16.msra.mxu0 0
  %1398 = vmatprep.subr.bf16.mxu0 0
  %1399 = vmatpush2.bf16.msra.mxu0 0
  %1400 = vmatprep.subr.bf16.mxu0 0
  %1401 = vmatpush2.bf16.msra.mxu0 0
  %1402 = vmatprep.subr.bf16.mxu0 0
  %1403 = vmatpush2.bf16.msra.mxu0 0
  %1404 = vmatprep.subr.bf16.mxu0 0
  %1405 = vmatpush2.bf16.msra.mxu0 0
  %1406 = vmatprep.mubr.bf16.mxu0 0
  %1407 = vmatmul.mubr.bf16.gmra.mxu0 %v1372
  %v1408 = vpop.f32.mrf.mxu0
  %v1409 = vadd.f32 0.0, %v1408
  %v1410 = vpop.f32.mrf.mxu0
  %v1411 = vpop.f32.mrf.mxu0
  %v1412 = vadd.f32 0.0, %v1411
  %v1413 = vpop.f32.mrf.mxu0
  %1414 = vdwg.mxu0
  %1415 = vrot.lane.b32.xlu0 %v493, 40
  %v1416 = vpop.permute.xlu0 %1415
  %v1419 = vsel %vm595, %v1367, 0
  %1421 = vmatprep.subr.bf16.mxu0 0
  %1422 = vmatpush1.bf16.msra.mxu0 0
  %1423 = vmatprep.subr.bf16.mxu0 0
  %1424 = vmatpush1.bf16.msra.mxu0 0
  %1425 = vmatprep.subr.bf16.mxu0 0
  %1426 = vmatpush1.bf16.msra.mxu0 0
  %1427 = vmatprep.subr.bf16.mxu0 0
  %1428 = vmatpush1.bf16.msra.mxu0 0
  %1429 = vmatprep.subr.bf16.mxu0 0
  %1430 = vmatpush1.bf16.msra.mxu0 0
  %1431 = vmatprep.subr.bf16.mxu0 0
  %1432 = vmatpush1.bf16.msra.mxu0 0
  %1433 = vmatprep.subr.bf16.mxu0 0
  %1434 = vmatpush1.bf16.msra.mxu0 0
  %1435 = vmatprep.subr.bf16.mxu0 0
  %1436 = vmatpush1.bf16.msra.mxu0 %v1416
  %1437 = vmatprep.subr.bf16.mxu0 0
  %1438 = vmatpush2.bf16.msra.mxu0 0
  %1439 = vmatprep.subr.bf16.mxu0 0
  %1440 = vmatpush2.bf16.msra.mxu0 0
  %1441 = vmatprep.subr.bf16.mxu0 0
  %1442 = vmatpush2.bf16.msra.mxu0 0
  %1443 = vmatprep.subr.bf16.mxu0 0
  %1444 = vmatpush2.bf16.msra.mxu0 0
  %1445 = vmatprep.subr.bf16.mxu0 0
  %1446 = vmatpush2.bf16.msra.mxu0 0
  %1447 = vmatprep.subr.bf16.mxu0 0
  %1448 = vmatpush2.bf16.msra.mxu0 0
  %1449 = vmatprep.subr.bf16.mxu0 0
  %1450 = vmatpush2.bf16.msra.mxu0 0
  %1451 = vmatprep.subr.bf16.mxu0 0
  %1452 = vmatpush2.bf16.msra.mxu0 0
  %1453 = vmatprep.mubr.bf16.mxu0 0
  %1454 = vmatmul.mubr.bf16.gmra.mxu0 %v1419
  %v1455 = vpop.f32.mrf.mxu0
  %v1456 = vadd.f32 0.0, %v1455
  %v1457 = vpop.f32.mrf.mxu0
  %v1458 = vpop.f32.mrf.mxu0
  %v1459 = vadd.f32 0.0, %v1458
  %v1460 = vpop.f32.mrf.mxu0
  %1461 = vdwg.mxu0
  %1466 = vrot.lane.b32.xlu0 %v925, 8
  %v1467 = vpop.permute.xlu0 %1466
  %1468 = vrot.lane.b32.xlu0 %v928, 8
  %v1469 = vpop.permute.xlu0 %1468
  %1470 = vrot.lane.b32.xlu0 %v972, 8
  %v1471 = vpop.permute.xlu0 %1470
  %1472 = vrot.lane.b32.xlu0 %v975, 8
  %v1473 = vpop.permute.xlu0 %1472
  %1482 = vrot.lane.b32.xlu0 %v1167, 16
  %v1483 = vpop.permute.xlu0 %1482
  %1484 = vrot.lane.b32.xlu0 %v1170, 16
  %v1485 = vpop.permute.xlu0 %1484
  %1486 = vrot.lane.b32.xlu0 %v1214, 16
  %v1487 = vpop.permute.xlu0 %1486
  %1488 = vrot.lane.b32.xlu0 %v1217, 16
  %v1489 = vpop.permute.xlu0 %1488
  %1498 = vrot.lane.b32.xlu0 %v1409, 24
  %v1499 = vpop.permute.xlu0 %1498
  %1500 = vrot.lane.b32.xlu0 %v1412, 24
  %v1501 = vpop.permute.xlu0 %1500
  %1502 = vrot.lane.b32.xlu0 %v1456, 24
  %v1503 = vpop.permute.xlu0 %1502
  %1504 = vrot.lane.b32.xlu0 %v1459, 24
  %v1505 = vpop.permute.xlu0 %1504
  %v1510 = vsel %vm497, %v683, %v1467
  %v1511 = vsel %vm497, %v686, %v1469
  %v1512 = vsel %vm497, %v730, %v1471
  %v1513 = vsel %vm497, %v733, %v1473
  %v1514 = vsel %vm595, %v1510, %v1483
  %v1515 = vsel %vm595, %v1511, %v1485
  %v1516 = vsel %vm595, %v1512, %v1487
  %v1517 = vsel %vm595, %v1513, %v1489
  %vm1518 = vcmask 195584
  %v1519 = vsel %vm1518, %v1514, %v1499
  %v1520 = vsel %vm1518, %v1515, %v1501
  %v1521 = vsel %vm1518, %v1516, %v1503
  %v1522 = vsel %vm1518, %v1517, %v1505
  %v1523 = vpack.c.bf16 %v1520, %v1519
  %v1524 = vpack.c.bf16 %v1522, %v1521
  %v1525 = vld [vmem:[%s2 + $0x29] sm:$0x1]
  %v1526 = vlaneseq
  %v1527 = vshrl.u32 %v1526, 7
  %v1528 = vsub.s32 0, %v1527
  %v1529 = vrot.slane %v1525, %v1528
  %v1534 = vunpack.c.l.b16 %v402
  %v1535 = vunpack.c.l.b16 %v403
  %v1536 = vunpack.c.l.b16 %v404
  %v1537 = vunpack.c.l.b16 %v405
  %v1538 = vpack.c.b16 %v1535, %v1534
  %v1539 = vpack.c.b16 %v1537, %v1536
  %v1543 = vsel %vm328, %v1523, 0
  %v1546 = vsel %vm328, %v1524, 0
  %1548 = vmatprep.subr.bf16.mxu0 0
  %1549 = vmatpush1.bf16.msra.mxu0 0
  %1550 = vmatprep.subr.bf16.mxu0 0
  %1551 = vmatpush1.bf16.msra.mxu0 0
  %1552 = vmatprep.subr.bf16.mxu0 0
  %1553 = vmatpush1.bf16.msra.mxu0 0
  %1554 = vmatprep.subr.bf16.mxu0 0
  %1555 = vmatpush1.bf16.msra.mxu0 0
  %1556 = vmatprep.subr.bf16.mxu0 0
  %1557 = vmatpush1.bf16.msra.mxu0 0
  %1558 = vmatprep.subr.bf16.mxu0 0
  %1559 = vmatpush1.bf16.msra.mxu0 0
  %1560 = vmatprep.subr.bf16.mxu0 0
  %1561 = vmatpush1.bf16.msra.mxu0 %v1539
  %1562 = vmatprep.subr.bf16.mxu0 0
  %1563 = vmatpush1.bf16.msra.mxu0 %v1538
  %1564 = vmatprep.subr.bf16.mxu0 0
  %1565 = vmatpush2.bf16.msra.mxu0 0
  %1566 = vmatprep.subr.bf16.mxu0 0
  %1567 = vmatpush2.bf16.msra.mxu0 0
  %1568 = vmatprep.subr.bf16.mxu0 0
  %1569 = vmatpush2.bf16.msra.mxu0 0
  %1570 = vmatprep.subr.bf16.mxu0 0
  %1571 = vmatpush2.bf16.msra.mxu0 0
  %1572 = vmatprep.subr.bf16.mxu0 0
  %1573 = vmatpush2.bf16.msra.mxu0 0
  %1574 = vmatprep.subr.bf16.mxu0 0
  %1575 = vmatpush2.bf16.msra.mxu0 0
  %1576 = vmatprep.subr.bf16.mxu0 0
  %1577 = vmatpush2.bf16.msra.mxu0 0
  %1578 = vmatprep.subr.bf16.mxu0 0
  %1579 = vmatpush2.bf16.msra.mxu0 0
  %1580 = vmatprep.mubr.bf16.mxu0 0
  %1581 = vmatmul.mubr.bf16.gmra.mxu0 %v1543
  %v1582 = vpop.f32.mrf.mxu0
  %v1583 = vadd.f32 %v1529, %v1582
  %v1584 = vpop.f32.mrf.mxu0
  %v1585 = vpop.f32.mrf.mxu0
  %v1586 = vadd.f32 %v1529, %v1585
  %v1587 = vpop.f32.mrf.mxu0
  %1588 = vmatprep.mubr.bf16.mxu0 0
  %1589 = vmatmul.mubr.bf16.gmra.mxu0 %v1546
  %v1590 = vpop.f32.mrf.mxu0
  %v1591 = vadd.f32 %v1529, %v1590
  %v1592 = vpop.f32.mrf.mxu0
  %v1593 = vpop.f32.mrf.mxu0
  %v1594 = vadd.f32 %v1529, %v1593
  %v1595 = vpop.f32.mrf.mxu0
  %1596 = vdwg.mxu0
  %v1597 = vadd.f32 %v1583, %v394
  %v1598 = vadd.f32 %v1586, %v395
  %v1599 = vadd.f32 %v1591, %v396
  %v1600 = vadd.f32 %v1594, %v397
  %v1601 = vld [vmem:[%s2 + $0x2a] sm:$0x1]
  %v1602 = vld [vmem:[%s2 + $0x2b] sm:$0x1]
  %v1603 = vsel %vm328, %v1597, 0.0
  %1604 = vadd.xlane.f32.xlu0 %v1603
  %v1605 = vpop.xlane.xlu0 %1604
  %v1606 = vsel %vm328, %v1598, 0.0
  %1607 = vadd.xlane.f32.xlu0 %v1606
  %v1608 = vpop.xlane.xlu0 %1607
  %v1609 = vsel %vm328, %v1599, 0.0
  %1610 = vadd.xlane.f32.xlu0 %v1609
  %v1611 = vpop.xlane.xlu0 %1610
  %v1612 = vsel %vm328, %v1600, 0.0
  %1613 = vadd.xlane.f32.xlu0 %v1612
  %v1614 = vpop.xlane.xlu0 %1613
  %v1615 = vmul.f32 %v1605, %v341
  %v1616 = vmul.f32 %v1608, %v341
  %v1617 = vmul.f32 %v1611, %v341
  %v1618 = vmul.f32 %v1614, %v341
  %v1619 = vsub.f32 %v1597, %v1615
  %v1620 = vsub.f32 %v1598, %v1616
  %v1621 = vsub.f32 %v1599, %v1617
  %v1622 = vsub.f32 %v1600, %v1618
  %v1623 = vmul.f32 %v1619, %v1619
  %v1624 = vmul.f32 %v1620, %v1620
  %v1625 = vmul.f32 %v1621, %v1621
  %v1626 = vmul.f32 %v1622, %v1622
  %v1627 = vsel %vm328, %v1623, 0.0
  %1628 = vadd.xlane.f32.xlu0 %v1627
  %v1629 = vpop.xlane.xlu0 %1628
  %v1630 = vsel %vm328, %v1624, 0.0
  %1631 = vadd.xlane.f32.xlu0 %v1630
  %v1632 = vpop.xlane.xlu0 %1631
  %v1633 = vsel %vm328, %v1625, 0.0
  %1634 = vadd.xlane.f32.xlu0 %v1633
  %v1635 = vpop.xlane.xlu0 %1634
  %v1636 = vsel %vm328, %v1626, 0.0
  %1637 = vadd.xlane.f32.xlu0 %v1636
  %v1638 = vpop.xlane.xlu0 %1637
  %v1639 = vmul.f32 %v1629, %v341
  %v1640 = vmul.f32 %v1632, %v341
  %v1641 = vmul.f32 %v1635, %v341
  %v1642 = vmul.f32 %v1638, %v341
  %v1643 = vadd.f32 %v1639, 1e-12
  %v1644 = vadd.f32 %v1640, 1e-12
  %v1645 = vadd.f32 %v1641, 1e-12
  %v1646 = vadd.f32 %v1642, 1e-12
  %v1647 = vrsqrt.pop %v1643
  %v1648 = vrsqrt.pop %v1644
  %v1649 = vrsqrt.pop %v1645
  %v1650 = vrsqrt.pop %v1646
  %v1651 = vmul.f32 %v1619, %v1647
  %v1652 = vmul.f32 %v1620, %v1648
  %v1653 = vmul.f32 %v1621, %v1649
  %v1654 = vmul.f32 %v1622, %v1650
  %v1655 = vlaneseq
  %v1656 = vshrl.u32 %v1655, 7
  %v1657 = vsub.s32 0, %v1656
  %v1658 = vrot.slane %v1601, %v1657
  %v1659 = vmul.f32 %v1651, %v1658
  %v1660 = vmul.f32 %v1652, %v1658
  %v1661 = vmul.f32 %v1653, %v1658
  %v1662 = vmul.f32 %v1654, %v1658
  %v1663 = vlaneseq
  %v1664 = vshrl.u32 %v1663, 7
  %v1665 = vsub.s32 0, %v1664
  %v1666 = vrot.slane %v1602, %v1665
  %v1667 = vadd.f32 %v1659, %v1666
  %v1668 = vadd.f32 %v1660, %v1666
  %v1669 = vadd.f32 %v1661, %v1666
  %v1670 = vadd.f32 %v1662, %v1666
  %v1671 = vpack.c.bf16 %v1668, %v1667
  %v1672 = vpack.c.bf16 %v1670, %v1669
  %v1673 = vld [vmem:[%s2 + $0x2c] sm:$0x1]
  %v1674 = vlaneseq
  %v1675 = vshrl.u32 %v1674, 7
  %v1676 = vsub.s32 0, %v1675
  %v1677 = vrot.slane %v1673, %v1676
  %v1682 = vunpack.c.l.b16 %v406
  %v1683 = vunpack.c.l.b16 %v407
  %v1684 = vunpack.c.l.b16 %v408
  %v1685 = vunpack.c.l.b16 %v409
  %v1686 = vpack.c.b16 %v1683, %v1682
  %v1687 = vpack.c.b16 %v1685, %v1684
  %v1691 = vsel %vm328, %v1671, 0
  %v1694 = vsel %vm328, %v1672, 0
  %1696 = vmatprep.subr.bf16.mxu0 0
  %1697 = vmatpush1.bf16.msra.mxu0 0
  %1698 = vmatprep.subr.bf16.mxu0 0
  %1699 = vmatpush1.bf16.msra.mxu0 0
  %1700 = vmatprep.subr.bf16.mxu0 0
  %1701 = vmatpush1.bf16.msra.mxu0 0
  %1702 = vmatprep.subr.bf16.mxu0 0
  %1703 = vmatpush1.bf16.msra.mxu0 0
  %1704 = vmatprep.subr.bf16.mxu0 0
  %1705 = vmatpush1.bf16.msra.mxu0 0
  %1706 = vmatprep.subr.bf16.mxu0 0
  %1707 = vmatpush1.bf16.msra.mxu0 0
  %1708 = vmatprep.subr.bf16.mxu0 0
  %1709 = vmatpush1.bf16.msra.mxu0 %v1687
  %1710 = vmatprep.subr.bf16.mxu0 0
  %1711 = vmatpush1.bf16.msra.mxu0 %v1686
  %1712 = vmatprep.subr.bf16.mxu0 0
  %1713 = vmatpush2.bf16.msra.mxu0 0
  %1714 = vmatprep.subr.bf16.mxu0 0
  %1715 = vmatpush2.bf16.msra.mxu0 0
  %1716 = vmatprep.subr.bf16.mxu0 0
  %1717 = vmatpush2.bf16.msra.mxu0 0
  %1718 = vmatprep.subr.bf16.mxu0 0
  %1719 = vmatpush2.bf16.msra.mxu0 0
  %1720 = vmatprep.subr.bf16.mxu0 0
  %1721 = vmatpush2.bf16.msra.mxu0 0
  %1722 = vmatprep.subr.bf16.mxu0 0
  %1723 = vmatpush2.bf16.msra.mxu0 0
  %1724 = vmatprep.subr.bf16.mxu0 0
  %1725 = vmatpush2.bf16.msra.mxu0 0
  %1726 = vmatprep.subr.bf16.mxu0 0
  %1727 = vmatpush2.bf16.msra.mxu0 0
  %1728 = vmatprep.mubr.bf16.mxu0 0
  %1729 = vmatmul.mubr.bf16.gmra.mxu0 %v1691
  %v1730 = vpop.f32.mrf.mxu0
  %v1731 = vadd.f32 %v1677, %v1730
  %v1732 = vpop.f32.mrf.mxu0
  %v1733 = vpop.f32.mrf.mxu0
  %v1734 = vadd.f32 %v1677, %v1733
  %v1735 = vpop.f32.mrf.mxu0
  %1736 = vmatprep.mubr.bf16.mxu0 0
  %1737 = vmatmul.mubr.bf16.gmra.mxu0 %v1694
  %v1738 = vpop.f32.mrf.mxu0
  %v1739 = vadd.f32 %v1677, %v1738
  %v1740 = vpop.f32.mrf.mxu0
  %v1741 = vpop.f32.mrf.mxu0
  %v1742 = vadd.f32 %v1677, %v1741
  %v1743 = vpop.f32.mrf.mxu0
  %1744 = vdwg.mxu0
  %v1745 = vmul.f32 %v1731, %v1731
  %v1746 = vmul.f32 %v1734, %v1734
  %v1747 = vmul.f32 %v1739, %v1739
  %v1748 = vmul.f32 %v1742, %v1742
  %v1749 = vmul.f32 %v1731, %v1745
  %v1750 = vmul.f32 %v1734, %v1746
  %v1751 = vmul.f32 %v1739, %v1747
  %v1752 = vmul.f32 %v1742, %v1748
  %v1753 = vmul.f32 %v1749, 0.044715
  %v1754 = vmul.f32 %v1750, 0.044715
  %v1755 = vmul.f32 %v1751, 0.044715
  %v1756 = vmul.f32 %v1752, 0.044715
  %v1757 = vadd.f32 %v1731, %v1753
  %v1758 = vadd.f32 %v1734, %v1754
  %v1759 = vadd.f32 %v1739, %v1755
  %v1760 = vadd.f32 %v1742, %v1756
  %v1761 = vmul.f32 %v1757, 0.7978846
  %v1762 = vmul.f32 %v1758, 0.7978846
  %v1763 = vmul.f32 %v1759, 0.7978846
  %v1764 = vmul.f32 %v1760, 0.7978846
  %v1765 = vtanh.pop %v1761
  %v1766 = vtanh.pop %v1762
  %v1767 = vtanh.pop %v1763
  %v1768 = vtanh.pop %v1764
  %v1769 = vadd.f32 %v1765, 1.0
  %v1770 = vadd.f32 %v1766, 1.0
  %v1771 = vadd.f32 %v1767, 1.0
  %v1772 = vadd.f32 %v1768, 1.0
  %v1773 = vmul.f32 %v1769, 0.5
  %v1774 = vmul.f32 %v1770, 0.5
  %v1775 = vmul.f32 %v1771, 0.5
  %v1776 = vmul.f32 %v1772, 0.5
  %v1777 = vmul.f32 %v1731, %v1773
  %v1778 = vmul.f32 %v1734, %v1774
  %v1779 = vmul.f32 %v1739, %v1775
  %v1780 = vmul.f32 %v1742, %v1776
  %v1781 = vpack.c.bf16 %v1778, %v1777
  %v1782 = vpack.c.bf16 %v1780, %v1779
  %v1783 = vld [vmem:[%s2 + $0x2d] sm:$0x1]
  %v1784 = vlaneseq
  %v1785 = vshrl.u32 %v1784, 7
  %v1786 = vsub.s32 0, %v1785
  %v1787 = vrot.slane %v1783, %v1786
  %v1796 = vunpack.c.l.b16 %v410
  %v1797 = vunpack.c.l.b16 %v411
  %v1798 = vunpack.c.l.b16 %v412
  %v1799 = vunpack.c.l.b16 %v413
  %v1800 = vunpack.c.l.b16 %v414
  %v1801 = vunpack.c.l.b16 %v415
  %v1802 = vunpack.c.l.b16 %v416
  %v1803 = vunpack.c.l.b16 %v417
  %v1804 = vpack.c.b16 %v1797, %v1796
  %v1805 = vpack.c.b16 %v1799, %v1798
  %v1806 = vpack.c.b16 %v1801, %v1800
  %v1807 = vpack.c.b16 %v1803, %v1802
  %vm1812 = vcmask 523264
  %v1814 = vsel %vm1812, %v1781, 0
  %v1817 = vsel %vm1812, %v1782, 0
  %1819 = vmatprep.subr.bf16.mxu0 0
  %1820 = vmatpush1.bf16.msra.mxu0 0
  %1821 = vmatprep.subr.bf16.mxu0 0
  %1822 = vmatpush1.bf16.msra.mxu0 0
  %1823 = vmatprep.subr.bf16.mxu0 0
  %1824 = vmatpush1.bf16.msra.mxu0 0
  %1825 = vmatprep.subr.bf16.mxu0 0
  %1826 = vmatpush1.bf16.msra.mxu0 0
  %1827 = vmatprep.subr.bf16.mxu0 0
  %1828 = vmatpush1.bf16.msra.mxu0 %v1807
  %1829 = vmatprep.subr.bf16.mxu0 0
  %1830 = vmatpush1.bf16.msra.mxu0 %v1806
  %1831 = vmatprep.subr.bf16.mxu0 0
  %1832 = vmatpush1.bf16.msra.mxu0 %v1805
  %1833 = vmatprep.subr.bf16.mxu0 0
  %1834 = vmatpush1.bf16.msra.mxu0 %v1804
  %1835 = vmatprep.subr.bf16.mxu0 0
  %1836 = vmatpush2.bf16.msra.mxu0 0
  %1837 = vmatprep.subr.bf16.mxu0 0
  %1838 = vmatpush2.bf16.msra.mxu0 0
  %1839 = vmatprep.subr.bf16.mxu0 0
  %1840 = vmatpush2.bf16.msra.mxu0 0
  %1841 = vmatprep.subr.bf16.mxu0 0
  %1842 = vmatpush2.bf16.msra.mxu0 0
  %1843 = vmatprep.subr.bf16.mxu0 0
  %1844 = vmatpush2.bf16.msra.mxu0 0
  %1845 = vmatprep.subr.bf16.mxu0 0
  %1846 = vmatpush2.bf16.msra.mxu0 0
  %1847 = vmatprep.subr.bf16.mxu0 0
  %1848 = vmatpush2.bf16.msra.mxu0 0
  %1849 = vmatprep.subr.bf16.mxu0 0
  %1850 = vmatpush2.bf16.msra.mxu0 0
  %1851 = vmatprep.mubr.bf16.mxu0 0
  %1852 = vmatmul.mubr.bf16.gmra.mxu0 %v1814
  %v1853 = vpop.f32.mrf.mxu0
  %v1854 = vadd.f32 %v1787, %v1853
  %v1855 = vpop.f32.mrf.mxu0
  %v1856 = vpop.f32.mrf.mxu0
  %v1857 = vadd.f32 %v1787, %v1856
  %v1858 = vpop.f32.mrf.mxu0
  %1859 = vmatprep.mubr.bf16.mxu0 0
  %1860 = vmatmul.mubr.bf16.gmra.mxu0 %v1817
  %v1861 = vpop.f32.mrf.mxu0
  %v1862 = vadd.f32 %v1787, %v1861
  %v1863 = vpop.f32.mrf.mxu0
  %v1864 = vpop.f32.mrf.mxu0
  %v1865 = vadd.f32 %v1787, %v1864
  %v1866 = vpop.f32.mrf.mxu0
  %1867 = vdwg.mxu0
  %v1868 = vadd.f32 %v1854, %v1667
  %v1869 = vadd.f32 %v1857, %v1668
  %v1870 = vadd.f32 %v1862, %v1669
  %v1871 = vadd.f32 %v1865, %v1670
  %v1872 = vld [vmem:[%s2 + $0x2e] sm:$0x1]
  %v1873 = vld [vmem:[%s2 + $0x2f] sm:$0x1]
  %v1874 = vsel %vm328, %v1868, 0.0
  %1875 = vadd.xlane.f32.xlu0 %v1874
  %v1876 = vpop.xlane.xlu0 %1875
  %v1877 = vsel %vm328, %v1869, 0.0
  %1878 = vadd.xlane.f32.xlu0 %v1877
  %v1879 = vpop.xlane.xlu0 %1878
  %v1880 = vsel %vm328, %v1870, 0.0
  %1881 = vadd.xlane.f32.xlu0 %v1880
  %v1882 = vpop.xlane.xlu0 %1881
  %v1883 = vsel %vm328, %v1871, 0.0
  %1884 = vadd.xlane.f32.xlu0 %v1883
  %v1885 = vpop.xlane.xlu0 %1884
  %v1886 = vmul.f32 %v1876, %v341
  %v1887 = vmul.f32 %v1879, %v341
  %v1888 = vmul.f32 %v1882, %v341
  %v1889 = vmul.f32 %v1885, %v341
  %v1890 = vsub.f32 %v1868, %v1886
  %v1891 = vsub.f32 %v1869, %v1887
  %v1892 = vsub.f32 %v1870, %v1888
  %v1893 = vsub.f32 %v1871, %v1889
  %v1894 = vmul.f32 %v1890, %v1890
  %v1895 = vmul.f32 %v1891, %v1891
  %v1896 = vmul.f32 %v1892, %v1892
  %v1897 = vmul.f32 %v1893, %v1893
  %v1898 = vsel %vm328, %v1894, 0.0
  %1899 = vadd.xlane.f32.xlu0 %v1898
  %v1900 = vpop.xlane.xlu0 %1899
  %v1901 = vsel %vm328, %v1895, 0.0
  %1902 = vadd.xlane.f32.xlu0 %v1901
  %v1903 = vpop.xlane.xlu0 %1902
  %v1904 = vsel %vm328, %v1896, 0.0
  %1905 = vadd.xlane.f32.xlu0 %v1904
  %v1906 = vpop.xlane.xlu0 %1905
  %v1907 = vsel %vm328, %v1897, 0.0
  %1908 = vadd.xlane.f32.xlu0 %v1907
  %v1909 = vpop.xlane.xlu0 %1908
  %v1910 = vmul.f32 %v1900, %v341
  %v1911 = vmul.f32 %v1903, %v341
  %v1912 = vmul.f32 %v1906, %v341
  %v1913 = vmul.f32 %v1909, %v341
  %v1914 = vadd.f32 %v1910, 1e-12
  %v1915 = vadd.f32 %v1911, 1e-12
  %v1916 = vadd.f32 %v1912, 1e-12
  %v1917 = vadd.f32 %v1913, 1e-12
  %v1918 = vrsqrt.pop %v1914
  %v1919 = vrsqrt.pop %v1915
  %v1920 = vrsqrt.pop %v1916
  %v1921 = vrsqrt.pop %v1917
  %v1922 = vmul.f32 %v1890, %v1918
  %v1923 = vmul.f32 %v1891, %v1919
  %v1924 = vmul.f32 %v1892, %v1920
  %v1925 = vmul.f32 %v1893, %v1921
  %v1926 = vlaneseq
  %v1927 = vshrl.u32 %v1926, 7
  %v1928 = vsub.s32 0, %v1927
  %v1929 = vrot.slane %v1872, %v1928
  %v1930 = vmul.f32 %v1922, %v1929
  %v1931 = vmul.f32 %v1923, %v1929
  %v1932 = vmul.f32 %v1924, %v1929
  %v1933 = vmul.f32 %v1925, %v1929
  %v1934 = vlaneseq
  %v1935 = vshrl.u32 %v1934, 7
  %v1936 = vsub.s32 0, %v1935
  %v1937 = vrot.slane %v1873, %v1936
  %v1938 = vadd.f32 %v1930, %v1937
  %v1939 = vadd.f32 %v1931, %v1937
  %v1940 = vadd.f32 %v1932, %v1937
  %v1941 = vadd.f32 %v1933, %v1937
  %v1942 = vld [vmem:[%s1 + $0xe8] sm:$0xf]
  %v1943 = vld [vmem:[%s1 + $0xec] sm:$0xf]
  %v1944 = vld [vmem:[%s1 + $0xf0] sm:$0xf]
  %v1945 = vld [vmem:[%s1 + $0xf4] sm:$0xf]
  %v1946 = vld [vmem:[%s1 + $0xf8] sm:$0xf]
  %v1947 = vld [vmem:[%s1 + $0xfc] sm:$0xf]
  %v1948 = vld [vmem:[%s1 + $0x100] sm:$0xf]
  %v1949 = vld [vmem:[%s1 + $0x104] sm:$0xf]
  %v1950 = vld [vmem:[%s1 + $0x108] sm:$0xf]
  %v1951 = vld [vmem:[%s1 + $0x10c] sm:$0xf]
  %v1952 = vld [vmem:[%s1 + $0x110] sm:$0xf]
  %v1953 = vld [vmem:[%s1 + $0x114] sm:$0xf]
  %v1954 = vld [vmem:[%s1 + $0x118] sm:$0xf]
  %v1955 = vld [vmem:[%s1 + $0x11c] sm:$0xf]
  %v1956 = vld [vmem:[%s1 + $0x120] sm:$0xf]
  %v1957 = vld [vmem:[%s1 + $0x124] sm:$0xf]
  %v1958 = vld [vmem:[%s1 + $0x128] sm:$0xf]
  %v1959 = vld [vmem:[%s1 + $0x12c] sm:$0xf]
  %v1960 = vld [vmem:[%s1 + $0x130] sm:$0xf]
  %v1961 = vld [vmem:[%s1 + $0x134] sm:$0xf]
  %v1962 = vpack.c.bf16 %v1939, %v1938
  %v1963 = vpack.c.bf16 %v1941, %v1940
  %v1964 = vld [vmem:[%s2 + $0x30] sm:$0x1]
  %v1965 = vlaneseq
  %v1966 = vshrl.u32 %v1965, 7
  %v1967 = vsub.s32 0, %v1966
  %v1968 = vrot.slane %v1964, %v1967
  %v1973 = vunpack.c.l.b16 %v1942
  %v1974 = vunpack.c.l.b16 %v1943
  %v1975 = vunpack.c.l.b16 %v1944
  %v1976 = vunpack.c.l.b16 %v1945
  %v1977 = vpack.c.b16 %v1974, %v1973
  %v1978 = vpack.c.b16 %v1976, %v1975
  %v1982 = vsel %vm328, %v1962, 0
  %v1985 = vsel %vm328, %v1963, 0
  %1987 = vmatprep.subr.bf16.mxu0 0
  %1988 = vmatpush1.bf16.msra.mxu0 0
  %1989 = vmatprep.subr.bf16.mxu0 0
  %1990 = vmatpush1.bf16.msra.mxu0 0
  %1991 = vmatprep.subr.bf16.mxu0 0
  %1992 = vmatpush1.bf16.msra.mxu0 0
  %1993 = vmatprep.subr.bf16.mxu0 0
  %1994 = vmatpush1.bf16.msra.mxu0 0
  %1995 = vmatprep.subr.bf16.mxu0 0
  %1996 = vmatpush1.bf16.msra.mxu0 0
  %1997 = vmatprep.subr.bf16.mxu0 0
  %1998 = vmatpush1.bf16.msra.mxu0 0
  %1999 = vmatprep.subr.bf16.mxu0 0
  %2000 = vmatpush1.bf16.msra.mxu0 %v1978
  %2001 = vmatprep.subr.bf16.mxu0 0
  %2002 = vmatpush1.bf16.msra.mxu0 %v1977
  %2003 = vmatprep.subr.bf16.mxu0 0
  %2004 = vmatpush2.bf16.msra.mxu0 0
  %2005 = vmatprep.subr.bf16.mxu0 0
  %2006 = vmatpush2.bf16.msra.mxu0 0
  %2007 = vmatprep.subr.bf16.mxu0 0
  %2008 = vmatpush2.bf16.msra.mxu0 0
  %2009 = vmatprep.subr.bf16.mxu0 0
  %2010 = vmatpush2.bf16.msra.mxu0 0
  %2011 = vmatprep.subr.bf16.mxu0 0
  %2012 = vmatpush2.bf16.msra.mxu0 0
  %2013 = vmatprep.subr.bf16.mxu0 0
  %2014 = vmatpush2.bf16.msra.mxu0 0
  %2015 = vmatprep.subr.bf16.mxu0 0
  %2016 = vmatpush2.bf16.msra.mxu0 0
  %2017 = vmatprep.subr.bf16.mxu0 0
  %2018 = vmatpush2.bf16.msra.mxu0 0
  %2019 = vmatprep.mubr.bf16.mxu0 0
  %2020 = vmatmul.mubr.bf16.gmra.mxu0 %v1982
  %v2021 = vpop.f32.mrf.mxu0
  %v2022 = vadd.f32 %v1968, %v2021
  %v2023 = vpop.f32.mrf.mxu0
  %v2024 = vpop.f32.mrf.mxu0
  %v2025 = vadd.f32 %v1968, %v2024
  %v2026 = vpop.f32.mrf.mxu0
  %2027 = vmatprep.mubr.bf16.mxu0 0
  %2028 = vmatmul.mubr.bf16.gmra.mxu0 %v1985
  %v2029 = vpop.f32.mrf.mxu0
  %v2030 = vadd.f32 %v1968, %v2029
  %v2031 = vpop.f32.mrf.mxu0
  %v2032 = vpop.f32.mrf.mxu0
  %v2033 = vadd.f32 %v1968, %v2032
  %v2034 = vpop.f32.mrf.mxu0
  %2035 = vdwg.mxu0
  %v2036 = vpack.c.bf16 %v2025, %v2022
  %v2037 = vpack.c.bf16 %v2033, %v2030
  %2039 = vrot.lane.b32.xlu0 %v2036, 96
  %v2040 = vpop.permute.xlu0 %2039
  %v2042 = vsel %vm497, %v2036, 0
  %v2045 = vsel %vm497, %v2040, 0
  %2047 = vmatprep.subr.bf16.mxu0 0
  %2048 = vmatpush1.bf16.xpose.msra.mxu0 0
  %2049 = vmatprep.subr.bf16.mxu0 0
  %2050 = vmatpush1.bf16.xpose.msra.mxu0 0
  %2051 = vmatprep.subr.bf16.mxu0 0
  %2052 = vmatpush1.bf16.xpose.msra.mxu0 0
  %2053 = vmatprep.subr.bf16.mxu0 0
  %2054 = vmatpush1.bf16.xpose.msra.mxu0 0
  %2055 = vmatprep.subr.bf16.mxu0 0
  %2056 = vmatpush1.bf16.xpose.msra.mxu0 0
  %2057 = vmatprep.subr.bf16.mxu0 0
  %2058 = vmatpush1.bf16.xpose.msra.mxu0 0
  %2059 = vmatprep.subr.bf16.mxu0 0
  %2060 = vmatpush1.bf16.xpose.msra.mxu0 0
  %2061 = vmatprep.subr.bf16.mxu0 0
  %2062 = vmatpush1.bf16.xpose.msra.mxu0 %v2045
  %2063 = vmatprep.subr.bf16.mxu0 0
  %2064 = vmatpush2.bf16.xpose.msra.mxu0 0
  %2065 = vmatprep.subr.bf16.mxu0 0
  %2066 = vmatpush2.bf16.xpose.msra.mxu0 0
  %2067 = vmatprep.subr.bf16.mxu0 0
  %2068 = vmatpush2.bf16.xpose.msra.mxu0 0
  %2069 = vmatprep.subr.bf16.mxu0 0
  %2070 = vmatpush2.bf16.xpose.msra.mxu0 0
  %2071 = vmatprep.subr.bf16.mxu0 0
  %2072 = vmatpush2.bf16.xpose.msra.mxu0 0
  %2073 = vmatprep.subr.bf16.mxu0 0
  %2074 = vmatpush2.bf16.xpose.msra.mxu0 0
  %2075 = vmatprep.subr.bf16.mxu0 0
  %2076 = vmatpush2.bf16.xpose.msra.mxu0 0
  %2077 = vmatprep.subr.bf16.mxu0 0
  %2078 = vmatpush2.bf16.xpose.msra.mxu0 0
  %2079 = vmatprep.mubr.bf16.mxu0 0
  %2080 = vmatmul.mubr.bf16.gmra.mxu0 %v2042
  %v2081 = vpop.f32.mrf.mxu0
  %v2082 = vadd.f32 0.0, %v2081
  %v2083 = vpop.f32.mrf.mxu0
  %v2084 = vpop.f32.mrf.mxu0
  %v2085 = vadd.f32 0.0, %v2084
  %v2086 = vpop.f32.mrf.mxu0
  %2087 = vdwg.mxu0
  %2089 = vrot.lane.b32.xlu0 %v2037, 96
  %v2090 = vpop.permute.xlu0 %2089
  %v2092 = vsel %vm497, %v2037, 0
  %v2095 = vsel %vm497, %v2090, 0
  %2097 = vmatprep.subr.bf16.mxu0 0
  %2098 = vmatpush1.bf16.xpose.msra.mxu0 0
  %2099 = vmatprep.subr.bf16.mxu0 0
  %2100 = vmatpush1.bf16.xpose.msra.mxu0 0
  %2101 = vmatprep.subr.bf16.mxu0 0
  %2102 = vmatpush1.bf16.xpose.msra.mxu0 0
  %2103 = vmatprep.subr.bf16.mxu0 0
  %2104 = vmatpush1.bf16.xpose.msra.mxu0 0
  %2105 = vmatprep.subr.bf16.mxu0 0
  %2106 = vmatpush1.bf16.xpose.msra.mxu0 0
  %2107 = vmatprep.subr.bf16.mxu0 0
  %2108 = vmatpush1.bf16.xpose.msra.mxu0 0
  %2109 = vmatprep.subr.bf16.mxu0 0
  %2110 = vmatpush1.bf16.xpose.msra.mxu0 0
  %2111 = vmatprep.subr.bf16.mxu0 0
  %2112 = vmatpush1.bf16.xpose.msra.mxu0 %v2095
  %2113 = vmatprep.subr.bf16.mxu0 0
  %2114 = vmatpush2.bf16.xpose.msra.mxu0 0
  %2115 = vmatprep.subr.bf16.mxu0 0
  %2116 = vmatpush2.bf16.xpose.msra.mxu0 0
  %2117 = vmatprep.subr.bf16.mxu0 0
  %2118 = vmatpush2.bf16.xpose.msra.mxu0 0
  %2119 = vmatprep.subr.bf16.mxu0 0
  %2120 = vmatpush2.bf16.xpose.msra.mxu0 0
  %2121 = vmatprep.subr.bf16.mxu0 0
  %2122 = vmatpush2.bf16.xpose.msra.mxu0 0
  %2123 = vmatprep.subr.bf16.mxu0 0
  %2124 = vmatpush2.bf16.xpose.msra.mxu0 0
  %2125 = vmatprep.subr.bf16.mxu0 0
  %2126 = vmatpush2.bf16.xpose.msra.mxu0 0
  %2127 = vmatprep.subr.bf16.mxu0 0
  %2128 = vmatpush2.bf16.xpose.msra.mxu0 0
  %2129 = vmatprep.mubr.bf16.mxu0 0
  %2130 = vmatmul.mubr.bf16.gmra.mxu0 %v2092
  %v2131 = vpop.f32.mrf.mxu0
  %v2132 = vadd.f32 0.0, %v2131
  %v2133 = vpop.f32.mrf.mxu0
  %v2134 = vpop.f32.mrf.mxu0
  %v2135 = vadd.f32 0.0, %v2134
  %v2136 = vpop.f32.mrf.mxu0
  %2137 = vdwg.mxu0
  %v2138 = vsel %vm595, %v2082, -inf
  %2139 = vmax.xlane.f32.xlu0 %v2138
  %v2140 = vpop.xlane.xlu0 %2139
  %v2141 = vsel %vm595, %v2085, -inf
  %2142 = vmax.xlane.f32.xlu0 %v2141
  %v2143 = vpop.xlane.xlu0 %2142
  %v2144 = vsel %vm595, %v2132, -inf
  %2145 = vmax.xlane.f32.xlu0 %v2144
  %v2146 = vpop.xlane.xlu0 %2145
  %v2147 = vsel %vm595, %v2135, -inf
  %2148 = vmax.xlane.f32.xlu0 %v2147
  %v2149 = vpop.xlane.xlu0 %2148
  %v2150 = vsub.f32 %v2082, %v2140
  %v2151 = vsub.f32 %v2085, %v2143
  %v2152 = vsub.f32 %v2132, %v2146
  %v2153 = vsub.f32 %v2135, %v2149
  %v2154 = vmul.f32 %v2150, 1.442695
  %v2155 = vpow.pop %v2154
  %v2156 = vmul.f32 %v2151, 1.442695
  %v2157 = vpow.pop %v2156
  %v2158 = vmul.f32 %v2152, 1.442695
  %v2159 = vpow.pop %v2158
  %v2160 = vmul.f32 %v2153, 1.442695
  %v2161 = vpow.pop %v2160
  %v2162 = vsel %vm595, %v2155, 0.0
  %2163 = vadd.xlane.f32.xlu0 %v2162
  %v2164 = vpop.xlane.xlu0 %2163
  %v2165 = vsel %vm595, %v2157, 0.0
  %2166 = vadd.xlane.f32.xlu0 %v2165
  %v2167 = vpop.xlane.xlu0 %2166
  %v2168 = vsel %vm595, %v2159, 0.0
  %2169 = vadd.xlane.f32.xlu0 %v2168
  %v2170 = vpop.xlane.xlu0 %2169
  %v2171 = vsel %vm595, %v2161, 0.0
  %2172 = vadd.xlane.f32.xlu0 %v2171
  %v2173 = vpop.xlane.xlu0 %2172
  %v2174 = vrcp.pop %v2164
  %v2175 = vrcp.pop %v2167
  %v2176 = vrcp.pop %v2170
  %v2177 = vrcp.pop %v2173
  %v2178 = vmul.f32 %v2155, %v2174
  %v2179 = vmul.f32 %v2157, %v2175
  %v2180 = vmul.f32 %v2159, %v2176
  %v2181 = vmul.f32 %v2161, %v2177
  %v2182 = vpack.c.bf16 %v2179, %v2178
  %v2183 = vpack.c.bf16 %v2181, %v2180
  %2184 = vrot.lane.b32.xlu0 %v2036, 64
  %v2185 = vpop.permute.xlu0 %2184
  %v2188 = vsel %vm595, %v2182, 0
  %2190 = vmatprep.subr.bf16.mxu0 0
  %2191 = vmatpush1.bf16.msra.mxu0 0
  %2192 = vmatprep.subr.bf16.mxu0 0
  %2193 = vmatpush1.bf16.msra.mxu0 0
  %2194 = vmatprep.subr.bf16.mxu0 0
  %2195 = vmatpush1.bf16.msra.mxu0 0
  %2196 = vmatprep.subr.bf16.mxu0 0
  %2197 = vmatpush1.bf16.msra.mxu0 0
  %2198 = vmatprep.subr.bf16.mxu0 0
  %2199 = vmatpush1.bf16.msra.mxu0 0
  %2200 = vmatprep.subr.bf16.mxu0 0
  %2201 = vmatpush1.bf16.msra.mxu0 0
  %2202 = vmatprep.subr.bf16.mxu0 0
  %2203 = vmatpush1.bf16.msra.mxu0 0
  %2204 = vmatprep.subr.bf16.mxu0 0
  %2205 = vmatpush1.bf16.msra.mxu0 %v2185
  %2206 = vmatprep.subr.bf16.mxu0 0
  %2207 = vmatpush2.bf16.msra.mxu0 0
  %2208 = vmatprep.subr.bf16.mxu0 0
  %2209 = vmatpush2.bf16.msra.mxu0 0
  %2210 = vmatprep.subr.bf16.mxu0 0
  %2211 = vmatpush2.bf16.msra.mxu0 0
  %2212 = vmatprep.subr.bf16.mxu0 0
  %2213 = vmatpush2.bf16.msra.mxu0 0
  %2214 = vmatprep.subr.bf16.mxu0 0
  %2215 = vmatpush2.bf16.msra.mxu0 0
  %2216 = vmatprep.subr.bf16.mxu0 0
  %2217 = vmatpush2.bf16.msra.mxu0 0
  %2218 = vmatprep.subr.bf16.mxu0 0
  %2219 = vmatpush2.bf16.msra.mxu0 0
  %2220 = vmatprep.subr.bf16.mxu0 0
  %2221 = vmatpush2.bf16.msra.mxu0 0
  %2222 = vmatprep.mubr.bf16.mxu0 0
  %2223 = vmatmul.mubr.bf16.gmra.mxu0 %v2188
  %v2224 = vpop.f32.mrf.mxu0
  %v2225 = vadd.f32 0.0, %v2224
  %v2226 = vpop.f32.mrf.mxu0
  %v2227 = vpop.f32.mrf.mxu0
  %v2228 = vadd.f32 0.0, %v2227
  %v2229 = vpop.f32.mrf.mxu0
  %2230 = vdwg.mxu0
  %2231 = vrot.lane.b32.xlu0 %v2037, 64
  %v2232 = vpop.permute.xlu0 %2231
  %v2235 = vsel %vm595, %v2183, 0
  %2237 = vmatprep.subr.bf16.mxu0 0
  %2238 = vmatpush1.bf16.msra.mxu0 0
  %2239 = vmatprep.subr.bf16.mxu0 0
  %2240 = vmatpush1.bf16.msra.mxu0 0
  %2241 = vmatprep.subr.bf16.mxu0 0
  %2242 = vmatpush1.bf16.msra.mxu0 0
  %2243 = vmatprep.subr.bf16.mxu0 0
  %2244 = vmatpush1.bf16.msra.mxu0 0
  %2245 = vmatprep.subr.bf16.mxu0 0
  %2246 = vmatpush1.bf16.msra.mxu0 0
  %2247 = vmatprep.subr.bf16.mxu0 0
  %2248 = vmatpush1.bf16.msra.mxu0 0
  %2249 = vmatprep.subr.bf16.mxu0 0
  %2250 = vmatpush1.bf16.msra.mxu0 0
  %2251 = vmatprep.subr.bf16.mxu0 0
  %2252 = vmatpush1.bf16.msra.mxu0 %v2232
  %2253 = vmatprep.subr.bf16.mxu0 0
  %2254 = vmatpush2.bf16.msra.mxu0 0
  %2255 = vmatprep.subr.bf16.mxu0 0
  %2256 = vmatpush2.bf16.msra.mxu0 0
  %2257 = vmatprep.subr.bf16.mxu0 0
  %2258 = vmatpush2.bf16.msra.mxu0 0
  %2259 = vmatprep.subr.bf16.mxu0 0
  %2260 = vmatpush2.bf16.msra.mxu0 0
  %2261 = vmatprep.subr.bf16.mxu0 0
  %2262 = vmatpush2.bf16.msra.mxu0 0
  %2263 = vmatprep.subr.bf16.mxu0 0
  %2264 = vmatpush2.bf16.msra.mxu0 0
  %2265 = vmatprep.subr.bf16.mxu0 0
  %2266 = vmatpush2.bf16.msra.mxu0 0
  %2267 = vmatprep.subr.bf16.mxu0 0
  %2268 = vmatpush2.bf16.msra.mxu0 0
  %2269 = vmatprep.mubr.bf16.mxu0 0
  %2270 = vmatmul.mubr.bf16.gmra.mxu0 %v2235
  %v2271 = vpop.f32.mrf.mxu0
  %v2272 = vadd.f32 0.0, %v2271
  %v2273 = vpop.f32.mrf.mxu0
  %v2274 = vpop.f32.mrf.mxu0
  %v2275 = vadd.f32 0.0, %v2274
  %v2276 = vpop.f32.mrf.mxu0
  %2277 = vdwg.mxu0
  %2278 = vrot.lane.b32.xlu0 %v2036, 120
  %v2279 = vpop.permute.xlu0 %2278
  %2280 = vrot.lane.b32.xlu0 %v2036, 88
  %v2281 = vpop.permute.xlu0 %2280
  %v2283 = vsel %vm497, %v2279, 0
  %v2286 = vsel %vm497, %v2281, 0
  %2288 = vmatprep.subr.bf16.mxu0 0
  %2289 = vmatpush1.bf16.xpose.msra.mxu0 0
  %2290 = vmatprep.subr.bf16.mxu0 0
  %2291 = vmatpush1.bf16.xpose.msra.mxu0 0
  %2292 = vmatprep.subr.bf16.mxu0 0
  %2293 = vmatpush1.bf16.xpose.msra.mxu0 0
  %2294 = vmatprep.subr.bf16.mxu0 0
  %2295 = vmatpush1.bf16.xpose.msra.mxu0 0
  %2296 = vmatprep.subr.bf16.mxu0 0
  %2297 = vmatpush1.bf16.xpose.msra.mxu0 0
  %2298 = vmatprep.subr.bf16.mxu0 0
  %2299 = vmatpush1.bf16.xpose.msra.mxu0 0
  %2300 = vmatprep.subr.bf16.mxu0 0
  %2301 = vmatpush1.bf16.xpose.msra.mxu0 0
  %2302 = vmatprep.subr.bf16.mxu0 0
  %2303 = vmatpush1.bf16.xpose.msra.mxu0 %v2286
  %2304 = vmatprep.subr.bf16.mxu0 0
  %2305 = vmatpush2.bf16.xpose.msra.mxu0 0
  %2306 = vmatprep.subr.bf16.mxu0 0
  %2307 = vmatpush2.bf16.xpose.msra.mxu0 0
  %2308 = vmatprep.subr.bf16.mxu0 0
  %2309 = vmatpush2.bf16.xpose.msra.mxu0 0
  %2310 = vmatprep.subr.bf16.mxu0 0
  %2311 = vmatpush2.bf16.xpose.msra.mxu0 0
  %2312 = vmatprep.subr.bf16.mxu0 0
  %2313 = vmatpush2.bf16.xpose.msra.mxu0 0
  %2314 = vmatprep.subr.bf16.mxu0 0
  %2315 = vmatpush2.bf16.xpose.msra.mxu0 0
  %2316 = vmatprep.subr.bf16.mxu0 0
  %2317 = vmatpush2.bf16.xpose.msra.mxu0 0
  %2318 = vmatprep.subr.bf16.mxu0 0
  %2319 = vmatpush2.bf16.xpose.msra.mxu0 0
  %2320 = vmatprep.mubr.bf16.mxu0 0
  %2321 = vmatmul.mubr.bf16.gmra.mxu0 %v2283
  %v2322 = vpop.f32.mrf.mxu0
  %v2323 = vadd.f32 0.0, %v2322
  %v2324 = vpop.f32.mrf.mxu0
  %v2325 = vpop.f32.mrf.mxu0
  %v2326 = vadd.f32 0.0, %v2325
  %v2327 = vpop.f32.mrf.mxu0
  %2328 = vdwg.mxu0
  %2329 = vrot.lane.b32.xlu0 %v2037, 120
  %v2330 = vpop.permute.xlu0 %2329
  %2331 = vrot.lane.b32.xlu0 %v2037, 88
  %v2332 = vpop.permute.xlu0 %2331
  %v2334 = vsel %vm497, %v2330, 0
  %v2337 = vsel %vm497, %v2332, 0
  %2339 = vmatprep.subr.bf16.mxu0 0
  %2340 = vmatpush1.bf16.xpose.msra.mxu0 0
  %2341 = vmatprep.subr.bf16.mxu0 0
  %2342 = vmatpush1.bf16.xpose.msra.mxu0 0
  %2343 = vmatprep.subr.bf16.mxu0 0
  %2344 = vmatpush1.bf16.xpose.msra.mxu0 0
  %2345 = vmatprep.subr.bf16.mxu0 0
  %2346 = vmatpush1.bf16.xpose.msra.mxu0 0
  %2347 = vmatprep.subr.bf16.mxu0 0
  %2348 = vmatpush1.bf16.xpose.msra.mxu0 0
  %2349 = vmatprep.subr.bf16.mxu0 0
  %2350 = vmatpush1.bf16.xpose.msra.mxu0 0
  %2351 = vmatprep.subr.bf16.mxu0 0
  %2352 = vmatpush1.bf16.xpose.msra.mxu0 0
  %2353 = vmatprep.subr.bf16.mxu0 0
  %2354 = vmatpush1.bf16.xpose.msra.mxu0 %v2337
  %2355 = vmatprep.subr.bf16.mxu0 0
  %2356 = vmatpush2.bf16.xpose.msra.mxu0 0
  %2357 = vmatprep.subr.bf16.mxu0 0
  %2358 = vmatpush2.bf16.xpose.msra.mxu0 0
  %2359 = vmatprep.subr.bf16.mxu0 0
  %2360 = vmatpush2.bf16.xpose.msra.mxu0 0
  %2361 = vmatprep.subr.bf16.mxu0 0
  %2362 = vmatpush2.bf16.xpose.msra.mxu0 0
  %2363 = vmatprep.subr.bf16.mxu0 0
  %2364 = vmatpush2.bf16.xpose.msra.mxu0 0
  %2365 = vmatprep.subr.bf16.mxu0 0
  %2366 = vmatpush2.bf16.xpose.msra.mxu0 0
  %2367 = vmatprep.subr.bf16.mxu0 0
  %2368 = vmatpush2.bf16.xpose.msra.mxu0 0
  %2369 = vmatprep.subr.bf16.mxu0 0
  %2370 = vmatpush2.bf16.xpose.msra.mxu0 0
  %2371 = vmatprep.mubr.bf16.mxu0 0
  %2372 = vmatmul.mubr.bf16.gmra.mxu0 %v2334
  %v2373 = vpop.f32.mrf.mxu0
  %v2374 = vadd.f32 0.0, %v2373
  %v2375 = vpop.f32.mrf.mxu0
  %v2376 = vpop.f32.mrf.mxu0
  %v2377 = vadd.f32 0.0, %v2376
  %v2378 = vpop.f32.mrf.mxu0
  %2379 = vdwg.mxu0
  %v2380 = vsel %vm595, %v2323, -inf
  %2381 = vmax.xlane.f32.xlu0 %v2380
  %v2382 = vpop.xlane.xlu0 %2381
  %v2383 = vsel %vm595, %v2326, -inf
  %2384 = vmax.xlane.f32.xlu0 %v2383
  %v2385 = vpop.xlane.xlu0 %2384
  %v2386 = vsel %vm595, %v2374, -inf
  %2387 = vmax.xlane.f32.xlu0 %v2386
  %v2388 = vpop.xlane.xlu0 %2387
  %v2389 = vsel %vm595, %v2377, -inf
  %2390 = vmax.xlane.f32.xlu0 %v2389
  %v2391 = vpop.xlane.xlu0 %2390
  %v2392 = vsub.f32 %v2323, %v2382
  %v2393 = vsub.f32 %v2326, %v2385
  %v2394 = vsub.f32 %v2374, %v2388
  %v2395 = vsub.f32 %v2377, %v2391
  %v2396 = vmul.f32 %v2392, 1.442695
  %v2397 = vpow.pop %v2396
  %v2398 = vmul.f32 %v2393, 1.442695
  %v2399 = vpow.pop %v2398
  %v2400 = vmul.f32 %v2394, 1.442695
  %v2401 = vpow.pop %v2400
  %v2402 = vmul.f32 %v2395, 1.442695
  %v2403 = vpow.pop %v2402
  %v2404 = vsel %vm595, %v2397, 0.0
  %2405 = vadd.xlane.f32.xlu0 %v2404
  %v2406 = vpop.xlane.xlu0 %2405
  %v2407 = vsel %vm595, %v2399, 0.0
  %2408 = vadd.xlane.f32.xlu0 %v2407
  %v2409 = vpop.xlane.xlu0 %2408
  %v2410 = vsel %vm595, %v2401, 0.0
  %2411 = vadd.xlane.f32.xlu0 %v2410
  %v2412 = vpop.xlane.xlu0 %2411
  %v2413 = vsel %vm595, %v2403, 0.0
  %2414 = vadd.xlane.f32.xlu0 %v2413
  %v2415 = vpop.xlane.xlu0 %2414
  %v2416 = vrcp.pop %v2406
  %v2417 = vrcp.pop %v2409
  %v2418 = vrcp.pop %v2412
  %v2419 = vrcp.pop %v2415
  %v2420 = vmul.f32 %v2397, %v2416
  %v2421 = vmul.f32 %v2399, %v2417
  %v2422 = vmul.f32 %v2401, %v2418
  %v2423 = vmul.f32 %v2403, %v2419
  %v2424 = vpack.c.bf16 %v2421, %v2420
  %v2425 = vpack.c.bf16 %v2423, %v2422
  %2426 = vrot.lane.b32.xlu0 %v2036, 56
  %v2427 = vpop.permute.xlu0 %2426
  %v2430 = vsel %vm595, %v2424, 0
  %2432 = vmatprep.subr.bf16.mxu0 0
  %2433 = vmatpush1.bf16.msra.mxu0 0
  %2434 = vmatprep.subr.bf16.mxu0 0
  %2435 = vmatpush1.bf16.msra.mxu0 0
  %2436 = vmatprep.subr.bf16.mxu0 0
  %2437 = vmatpush1.bf16.msra.mxu0 0
  %2438 = vmatprep.subr.bf16.mxu0 0
  %2439 = vmatpush1.bf16.msra.mxu0 0
  %2440 = vmatprep.subr.bf16.mxu0 0
  %2441 = vmatpush1.bf16.msra.mxu0 0
  %2442 = vmatprep.subr.bf16.mxu0 0
  %2443 = vmatpush1.bf16.msra.mxu0 0
  %2444 = vmatprep.subr.bf16.mxu0 0
  %2445 = vmatpush1.bf16.msra.mxu0 0
  %2446 = vmatprep.subr.bf16.mxu0 0
  %2447 = vmatpush1.bf16.msra.mxu0 %v2427
  %2448 = vmatprep.subr.bf16.mxu0 0
  %2449 = vmatpush2.bf16.msra.mxu0 0
  %2450 = vmatprep.subr.bf16.mxu0 0
  %2451 = vmatpush2.bf16.msra.mxu0 0
  %2452 = vmatprep.subr.bf16.mxu0 0
  %2453 = vmatpush2.bf16.msra.mxu0 0
  %2454 = vmatprep.subr.bf16.mxu0 0
  %2455 = vmatpush2.bf16.msra.mxu0 0
  %2456 = vmatprep.subr.bf16.mxu0 0
  %2457 = vmatpush2.bf16.msra.mxu0 0
  %2458 = vmatprep.subr.bf16.mxu0 0
  %2459 = vmatpush2.bf16.msra.mxu0 0
  %2460 = vmatprep.subr.bf16.mxu0 0
  %2461 = vmatpush2.bf16.msra.mxu0 0
  %2462 = vmatprep.subr.bf16.mxu0 0
  %2463 = vmatpush2.bf16.msra.mxu0 0
  %2464 = vmatprep.mubr.bf16.mxu0 0
  %2465 = vmatmul.mubr.bf16.gmra.mxu0 %v2430
  %v2466 = vpop.f32.mrf.mxu0
  %v2467 = vadd.f32 0.0, %v2466
  %v2468 = vpop.f32.mrf.mxu0
  %v2469 = vpop.f32.mrf.mxu0
  %v2470 = vadd.f32 0.0, %v2469
  %v2471 = vpop.f32.mrf.mxu0
  %2472 = vdwg.mxu0
  %2473 = vrot.lane.b32.xlu0 %v2037, 56
  %v2474 = vpop.permute.xlu0 %2473
  %v2477 = vsel %vm595, %v2425, 0
  %2479 = vmatprep.subr.bf16.mxu0 0
  %2480 = vmatpush1.bf16.msra.mxu0 0
  %2481 = vmatprep.subr.bf16.mxu0 0
  %2482 = vmatpush1.bf16.msra.mxu0 0
  %2483 = vmatprep.subr.bf16.mxu0 0
  %2484 = vmatpush1.bf16.msra.mxu0 0
  %2485 = vmatprep.subr.bf16.mxu0 0
  %2486 = vmatpush1.bf16.msra.mxu0 0
  %2487 = vmatprep.subr.bf16.mxu0 0
  %2488 = vmatpush1.bf16.msra.mxu0 0
  %2489 = vmatprep.subr.bf16.mxu0 0
  %2490 = vmatpush1.bf16.msra.mxu0 0
  %2491 = vmatprep.subr.bf16.mxu0 0
  %2492 = vmatpush1.bf16.msra.mxu0 0
  %2493 = vmatprep.subr.bf16.mxu0 0
  %2494 = vmatpush1.bf16.msra.mxu0 %v2474
  %2495 = vmatprep.subr.bf16.mxu0 0
  %2496 = vmatpush2.bf16.msra.mxu0 0
  %2497 = vmatprep.subr.bf16.mxu0 0
  %2498 = vmatpush2.bf16.msra.mxu0 0
  %2499 = vmatprep.subr.bf16.mxu0 0
  %2500 = vmatpush2.bf16.msra.mxu0 0
  %2501 = vmatprep.subr.bf16.mxu0 0
  %2502 = vmatpush2.bf16.msra.mxu0 0
  %2503 = vmatprep.subr.bf16.mxu0 0
  %2504 = vmatpush2.bf16.msra.mxu0 0
  %2505 = vmatprep.subr.bf16.mxu0 0
  %2506 = vmatpush2.bf16.msra.mxu0 0
  %2507 = vmatprep.subr.bf16.mxu0 0
  %2508 = vmatpush2.bf16.msra.mxu0 0
  %2509 = vmatprep.subr.bf16.mxu0 0
  %2510 = vmatpush2.bf16.msra.mxu0 0
  %2511 = vmatprep.mubr.bf16.mxu0 0
  %2512 = vmatmul.mubr.bf16.gmra.mxu0 %v2477
  %v2513 = vpop.f32.mrf.mxu0
  %v2514 = vadd.f32 0.0, %v2513
  %v2515 = vpop.f32.mrf.mxu0
  %v2516 = vpop.f32.mrf.mxu0
  %v2517 = vadd.f32 0.0, %v2516
  %v2518 = vpop.f32.mrf.mxu0
  %2519 = vdwg.mxu0
  %2520 = vrot.lane.b32.xlu0 %v2036, 112
  %v2521 = vpop.permute.xlu0 %2520
  %2522 = vrot.lane.b32.xlu0 %v2036, 80
  %v2523 = vpop.permute.xlu0 %2522
  %v2525 = vsel %vm497, %v2521, 0
  %v2528 = vsel %vm497, %v2523, 0
  %2530 = vmatprep.subr.bf16.mxu0 0
  %2531 = vmatpush1.bf16.xpose.msra.mxu0 0
  %2532 = vmatprep.subr.bf16.mxu0 0
  %2533 = vmatpush1.bf16.xpose.msra.mxu0 0
  %2534 = vmatprep.subr.bf16.mxu0 0
  %2535 = vmatpush1.bf16.xpose.msra.mxu0 0
  %2536 = vmatprep.subr.bf16.mxu0 0
  %2537 = vmatpush1.bf16.xpose.msra.mxu0 0
  %2538 = vmatprep.subr.bf16.mxu0 0
  %2539 = vmatpush1.bf16.xpose.msra.mxu0 0
  %2540 = vmatprep.subr.bf16.mxu0 0
  %2541 = vmatpush1.bf16.xpose.msra.mxu0 0
  %2542 = vmatprep.subr.bf16.mxu0 0
  %2543 = vmatpush1.bf16.xpose.msra.mxu0 0
  %2544 = vmatprep.subr.bf16.mxu0 0
  %2545 = vmatpush1.bf16.xpose.msra.mxu0 %v2528
  %2546 = vmatprep.subr.bf16.mxu0 0
  %2547 = vmatpush2.bf16.xpose.msra.mxu0 0
  %2548 = vmatprep.subr.bf16.mxu0 0
  %2549 = vmatpush2.bf16.xpose.msra.mxu0 0
  %2550 = vmatprep.subr.bf16.mxu0 0
  %2551 = vmatpush2.bf16.xpose.msra.mxu0 0
  %2552 = vmatprep.subr.bf16.mxu0 0
  %2553 = vmatpush2.bf16.xpose.msra.mxu0 0
  %2554 = vmatprep.subr.bf16.mxu0 0
  %2555 = vmatpush2.bf16.xpose.msra.mxu0 0
  %2556 = vmatprep.subr.bf16.mxu0 0
  %2557 = vmatpush2.bf16.xpose.msra.mxu0 0
  %2558 = vmatprep.subr.bf16.mxu0 0
  %2559 = vmatpush2.bf16.xpose.msra.mxu0 0
  %2560 = vmatprep.subr.bf16.mxu0 0
  %2561 = vmatpush2.bf16.xpose.msra.mxu0 0
  %2562 = vmatprep.mubr.bf16.mxu0 0
  %2563 = vmatmul.mubr.bf16.gmra.mxu0 %v2525
  %v2564 = vpop.f32.mrf.mxu0
  %v2565 = vadd.f32 0.0, %v2564
  %v2566 = vpop.f32.mrf.mxu0
  %v2567 = vpop.f32.mrf.mxu0
  %v2568 = vadd.f32 0.0, %v2567
  %v2569 = vpop.f32.mrf.mxu0
  %2570 = vdwg.mxu0
  %2571 = vrot.lane.b32.xlu0 %v2037, 112
  %v2572 = vpop.permute.xlu0 %2571
  %2573 = vrot.lane.b32.xlu0 %v2037, 80
  %v2574 = vpop.permute.xlu0 %2573
  %v2576 = vsel %vm497, %v2572, 0
  %v2579 = vsel %vm497, %v2574, 0
  %2581 = vmatprep.subr.bf16.mxu0 0
  %2582 = vmatpush1.bf16.xpose.msra.mxu0 0
  %2583 = vmatprep.subr.bf16.mxu0 0
  %2584 = vmatpush1.bf16.xpose.msra.mxu0 0
  %2585 = vmatprep.subr.bf16.mxu0 0
  %2586 = vmatpush1.bf16.xpose.msra.mxu0 0
  %2587 = vmatprep.subr.bf16.mxu0 0
  %2588 = vmatpush1.bf16.xpose.msra.mxu0 0
  %2589 = vmatprep.subr.bf16.mxu0 0
  %2590 = vmatpush1.bf16.xpose.msra.mxu0 0
  %2591 = vmatprep.subr.bf16.mxu0 0
  %2592 = vmatpush1.bf16.xpose.msra.mxu0 0
  %2593 = vmatprep.subr.bf16.mxu0 0
  %2594 = vmatpush1.bf16.xpose.msra.mxu0 0
  %2595 = vmatprep.subr.bf16.mxu0 0
  %2596 = vmatpush1.bf16.xpose.msra.mxu0 %v2579
  %2597 = vmatprep.subr.bf16.mxu0 0
  %2598 = vmatpush2.bf16.xpose.msra.mxu0 0
  %2599 = vmatprep.subr.bf16.mxu0 0
  %2600 = vmatpush2.bf16.xpose.msra.mxu0 0
  %2601 = vmatprep.subr.bf16.mxu0 0
  %2602 = vmatpush2.bf16.xpose.msra.mxu0 0
  %2603 = vmatprep.subr.bf16.mxu0 0
  %2604 = vmatpush2.bf16.xpose.msra.mxu0 0
  %2605 = vmatprep.subr.bf16.mxu0 0
  %2606 = vmatpush2.bf16.xpose.msra.mxu0 0
  %2607 = vmatprep.subr.bf16.mxu0 0
  %2608 = vmatpush2.bf16.xpose.msra.mxu0 0
  %2609 = vmatprep.subr.bf16.mxu0 0
  %2610 = vmatpush2.bf16.xpose.msra.mxu0 0
  %2611 = vmatprep.subr.bf16.mxu0 0
  %2612 = vmatpush2.bf16.xpose.msra.mxu0 0
  %2613 = vmatprep.mubr.bf16.mxu0 0
  %2614 = vmatmul.mubr.bf16.gmra.mxu0 %v2576
  %v2615 = vpop.f32.mrf.mxu0
  %v2616 = vadd.f32 0.0, %v2615
  %v2617 = vpop.f32.mrf.mxu0
  %v2618 = vpop.f32.mrf.mxu0
  %v2619 = vadd.f32 0.0, %v2618
  %v2620 = vpop.f32.mrf.mxu0
  %2621 = vdwg.mxu0
  %v2622 = vsel %vm595, %v2565, -inf
  %2623 = vmax.xlane.f32.xlu0 %v2622
  %v2624 = vpop.xlane.xlu0 %2623
  %v2625 = vsel %vm595, %v2568, -inf
  %2626 = vmax.xlane.f32.xlu0 %v2625
  %v2627 = vpop.xlane.xlu0 %2626
  %v2628 = vsel %vm595, %v2616, -inf
  %2629 = vmax.xlane.f32.xlu0 %v2628
  %v2630 = vpop.xlane.xlu0 %2629
  %v2631 = vsel %vm595, %v2619, -inf
  %2632 = vmax.xlane.f32.xlu0 %v2631
  %v2633 = vpop.xlane.xlu0 %2632
  %v2634 = vsub.f32 %v2565, %v2624
  %v2635 = vsub.f32 %v2568, %v2627
  %v2636 = vsub.f32 %v2616, %v2630
  %v2637 = vsub.f32 %v2619, %v2633
  %v2638 = vmul.f32 %v2634, 1.442695
  %v2639 = vpow.pop %v2638
  %v2640 = vmul.f32 %v2635, 1.442695
  %v2641 = vpow.pop %v2640
  %v2642 = vmul.f32 %v2636, 1.442695
  %v2643 = vpow.pop %v2642
  %v2644 = vmul.f32 %v2637, 1.442695
  %v2645 = vpow.pop %v2644
  %v2646 = vsel %vm595, %v2639, 0.0
  %2647 = vadd.xlane.f32.xlu0 %v2646
  %v2648 = vpop.xlane.xlu0 %2647
  %v2649 = vsel %vm595, %v2641, 0.0
  %2650 = vadd.xlane.f32.xlu0 %v2649
  %v2651 = vpop.xlane.xlu0 %2650
  %v2652 = vsel %vm595, %v2643, 0.0
  %2653 = vadd.xlane.f32.xlu0 %v2652
  %v2654 = vpop.xlane.xlu0 %2653
  %v2655 = vsel %vm595, %v2645, 0.0
  %2656 = vadd.xlane.f32.xlu0 %v2655
  %v2657 = vpop.xlane.xlu0 %2656
  %v2658 = vrcp.pop %v2648
  %v2659 = vrcp.pop %v2651
  %v2660 = vrcp.pop %v2654
  %v2661 = vrcp.pop %v2657
  %v2662 = vmul.f32 %v2639, %v2658
  %v2663 = vmul.f32 %v2641, %v2659
  %v2664 = vmul.f32 %v2643, %v2660
  %v2665 = vmul.f32 %v2645, %v2661
  %v2666 = vpack.c.bf16 %v2663, %v2662
  %v2667 = vpack.c.bf16 %v2665, %v2664
  %2668 = vrot.lane.b32.xlu0 %v2036, 48
  %v2669 = vpop.permute.xlu0 %2668
  %v2672 = vsel %vm595, %v2666, 0
  %2674 = vmatprep.subr.bf16.mxu0 0
  %2675 = vmatpush1.bf16.msra.mxu0 0
  %2676 = vmatprep.subr.bf16.mxu0 0
  %2677 = vmatpush1.bf16.msra.mxu0 0
  %2678 = vmatprep.subr.bf16.mxu0 0
  %2679 = vmatpush1.bf16.msra.mxu0 0
  %2680 = vmatprep.subr.bf16.mxu0 0
  %2681 = vmatpush1.bf16.msra.mxu0 0
  %2682 = vmatprep.subr.bf16.mxu0 0
  %2683 = vmatpush1.bf16.msra.mxu0 0
  %2684 = vmatprep.subr.bf16.mxu0 0
  %2685 = vmatpush1.bf16.msra.mxu0 0
  %2686 = vmatprep.subr.bf16.mxu0 0
  %2687 = vmatpush1.bf16.msra.mxu0 0
  %2688 = vmatprep.subr.bf16.mxu0 0
  %2689 = vmatpush1.bf16.msra.mxu0 %v2669
  %2690 = vmatprep.subr.bf16.mxu0 0
  %2691 = vmatpush2.bf16.msra.mxu0 0
  %2692 = vmatprep.subr.bf16.mxu0 0
  %2693 = vmatpush2.bf16.msra.mxu0 0
  %2694 = vmatprep.subr.bf16.mxu0 0
  %2695 = vmatpush2.bf16.msra.mxu0 0
  %2696 = vmatprep.subr.bf16.mxu0 0
  %2697 = vmatpush2.bf16.msra.mxu0 0
  %2698 = vmatprep.subr.bf16.mxu0 0
  %2699 = vmatpush2.bf16.msra.mxu0 0
  %2700 = vmatprep.subr.bf16.mxu0 0
  %2701 = vmatpush2.bf16.msra.mxu0 0
  %2702 = vmatprep.subr.bf16.mxu0 0
  %2703 = vmatpush2.bf16.msra.mxu0 0
  %2704 = vmatprep.subr.bf16.mxu0 0
  %2705 = vmatpush2.bf16.msra.mxu0 0
  %2706 = vmatprep.mubr.bf16.mxu0 0
  %2707 = vmatmul.mubr.bf16.gmra.mxu0 %v2672
  %v2708 = vpop.f32.mrf.mxu0
  %v2709 = vadd.f32 0.0, %v2708
  %v2710 = vpop.f32.mrf.mxu0
  %v2711 = vpop.f32.mrf.mxu0
  %v2712 = vadd.f32 0.0, %v2711
  %v2713 = vpop.f32.mrf.mxu0
  %2714 = vdwg.mxu0
  %2715 = vrot.lane.b32.xlu0 %v2037, 48
  %v2716 = vpop.permute.xlu0 %2715
  %v2719 = vsel %vm595, %v2667, 0
  %2721 = vmatprep.subr.bf16.mxu0 0
  %2722 = vmatpush1.bf16.msra.mxu0 0
  %2723 = vmatprep.subr.bf16.mxu0 0
  %2724 = vmatpush1.bf16.msra.mxu0 0
  %2725 = vmatprep.subr.bf16.mxu0 0
  %2726 = vmatpush1.bf16.msra.mxu0 0
  %2727 = vmatprep.subr.bf16.mxu0 0
  %2728 = vmatpush1.bf16.msra.mxu0 0
  %2729 = vmatprep.subr.bf16.mxu0 0
  %2730 = vmatpush1.bf16.msra.mxu0 0
  %2731 = vmatprep.subr.bf16.mxu0 0
  %2732 = vmatpush1.bf16.msra.mxu0 0
  %2733 = vmatprep.subr.bf16.mxu0 0
  %2734 = vmatpush1.bf16.msra.mxu0 0
  %2735 = vmatprep.subr.bf16.mxu0 0
  %2736 = vmatpush1.bf16.msra.mxu0 %v2716
  %2737 = vmatprep.subr.bf16.mxu0 0
  %2738 = vmatpush2.bf16.msra.mxu0 0
  %2739 = vmatprep.subr.bf16.mxu0 0
  %2740 = vmatpush2.bf16.msra.mxu0 0
  %2741 = vmatprep.subr.bf16.mxu0 0
  %2742 = vmatpush2.bf16.msra.mxu0 0
  %2743 = vmatprep.subr.bf16.mxu0 0
  %2744 = vmatpush2.bf16.msra.mxu0 0
  %2745 = vmatprep.subr.bf16.mxu0 0
  %2746 = vmatpush2.bf16.msra.mxu0 0
  %2747 = vmatprep.subr.bf16.mxu0 0
  %2748 = vmatpush2.bf16.msra.mxu0 0
  %2749 = vmatprep.subr.bf16.mxu0 0
  %2750 = vmatpush2.bf16.msra.mxu0 0
  %2751 = vmatprep.subr.bf16.mxu0 0
  %2752 = vmatpush2.bf16.msra.mxu0 0
  %2753 = vmatprep.mubr.bf16.mxu0 0
  %2754 = vmatmul.mubr.bf16.gmra.mxu0 %v2719
  %v2755 = vpop.f32.mrf.mxu0
  %v2756 = vadd.f32 0.0, %v2755
  %v2757 = vpop.f32.mrf.mxu0
  %v2758 = vpop.f32.mrf.mxu0
  %v2759 = vadd.f32 0.0, %v2758
  %v2760 = vpop.f32.mrf.mxu0
  %2761 = vdwg.mxu0
  %2762 = vrot.lane.b32.xlu0 %v2036, 104
  %v2763 = vpop.permute.xlu0 %2762
  %2764 = vrot.lane.b32.xlu0 %v2036, 72
  %v2765 = vpop.permute.xlu0 %2764
  %v2767 = vsel %vm497, %v2763, 0
  %v2770 = vsel %vm497, %v2765, 0
  %2772 = vmatprep.subr.bf16.mxu0 0
  %2773 = vmatpush1.bf16.xpose.msra.mxu0 0
  %2774 = vmatprep.subr.bf16.mxu0 0
  %2775 = vmatpush1.bf16.xpose.msra.mxu0 0
  %2776 = vmatprep.subr.bf16.mxu0 0
  %2777 = vmatpush1.bf16.xpose.msra.mxu0 0
  %2778 = vmatprep.subr.bf16.mxu0 0
  %2779 = vmatpush1.bf16.xpose.msra.mxu0 0
  %2780 = vmatprep.subr.bf16.mxu0 0
  %2781 = vmatpush1.bf16.xpose.msra.mxu0 0
  %2782 = vmatprep.subr.bf16.mxu0 0
  %2783 = vmatpush1.bf16.xpose.msra.mxu0 0
  %2784 = vmatprep.subr.bf16.mxu0 0
  %2785 = vmatpush1.bf16.xpose.msra.mxu0 0
  %2786 = vmatprep.subr.bf16.mxu0 0
  %2787 = vmatpush1.bf16.xpose.msra.mxu0 %v2770
  %2788 = vmatprep.subr.bf16.mxu0 0
  %2789 = vmatpush2.bf16.xpose.msra.mxu0 0
  %2790 = vmatprep.subr.bf16.mxu0 0
  %2791 = vmatpush2.bf16.xpose.msra.mxu0 0
  %2792 = vmatprep.subr.bf16.mxu0 0
  %2793 = vmatpush2.bf16.xpose.msra.mxu0 0
  %2794 = vmatprep.subr.bf16.mxu0 0
  %2795 = vmatpush2.bf16.xpose.msra.mxu0 0
  %2796 = vmatprep.subr.bf16.mxu0 0
  %2797 = vmatpush2.bf16.xpose.msra.mxu0 0
  %2798 = vmatprep.subr.bf16.mxu0 0
  %2799 = vmatpush2.bf16.xpose.msra.mxu0 0
  %2800 = vmatprep.subr.bf16.mxu0 0
  %2801 = vmatpush2.bf16.xpose.msra.mxu0 0
  %2802 = vmatprep.subr.bf16.mxu0 0
  %2803 = vmatpush2.bf16.xpose.msra.mxu0 0
  %2804 = vmatprep.mubr.bf16.mxu0 0
  %2805 = vmatmul.mubr.bf16.gmra.mxu0 %v2767
  %v2806 = vpop.f32.mrf.mxu0
  %v2807 = vadd.f32 0.0, %v2806
  %v2808 = vpop.f32.mrf.mxu0
  %v2809 = vpop.f32.mrf.mxu0
  %v2810 = vadd.f32 0.0, %v2809
  %v2811 = vpop.f32.mrf.mxu0
  %2812 = vdwg.mxu0
  %2813 = vrot.lane.b32.xlu0 %v2037, 104
  %v2814 = vpop.permute.xlu0 %2813
  %2815 = vrot.lane.b32.xlu0 %v2037, 72
  %v2816 = vpop.permute.xlu0 %2815
  %v2818 = vsel %vm497, %v2814, 0
  %v2821 = vsel %vm497, %v2816, 0
  %2823 = vmatprep.subr.bf16.mxu0 0
  %2824 = vmatpush1.bf16.xpose.msra.mxu0 0
  %2825 = vmatprep.subr.bf16.mxu0 0
  %2826 = vmatpush1.bf16.xpose.msra.mxu0 0
  %2827 = vmatprep.subr.bf16.mxu0 0
  %2828 = vmatpush1.bf16.xpose.msra.mxu0 0
  %2829 = vmatprep.subr.bf16.mxu0 0
  %2830 = vmatpush1.bf16.xpose.msra.mxu0 0
  %2831 = vmatprep.subr.bf16.mxu0 0
  %2832 = vmatpush1.bf16.xpose.msra.mxu0 0
  %2833 = vmatprep.subr.bf16.mxu0 0
  %2834 = vmatpush1.bf16.xpose.msra.mxu0 0
  %2835 = vmatprep.subr.bf16.mxu0 0
  %2836 = vmatpush1.bf16.xpose.msra.mxu0 0
  %2837 = vmatprep.subr.bf16.mxu0 0
  %2838 = vmatpush1.bf16.xpose.msra.mxu0 %v2821
  %2839 = vmatprep.subr.bf16.mxu0 0
  %2840 = vmatpush2.bf16.xpose.msra.mxu0 0
  %2841 = vmatprep.subr.bf16.mxu0 0
  %2842 = vmatpush2.bf16.xpose.msra.mxu0 0
  %2843 = vmatprep.subr.bf16.mxu0 0
  %2844 = vmatpush2.bf16.xpose.msra.mxu0 0
  %2845 = vmatprep.subr.bf16.mxu0 0
  %2846 = vmatpush2.bf16.xpose.msra.mxu0 0
  %2847 = vmatprep.subr.bf16.mxu0 0
  %2848 = vmatpush2.bf16.xpose.msra.mxu0 0
  %2849 = vmatprep.subr.bf16.mxu0 0
  %2850 = vmatpush2.bf16.xpose.msra.mxu0 0
  %2851 = vmatprep.subr.bf16.mxu0 0
  %2852 = vmatpush2.bf16.xpose.msra.mxu0 0
  %2853 = vmatprep.subr.bf16.mxu0 0
  %2854 = vmatpush2.bf16.xpose.msra.mxu0 0
  %2855 = vmatprep.mubr.bf16.mxu0 0
  %2856 = vmatmul.mubr.bf16.gmra.mxu0 %v2818
  %v2857 = vpop.f32.mrf.mxu0
  %v2858 = vadd.f32 0.0, %v2857
  %v2859 = vpop.f32.mrf.mxu0
  %v2860 = vpop.f32.mrf.mxu0
  %v2861 = vadd.f32 0.0, %v2860
  %v2862 = vpop.f32.mrf.mxu0
  %2863 = vdwg.mxu0
  %v2864 = vsel %vm595, %v2807, -inf
  %2865 = vmax.xlane.f32.xlu0 %v2864
  %v2866 = vpop.xlane.xlu0 %2865
  %v2867 = vsel %vm595, %v2810, -inf
  %2868 = vmax.xlane.f32.xlu0 %v2867
  %v2869 = vpop.xlane.xlu0 %2868
  %v2870 = vsel %vm595, %v2858, -inf
  %2871 = vmax.xlane.f32.xlu0 %v2870
  %v2872 = vpop.xlane.xlu0 %2871
  %v2873 = vsel %vm595, %v2861, -inf
  %2874 = vmax.xlane.f32.xlu0 %v2873
  %v2875 = vpop.xlane.xlu0 %2874
  %v2876 = vsub.f32 %v2807, %v2866
  %v2877 = vsub.f32 %v2810, %v2869
  %v2878 = vsub.f32 %v2858, %v2872
  %v2879 = vsub.f32 %v2861, %v2875
  %v2880 = vmul.f32 %v2876, 1.442695
  %v2881 = vpow.pop %v2880
  %v2882 = vmul.f32 %v2877, 1.442695
  %v2883 = vpow.pop %v2882
  %v2884 = vmul.f32 %v2878, 1.442695
  %v2885 = vpow.pop %v2884
  %v2886 = vmul.f32 %v2879, 1.442695
  %v2887 = vpow.pop %v2886
  %v2888 = vsel %vm595, %v2881, 0.0
  %2889 = vadd.xlane.f32.xlu0 %v2888
  %v2890 = vpop.xlane.xlu0 %2889
  %v2891 = vsel %vm595, %v2883, 0.0
  %2892 = vadd.xlane.f32.xlu0 %v2891
  %v2893 = vpop.xlane.xlu0 %2892
  %v2894 = vsel %vm595, %v2885, 0.0
  %2895 = vadd.xlane.f32.xlu0 %v2894
  %v2896 = vpop.xlane.xlu0 %2895
  %v2897 = vsel %vm595, %v2887, 0.0
  %2898 = vadd.xlane.f32.xlu0 %v2897
  %v2899 = vpop.xlane.xlu0 %2898
  %v2900 = vrcp.pop %v2890
  %v2901 = vrcp.pop %v2893
  %v2902 = vrcp.pop %v2896
  %v2903 = vrcp.pop %v2899
  %v2904 = vmul.f32 %v2881, %v2900
  %v2905 = vmul.f32 %v2883, %v2901
  %v2906 = vmul.f32 %v2885, %v2902
  %v2907 = vmul.f32 %v2887, %v2903
  %v2908 = vpack.c.bf16 %v2905, %v2904
  %v2909 = vpack.c.bf16 %v2907, %v2906
  %2910 = vrot.lane.b32.xlu0 %v2036, 40
  %v2911 = vpop.permute.xlu0 %2910
  %v2914 = vsel %vm595, %v2908, 0
  %2916 = vmatprep.subr.bf16.mxu0 0
  %2917 = vmatpush1.bf16.msra.mxu0 0
  %2918 = vmatprep.subr.bf16.mxu0 0
  %2919 = vmatpush1.bf16.msra.mxu0 0
  %2920 = vmatprep.subr.bf16.mxu0 0
  %2921 = vmatpush1.bf16.msra.mxu0 0
  %2922 = vmatprep.subr.bf16.mxu0 0
  %2923 = vmatpush1.bf16.msra.mxu0 0
  %2924 = vmatprep.subr.bf16.mxu0 0
  %2925 = vmatpush1.bf16.msra.mxu0 0
  %2926 = vmatprep.subr.bf16.mxu0 0
  %2927 = vmatpush1.bf16.msra.mxu0 0
  %2928 = vmatprep.subr.bf16.mxu0 0
  %2929 = vmatpush1.bf16.msra.mxu0 0
  %2930 = vmatprep.subr.bf16.mxu0 0
  %2931 = vmatpush1.bf16.msra.mxu0 %v2911
  %2932 = vmatprep.subr.bf16.mxu0 0
  %2933 = vmatpush2.bf16.msra.mxu0 0
  %2934 = vmatprep.subr.bf16.mxu0 0
  %2935 = vmatpush2.bf16.msra.mxu0 0
  %2936 = vmatprep.subr.bf16.mxu0 0
  %2937 = vmatpush2.bf16.msra.mxu0 0
  %2938 = vmatprep.subr.bf16.mxu0 0
  %2939 = vmatpush2.bf16.msra.mxu0 0
  %2940 = vmatprep.subr.bf16.mxu0 0
  %2941 = vmatpush2.bf16.msra.mxu0 0
  %2942 = vmatprep.subr.bf16.mxu0 0
  %2943 = vmatpush2.bf16.msra.mxu0 0
  %2944 = vmatprep.subr.bf16.mxu0 0
  %2945 = vmatpush2.bf16.msra.mxu0 0
  %2946 = vmatprep.subr.bf16.mxu0 0
  %2947 = vmatpush2.bf16.msra.mxu0 0
  %2948 = vmatprep.mubr.bf16.mxu0 0
  %2949 = vmatmul.mubr.bf16.gmra.mxu0 %v2914
  %v2950 = vpop.f32.mrf.mxu0
  %v2951 = vadd.f32 0.0, %v2950
  %v2952 = vpop.f32.mrf.mxu0
  %v2953 = vpop.f32.mrf.mxu0
  %v2954 = vadd.f32 0.0, %v2953
  %v2955 = vpop.f32.mrf.mxu0
  %2956 = vdwg.mxu0
  %2957 = vrot.lane.b32.xlu0 %v2037, 40
  %v2958 = vpop.permute.xlu0 %2957
  %v2961 = vsel %vm595, %v2909, 0
  %2963 = vmatprep.subr.bf16.mxu0 0
  %2964 = vmatpush1.bf16.msra.mxu0 0
  %2965 = vmatprep.subr.bf16.mxu0 0
  %2966 = vmatpush1.bf16.msra.mxu0 0
  %2967 = vmatprep.subr.bf16.mxu0 0
  %2968 = vmatpush1.bf16.msra.mxu0 0
  %2969 = vmatprep.subr.bf16.mxu0 0
  %2970 = vmatpush1.bf16.msra.mxu0 0
  %2971 = vmatprep.subr.bf16.mxu0 0
  %2972 = vmatpush1.bf16.msra.mxu0 0
  %2973 = vmatprep.subr.bf16.mxu0 0
  %2974 = vmatpush1.bf16.msra.mxu0 0
  %2975 = vmatprep.subr.bf16.mxu0 0
  %2976 = vmatpush1.bf16.msra.mxu0 0
  %2977 = vmatprep.subr.bf16.mxu0 0
  %2978 = vmatpush1.bf16.msra.mxu0 %v2958
  %2979 = vmatprep.subr.bf16.mxu0 0
  %2980 = vmatpush2.bf16.msra.mxu0 0
  %2981 = vmatprep.subr.bf16.mxu0 0
  %2982 = vmatpush2.bf16.msra.mxu0 0
  %2983 = vmatprep.subr.bf16.mxu0 0
  %2984 = vmatpush2.bf16.msra.mxu0 0
  %2985 = vmatprep.subr.bf16.mxu0 0
  %2986 = vmatpush2.bf16.msra.mxu0 0
  %2987 = vmatprep.subr.bf16.mxu0 0
  %2988 = vmatpush2.bf16.msra.mxu0 0
  %2989 = vmatprep.subr.bf16.mxu0 0
  %2990 = vmatpush2.bf16.msra.mxu0 0
  %2991 = vmatprep.subr.bf16.mxu0 0
  %2992 = vmatpush2.bf16.msra.mxu0 0
  %2993 = vmatprep.subr.bf16.mxu0 0
  %2994 = vmatpush2.bf16.msra.mxu0 0
  %2995 = vmatprep.mubr.bf16.mxu0 0
  %2996 = vmatmul.mubr.bf16.gmra.mxu0 %v2961
  %v2997 = vpop.f32.mrf.mxu0
  %v2998 = vadd.f32 0.0, %v2997
  %v2999 = vpop.f32.mrf.mxu0
  %v3000 = vpop.f32.mrf.mxu0
  %v3001 = vadd.f32 0.0, %v3000
  %v3002 = vpop.f32.mrf.mxu0
  %3003 = vdwg.mxu0
  %3008 = vrot.lane.b32.xlu0 %v2467, 8
  %v3009 = vpop.permute.xlu0 %3008
  %3010 = vrot.lane.b32.xlu0 %v2470, 8
  %v3011 = vpop.permute.xlu0 %3010
  %3012 = vrot.lane.b32.xlu0 %v2514, 8
  %v3013 = vpop.permute.xlu0 %3012
  %3014 = vrot.lane.b32.xlu0 %v2517, 8
  %v3015 = vpop.permute.xlu0 %3014
  %3024 = vrot.lane.b32.xlu0 %v2709, 16
  %v3025 = vpop.permute.xlu0 %3024
  %3026 = vrot.lane.b32.xlu0 %v2712, 16
  %v3027 = vpop.permute.xlu0 %3026
  %3028 = vrot.lane.b32.xlu0 %v2756, 16
  %v3029 = vpop.permute.xlu0 %3028
  %3030 = vrot.lane.b32.xlu0 %v2759, 16
  %v3031 = vpop.permute.xlu0 %3030
  %3040 = vrot.lane.b32.xlu0 %v2951, 24
  %v3041 = vpop.permute.xlu0 %3040
  %3042 = vrot.lane.b32.xlu0 %v2954, 24
  %v3043 = vpop.permute.xlu0 %3042
  %3044 = vrot.lane.b32.xlu0 %v2998, 24
  %v3045 = vpop.permute.xlu0 %3044
  %3046 = vrot.lane.b32.xlu0 %v3001, 24
  %v3047 = vpop.permute.xlu0 %3046
  %v3052 = vsel %vm497, %v2225, %v3009
  %v3053 = vsel %vm497, %v2228, %v3011
  %v3054 = vsel %vm497, %v2272, %v3013
  %v3055 = vsel %vm497, %v2275, %v3015
  %v3056 = vsel %vm595, %v3052, %v3025
  %v3057 = vsel %vm595, %v3053, %v3027
  %v3058 = vsel %vm595, %v3054, %v3029
  %v3059 = vsel %vm595, %v3055, %v3031
  %v3060 = vsel %vm1518, %v3056, %v3041
  %v3061 = vsel %vm1518, %v3057, %v3043
  %v3062 = vsel %vm1518, %v3058, %v3045
  %v3063 = vsel %vm1518, %v3059, %v3047
  %v3064 = vpack.c.bf16 %v3061, %v3060
  %v3065 = vpack.c.bf16 %v3063, %v3062
  %v3066 = vld [vmem:[%s2 + $0x31] sm:$0x1]
  %v3067 = vlaneseq
  %v3068 = vshrl.u32 %v3067, 7
  %v3069 = vsub.s32 0, %v3068
  %v3070 = vrot.slane %v3066, %v3069
  %v3075 = vunpack.c.l.b16 %v1946
  %v3076 = vunpack.c.l.b16 %v1947
  %v3077 = vunpack.c.l.b16 %v1948
  %v3078 = vunpack.c.l.b16 %v1949
  %v3079 = vpack.c.b16 %v3076, %v3075
  %v3080 = vpack.c.b16 %v3078, %v3077
  %v3084 = vsel %vm328, %v3064, 0
  %v3087 = vsel %vm328, %v3065, 0
  %3089 = vmatprep.subr.bf16.mxu0 0
  %3090 = vmatpush1.bf16.msra.mxu0 0
  %3091 = vmatprep.subr.bf16.mxu0 0
  %3092 = vmatpush1.bf16.msra.mxu0 0
  %3093 = vmatprep.subr.bf16.mxu0 0
  %3094 = vmatpush1.bf16.msra.mxu0 0
  %3095 = vmatprep.subr.bf16.mxu0 0
  %3096 = vmatpush1.bf16.msra.mxu0 0
  %3097 = vmatprep.subr.bf16.mxu0 0
  %3098 = vmatpush1.bf16.msra.mxu0 0
  %3099 = vmatprep.subr.bf16.mxu0 0
  %3100 = vmatpush1.bf16.msra.mxu0 0
  %3101 = vmatprep.subr.bf16.mxu0 0
  %3102 = vmatpush1.bf16.msra.mxu0 %v3080
  %3103 = vmatprep.subr.bf16.mxu0 0
  %3104 = vmatpush1.bf16.msra.mxu0 %v3079
  %3105 = vmatprep.subr.bf16.mxu0 0
  %3106 = vmatpush2.bf16.msra.mxu0 0
  %3107 = vmatprep.subr.bf16.mxu0 0
  %3108 = vmatpush2.bf16.msra.mxu0 0
  %3109 = vmatprep.subr.bf16.mxu0 0
  %3110 = vmatpush2.bf16.msra.mxu0 0
  %3111 = vmatprep.subr.bf16.mxu0 0
  %3112 = vmatpush2.bf16.msra.mxu0 0
  %3113 = vmatprep.subr.bf16.mxu0 0
  %3114 = vmatpush2.bf16.msra.mxu0 0
  %3115 = vmatprep.subr.bf16.mxu0 0
  %3116 = vmatpush2.bf16.msra.mxu0 0
  %3117 = vmatprep.subr.bf16.mxu0 0
  %3118 = vmatpush2.bf16.msra.mxu0 0
  %3119 = vmatprep.subr.bf16.mxu0 0
  %3120 = vmatpush2.bf16.msra.mxu0 0
  %3121 = vmatprep.mubr.bf16.mxu0 0
  %3122 = vmatmul.mubr.bf16.gmra.mxu0 %v3084
  %v3123 = vpop.f32.mrf.mxu0
  %v3124 = vadd.f32 %v3070, %v3123
  %v3125 = vpop.f32.mrf.mxu0
  %v3126 = vpop.f32.mrf.mxu0
  %v3127 = vadd.f32 %v3070, %v3126
  %v3128 = vpop.f32.mrf.mxu0
  %3129 = vmatprep.mubr.bf16.mxu0 0
  %3130 = vmatmul.mubr.bf16.gmra.mxu0 %v3087
  %v3131 = vpop.f32.mrf.mxu0
  %v3132 = vadd.f32 %v3070, %v3131
  %v3133 = vpop.f32.mrf.mxu0
  %v3134 = vpop.f32.mrf.mxu0
  %v3135 = vadd.f32 %v3070, %v3134
  %v3136 = vpop.f32.mrf.mxu0
  %3137 = vdwg.mxu0
  %v3138 = vadd.f32 %v3124, %v1938
  %v3139 = vadd.f32 %v3127, %v1939
  %v3140 = vadd.f32 %v3132, %v1940
  %v3141 = vadd.f32 %v3135, %v1941
  %v3142 = vld [vmem:[%s2 + $0x32] sm:$0x1]
  %v3143 = vld [vmem:[%s2 + $0x33] sm:$0x1]
  %v3144 = vsel %vm328, %v3138, 0.0
  %3145 = vadd.xlane.f32.xlu0 %v3144
  %v3146 = vpop.xlane.xlu0 %3145
  %v3147 = vsel %vm328, %v3139, 0.0
  %3148 = vadd.xlane.f32.xlu0 %v3147
  %v3149 = vpop.xlane.xlu0 %3148
  %v3150 = vsel %vm328, %v3140, 0.0
  %3151 = vadd.xlane.f32.xlu0 %v3150
  %v3152 = vpop.xlane.xlu0 %3151
  %v3153 = vsel %vm328, %v3141, 0.0
  %3154 = vadd.xlane.f32.xlu0 %v3153
  %v3155 = vpop.xlane.xlu0 %3154
  %v3156 = vmul.f32 %v3146, %v341
  %v3157 = vmul.f32 %v3149, %v341
  %v3158 = vmul.f32 %v3152, %v341
  %v3159 = vmul.f32 %v3155, %v341
  %v3160 = vsub.f32 %v3138, %v3156
  %v3161 = vsub.f32 %v3139, %v3157
  %v3162 = vsub.f32 %v3140, %v3158
  %v3163 = vsub.f32 %v3141, %v3159
  %v3164 = vmul.f32 %v3160, %v3160
  %v3165 = vmul.f32 %v3161, %v3161
  %v3166 = vmul.f32 %v3162, %v3162
  %v3167 = vmul.f32 %v3163, %v3163
  %v3168 = vsel %vm328, %v3164, 0.0
  %3169 = vadd.xlane.f32.xlu0 %v3168
  %v3170 = vpop.xlane.xlu0 %3169
  %v3171 = vsel %vm328, %v3165, 0.0
  %3172 = vadd.xlane.f32.xlu0 %v3171
  %v3173 = vpop.xlane.xlu0 %3172
  %v3174 = vsel %vm328, %v3166, 0.0
  %3175 = vadd.xlane.f32.xlu0 %v3174
  %v3176 = vpop.xlane.xlu0 %3175
  %v3177 = vsel %vm328, %v3167, 0.0
  %3178 = vadd.xlane.f32.xlu0 %v3177
  %v3179 = vpop.xlane.xlu0 %3178
  %v3180 = vmul.f32 %v3170, %v341
  %v3181 = vmul.f32 %v3173, %v341
  %v3182 = vmul.f32 %v3176, %v341
  %v3183 = vmul.f32 %v3179, %v341
  %v3184 = vadd.f32 %v3180, 1e-12
  %v3185 = vadd.f32 %v3181, 1e-12
  %v3186 = vadd.f32 %v3182, 1e-12
  %v3187 = vadd.f32 %v3183, 1e-12
  %v3188 = vrsqrt.pop %v3184
  %v3189 = vrsqrt.pop %v3185
  %v3190 = vrsqrt.pop %v3186
  %v3191 = vrsqrt.pop %v3187
  %v3192 = vmul.f32 %v3160, %v3188
  %v3193 = vmul.f32 %v3161, %v3189
  %v3194 = vmul.f32 %v3162, %v3190
  %v3195 = vmul.f32 %v3163, %v3191
  %v3196 = vlaneseq
  %v3197 = vshrl.u32 %v3196, 7
  %v3198 = vsub.s32 0, %v3197
  %v3199 = vrot.slane %v3142, %v3198
  %v3200 = vmul.f32 %v3192, %v3199
  %v3201 = vmul.f32 %v3193, %v3199
  %v3202 = vmul.f32 %v3194, %v3199
  %v3203 = vmul.f32 %v3195, %v3199
  %v3204 = vlaneseq
  %v3205 = vshrl.u32 %v3204, 7
  %v3206 = vsub.s32 0, %v3205
  %v3207 = vrot.slane %v3143, %v3206
  %v3208 = vadd.f32 %v3200, %v3207
  %v3209 = vadd.f32 %v3201, %v3207
  %v3210 = vadd.f32 %v3202, %v3207
  %v3211 = vadd.f32 %v3203, %v3207
  %v3212 = vpack.c.bf16 %v3209, %v3208
  %v3213 = vpack.c.bf16 %v3211, %v3210
  %v3214 = vld [vmem:[%s2 + $0x34] sm:$0x1]
  %v3215 = vlaneseq
  %v3216 = vshrl.u32 %v3215, 7
  %v3217 = vsub.s32 0, %v3216
  %v3218 = vrot.slane %v3214, %v3217
  %v3223 = vunpack.c.l.b16 %v1950
  %v3224 = vunpack.c.l.b16 %v1951
  %v3225 = vunpack.c.l.b16 %v1952
  %v3226 = vunpack.c.l.b16 %v1953
  %v3227 = vpack.c.b16 %v3224, %v3223
  %v3228 = vpack.c.b16 %v3226, %v3225
  %v3232 = vsel %vm328, %v3212, 0
  %v3235 = vsel %vm328, %v3213, 0
  %3237 = vmatprep.subr.bf16.mxu0 0
  %3238 = vmatpush1.bf16.msra.mxu0 0
  %3239 = vmatprep.subr.bf16.mxu0 0
  %3240 = vmatpush1.bf16.msra.mxu0 0
  %3241 = vmatprep.subr.bf16.mxu0 0
  %3242 = vmatpush1.bf16.msra.mxu0 0
  %3243 = vmatprep.subr.bf16.mxu0 0
  %3244 = vmatpush1.bf16.msra.mxu0 0
  %3245 = vmatprep.subr.bf16.mxu0 0
  %3246 = vmatpush1.bf16.msra.mxu0 0
  %3247 = vmatprep.subr.bf16.mxu0 0
  %3248 = vmatpush1.bf16.msra.mxu0 0
  %3249 = vmatprep.subr.bf16.mxu0 0
  %3250 = vmatpush1.bf16.msra.mxu0 %v3228
  %3251 = vmatprep.subr.bf16.mxu0 0
  %3252 = vmatpush1.bf16.msra.mxu0 %v3227
  %3253 = vmatprep.subr.bf16.mxu0 0
  %3254 = vmatpush2.bf16.msra.mxu0 0
  %3255 = vmatprep.subr.bf16.mxu0 0
  %3256 = vmatpush2.bf16.msra.mxu0 0
  %3257 = vmatprep.subr.bf16.mxu0 0
  %3258 = vmatpush2.bf16.msra.mxu0 0
  %3259 = vmatprep.subr.bf16.mxu0 0
  %3260 = vmatpush2.bf16.msra.mxu0 0
  %3261 = vmatprep.subr.bf16.mxu0 0
  %3262 = vmatpush2.bf16.msra.mxu0 0
  %3263 = vmatprep.subr.bf16.mxu0 0
  %3264 = vmatpush2.bf16.msra.mxu0 0
  %3265 = vmatprep.subr.bf16.mxu0 0
  %3266 = vmatpush2.bf16.msra.mxu0 0
  %3267 = vmatprep.subr.bf16.mxu0 0
  %3268 = vmatpush2.bf16.msra.mxu0 0
  %3269 = vmatprep.mubr.bf16.mxu0 0
  %3270 = vmatmul.mubr.bf16.gmra.mxu0 %v3232
  %v3271 = vpop.f32.mrf.mxu0
  %v3272 = vadd.f32 %v3218, %v3271
  %v3273 = vpop.f32.mrf.mxu0
  %v3274 = vpop.f32.mrf.mxu0
  %v3275 = vadd.f32 %v3218, %v3274
  %v3276 = vpop.f32.mrf.mxu0
  %3277 = vmatprep.mubr.bf16.mxu0 0
  %3278 = vmatmul.mubr.bf16.gmra.mxu0 %v3235
  %v3279 = vpop.f32.mrf.mxu0
  %v3280 = vadd.f32 %v3218, %v3279
  %v3281 = vpop.f32.mrf.mxu0
  %v3282 = vpop.f32.mrf.mxu0
  %v3283 = vadd.f32 %v3218, %v3282
  %v3284 = vpop.f32.mrf.mxu0
  %3285 = vdwg.mxu0
  %v3286 = vmul.f32 %v3272, %v3272
  %v3287 = vmul.f32 %v3275, %v3275
  %v3288 = vmul.f32 %v3280, %v3280
  %v3289 = vmul.f32 %v3283, %v3283
  %v3290 = vmul.f32 %v3272, %v3286
  %v3291 = vmul.f32 %v3275, %v3287
  %v3292 = vmul.f32 %v3280, %v3288
  %v3293 = vmul.f32 %v3283, %v3289
  %v3294 = vmul.f32 %v3290, 0.044715
  %v3295 = vmul.f32 %v3291, 0.044715
  %v3296 = vmul.f32 %v3292, 0.044715
  %v3297 = vmul.f32 %v3293, 0.044715
  %v3298 = vadd.f32 %v3272, %v3294
  %v3299 = vadd.f32 %v3275, %v3295
  %v3300 = vadd.f32 %v3280, %v3296
  %v3301 = vadd.f32 %v3283, %v3297
  %v3302 = vmul.f32 %v3298, 0.7978846
  %v3303 = vmul.f32 %v3299, 0.7978846
  %v3304 = vmul.f32 %v3300, 0.7978846
  %v3305 = vmul.f32 %v3301, 0.7978846
  %v3306 = vtanh.pop %v3302
  %v3307 = vtanh.pop %v3303
  %v3308 = vtanh.pop %v3304
  %v3309 = vtanh.pop %v3305
  %v3310 = vadd.f32 %v3306, 1.0
  %v3311 = vadd.f32 %v3307, 1.0
  %v3312 = vadd.f32 %v3308, 1.0
  %v3313 = vadd.f32 %v3309, 1.0
  %v3314 = vmul.f32 %v3310, 0.5
  %v3315 = vmul.f32 %v3311, 0.5
  %v3316 = vmul.f32 %v3312, 0.5
  %v3317 = vmul.f32 %v3313, 0.5
  %v3318 = vmul.f32 %v3272, %v3314
  %v3319 = vmul.f32 %v3275, %v3315
  %v3320 = vmul.f32 %v3280, %v3316
  %v3321 = vmul.f32 %v3283, %v3317
  %v3322 = vpack.c.bf16 %v3319, %v3318
  %v3323 = vpack.c.bf16 %v3321, %v3320
  %v3324 = vld [vmem:[%s2 + $0x35] sm:$0x1]
  %v3325 = vlaneseq
  %v3326 = vshrl.u32 %v3325, 7
  %v3327 = vsub.s32 0, %v3326
  %v3328 = vrot.slane %v3324, %v3327
  %v3337 = vunpack.c.l.b16 %v1954
  %v3338 = vunpack.c.l.b16 %v1955
  %v3339 = vunpack.c.l.b16 %v1956
  %v3340 = vunpack.c.l.b16 %v1957
  %v3341 = vunpack.c.l.b16 %v1958
  %v3342 = vunpack.c.l.b16 %v1959
  %v3343 = vunpack.c.l.b16 %v1960
  %v3344 = vunpack.c.l.b16 %v1961
  %v3345 = vpack.c.b16 %v3338, %v3337
  %v3346 = vpack.c.b16 %v3340, %v3339
  %v3347 = vpack.c.b16 %v3342, %v3341
  %v3348 = vpack.c.b16 %v3344, %v3343
  %v3354 = vsel %vm1812, %v3322, 0
  %v3357 = vsel %vm1812, %v3323, 0
  %3359 = vmatprep.subr.bf16.mxu0 0
  %3360 = vmatpush1.bf16.msra.mxu0 0
  %3361 = vmatprep.subr.bf16.mxu0 0
  %3362 = vmatpush1.bf16.msra.mxu0 0
  %3363 = vmatprep.subr.bf16.mxu0 0
  %3364 = vmatpush1.bf16.msra.mxu0 0
  %3365 = vmatprep.subr.bf16.mxu0 0
  %3366 = vmatpush1.bf16.msra.mxu0 0
  %3367 = vmatprep.subr.bf16.mxu0 0
  %3368 = vmatpush1.bf16.msra.mxu0 %v3348
  %3369 = vmatprep.subr.bf16.mxu0 0
  %3370 = vmatpush1.bf16.msra.mxu0 %v3347
  %3371 = vmatprep.subr.bf16.mxu0 0
  %3372 = vmatpush1.bf16.msra.mxu0 %v3346
  %3373 = vmatprep.subr.bf16.mxu0 0
  %3374 = vmatpush1.bf16.msra.mxu0 %v3345
  %3375 = vmatprep.subr.bf16.mxu0 0
  %3376 = vmatpush2.bf16.msra.mxu0 0
  %3377 = vmatprep.subr.bf16.mxu0 0
  %3378 = vmatpush2.bf16.msra.mxu0 0
  %3379 = vmatprep.subr.bf16.mxu0 0
  %3380 = vmatpush2.bf16.msra.mxu0 0
  %3381 = vmatprep.subr.bf16.mxu0 0
  %3382 = vmatpush2.bf16.msra.mxu0 0
  %3383 = vmatprep.subr.bf16.mxu0 0
  %3384 = vmatpush2.bf16.msra.mxu0 0
  %3385 = vmatprep.subr.bf16.mxu0 0
  %3386 = vmatpush2.bf16.msra.mxu0 0
  %3387 = vmatprep.subr.bf16.mxu0 0
  %3388 = vmatpush2.bf16.msra.mxu0 0
  %3389 = vmatprep.subr.bf16.mxu0 0
  %3390 = vmatpush2.bf16.msra.mxu0 0
  %3391 = vmatprep.mubr.bf16.mxu0 0
  %3392 = vmatmul.mubr.bf16.gmra.mxu0 %v3354
  %v3393 = vpop.f32.mrf.mxu0
  %v3394 = vadd.f32 %v3328, %v3393
  %v3395 = vpop.f32.mrf.mxu0
  %v3396 = vpop.f32.mrf.mxu0
  %v3397 = vadd.f32 %v3328, %v3396
  %v3398 = vpop.f32.mrf.mxu0
  %3399 = vmatprep.mubr.bf16.mxu0 0
  %3400 = vmatmul.mubr.bf16.gmra.mxu0 %v3357
  %v3401 = vpop.f32.mrf.mxu0
  %v3402 = vadd.f32 %v3328, %v3401
  %v3403 = vpop.f32.mrf.mxu0
  %v3404 = vpop.f32.mrf.mxu0
  %v3405 = vadd.f32 %v3328, %v3404
  %v3406 = vpop.f32.mrf.mxu0
  %3407 = vdwg.mxu0
  %v3408 = vadd.f32 %v3394, %v3208
  %v3409 = vadd.f32 %v3397, %v3209
  %v3410 = vadd.f32 %v3402, %v3210
  %v3411 = vadd.f32 %v3405, %v3211
  %v3412 = vld [vmem:[%s2 + $0x36] sm:$0x1]
  %v3413 = vld [vmem:[%s2 + $0x37] sm:$0x1]
  %v3414 = vsel %vm328, %v3408, 0.0
  %3415 = vadd.xlane.f32.xlu0 %v3414
  %v3416 = vpop.xlane.xlu0 %3415
  %v3417 = vsel %vm328, %v3409, 0.0
  %3418 = vadd.xlane.f32.xlu0 %v3417
  %v3419 = vpop.xlane.xlu0 %3418
  %v3420 = vsel %vm328, %v3410, 0.0
  %3421 = vadd.xlane.f32.xlu0 %v3420
  %v3422 = vpop.xlane.xlu0 %3421
  %v3423 = vsel %vm328, %v3411, 0.0
  %3424 = vadd.xlane.f32.xlu0 %v3423
  %v3425 = vpop.xlane.xlu0 %3424
  %v3426 = vmul.f32 %v3416, %v341
  %v3427 = vmul.f32 %v3419, %v341
  %v3428 = vmul.f32 %v3422, %v341
  %v3429 = vmul.f32 %v3425, %v341
  %v3430 = vsub.f32 %v3408, %v3426
  %v3431 = vsub.f32 %v3409, %v3427
  %v3432 = vsub.f32 %v3410, %v3428
  %v3433 = vsub.f32 %v3411, %v3429
  %v3434 = vmul.f32 %v3430, %v3430
  %v3435 = vmul.f32 %v3431, %v3431
  %v3436 = vmul.f32 %v3432, %v3432
  %v3437 = vmul.f32 %v3433, %v3433
  %v3438 = vsel %vm328, %v3434, 0.0
  %3439 = vadd.xlane.f32.xlu0 %v3438
  %v3440 = vpop.xlane.xlu0 %3439
  %v3441 = vsel %vm328, %v3435, 0.0
  %3442 = vadd.xlane.f32.xlu0 %v3441
  %v3443 = vpop.xlane.xlu0 %3442
  %v3444 = vsel %vm328, %v3436, 0.0
  %3445 = vadd.xlane.f32.xlu0 %v3444
  %v3446 = vpop.xlane.xlu0 %3445
  %v3447 = vsel %vm328, %v3437, 0.0
  %3448 = vadd.xlane.f32.xlu0 %v3447
  %v3449 = vpop.xlane.xlu0 %3448
  %v3450 = vmul.f32 %v3440, %v341
  %v3451 = vmul.f32 %v3443, %v341
  %v3452 = vmul.f32 %v3446, %v341
  %v3453 = vmul.f32 %v3449, %v341
  %v3454 = vadd.f32 %v3450, 1e-12
  %v3455 = vadd.f32 %v3451, 1e-12
  %v3456 = vadd.f32 %v3452, 1e-12
  %v3457 = vadd.f32 %v3453, 1e-12
  %v3458 = vrsqrt.pop %v3454
  %v3459 = vrsqrt.pop %v3455
  %v3460 = vrsqrt.pop %v3456
  %v3461 = vrsqrt.pop %v3457
  %v3462 = vmul.f32 %v3430, %v3458
  %v3463 = vmul.f32 %v3431, %v3459
  %v3464 = vmul.f32 %v3432, %v3460
  %v3465 = vmul.f32 %v3433, %v3461
  %v3466 = vlaneseq
  %v3467 = vshrl.u32 %v3466, 7
  %v3468 = vsub.s32 0, %v3467
  %v3469 = vrot.slane %v3412, %v3468
  %v3470 = vmul.f32 %v3462, %v3469
  %v3471 = vmul.f32 %v3463, %v3469
  %v3472 = vmul.f32 %v3464, %v3469
  %v3473 = vmul.f32 %v3465, %v3469
  %v3474 = vlaneseq
  %v3475 = vshrl.u32 %v3474, 7
  %v3476 = vsub.s32 0, %v3475
  %v3477 = vrot.slane %v3413, %v3476
  %v3478 = vadd.f32 %v3470, %v3477
  %v3479 = vadd.f32 %v3471, %v3477
  %v3480 = vadd.f32 %v3472, %v3477
  %v3481 = vadd.f32 %v3473, %v3477
  %v3482 = vld [vmem:[%s2 + $0x3] sm:$0x3]
  %v3484 = vsel %vm328, %v3482, 0
  %3486 = vmatprep.subr.mxu0 0.0
  %3487 = vmatpush1.msra.mxu0 0.0
  %3488 = vmatprep.subr.mxu0 0.0
  %3489 = vmatpush1.msra.mxu0 0.0
  %3490 = vmatprep.subr.mxu0 0.0
  %3491 = vmatpush1.msra.mxu0 0.0
  %3492 = vmatprep.subr.mxu0 0.0
  %3493 = vmatpush1.msra.mxu0 0.0
  %3494 = vmatprep.subr.mxu0 0.0
  %3495 = vmatpush1.msra.mxu0 0.0
  %3496 = vmatprep.subr.mxu0 0.0
  %3497 = vmatpush1.msra.mxu0 0.0
  %3498 = vmatprep.subr.mxu0 0.0
  %3499 = vmatpush1.msra.mxu0 0.0
  %3500 = vmatprep.subr.mxu0 0.0
  %3501 = vmatpush1.msra.mxu0 0.0
  %3502 = vmatprep.subr.mxu0 0.0
  %3503 = vmatpush1.msra.mxu0 0.0
  %3504 = vmatprep.subr.mxu0 0.0
  %3505 = vmatpush1.msra.mxu0 0.0
  %3506 = vmatprep.subr.mxu0 0.0
  %3507 = vmatpush1.msra.mxu0 0.0
  %3508 = vmatprep.subr.mxu0 0.0
  %3509 = vmatpush1.msra.mxu0 0.0
  %3510 = vmatprep.subr.mxu0 0.0
  %3511 = vmatpush1.msra.mxu0 %v3481
  %3512 = vmatprep.subr.mxu0 0.0
  %3513 = vmatpush1.msra.mxu0 %v3480
  %3514 = vmatprep.subr.mxu0 0.0
  %3515 = vmatpush1.msra.mxu0 %v3479
  %3516 = vmatprep.subr.mxu0 0.0
  %3517 = vmatpush1.msra.mxu0 %v3478
  %3518 = vmatprep.subr.mxu0 0.0
  %3519 = vmatpush2.msra.mxu0 0.0
  %3520 = vmatprep.subr.mxu0 0.0
  %3521 = vmatpush2.msra.mxu0 0.0
  %3522 = vmatprep.subr.mxu0 0.0
  %3523 = vmatpush2.msra.mxu0 0.0
  %3524 = vmatprep.subr.mxu0 0.0
  %3525 = vmatpush2.msra.mxu0 0.0
  %3526 = vmatprep.subr.mxu0 0.0
  %3527 = vmatpush2.msra.mxu0 0.0
  %3528 = vmatprep.subr.mxu0 0.0
  %3529 = vmatpush2.msra.mxu0 0.0
  %3530 = vmatprep.subr.mxu0 0.0
  %3531 = vmatpush2.msra.mxu0 0.0
  %3532 = vmatprep.subr.mxu0 0.0
  %3533 = vmatpush2.msra.mxu0 0.0
  %3534 = vmatprep.subr.mxu0 0.0
  %3535 = vmatpush2.msra.mxu0 0.0
  %3536 = vmatprep.subr.mxu0 0.0
  %3537 = vmatpush2.msra.mxu0 0.0
  %3538 = vmatprep.subr.mxu0 0.0
  %3539 = vmatpush2.msra.mxu0 0.0
  %3540 = vmatprep.subr.mxu0 0.0
  %3541 = vmatpush2.msra.mxu0 0.0
  %3542 = vmatprep.subr.mxu0 0.0
  %3543 = vmatpush2.msra.mxu0 0.0
  %3544 = vmatprep.subr.mxu0 0.0
  %3545 = vmatpush2.msra.mxu0 0.0
  %3546 = vmatprep.subr.mxu0 0.0
  %3547 = vmatpush2.msra.mxu0 0.0
  %3548 = vmatprep.subr.mxu0 0.0
  %3549 = vmatpush2.msra.mxu0 0.0
  %3550 = vmatprep.mubr.f32.mxu0 0.0
  %3551 = vmatmul.mubr.f32.gmra.mxu0 %v3484
  %v3552 = vpop.f32.mrf.mxu0
  %v3553 = vadd.f32 0.0, %v3552
  %v3554 = vpop.f32.mrf.mxu0
  %3555 = vdwg.mxu0
  %v3556 = vld [vmem:[%s2 + $0x2] sm:$0x1]
  %v3557 = vlaneseq
  %v3558 = vshrl.u32 %v3557, 7
  %v3559 = vsub.s32 0, %v3558
  %v3560 = vrot.slane %v3556, %v3559
  %v3561 = vmul.f32 %v3553, %v3560
  %vm3562 = vcmask 254976
  %v3563 = vsel %vm3562, %v3561, 0.0
  %3564 = vadd.xlane.f32.xlu0 %v3563
  %v3565 = vpop.xlane.xlu0 %3564
  %v3566 = vxor.u32 %v3565, 2147483648
  %v3567 = vmul.f32 %v3566, 1.442695
  %v3568 = vpow.pop %v3567
  %v3569 = vadd.f32 %v3568, 1.0
  %v3570 = vrcp.pop %v3569
  %v3571 = vmul.f32 1.0, %v3570
  %vm3572 = vcmask 1024
  %3573 = vst.msk [vmem:[%s3] sm:$0x3] %vm3572, %v3571
  // Predicated region
  $region14: #{forward.1} parent=0 // pred_check
    _
  $region15: #{forward.1} parent=0 // pred_check_branch
    %3575 = sbr.rel (0) target = $region17
  $region16: #{forward.1} parent=0 // pred_region
    _
  $region17: #{forward.1} parent=0 // pred_fallthru
    _
  // Predicated region
  $region18: #{forward.1} parent=0 // pred_check
    _
  $region19: #{forward.1} parent=0 // pred_check_branch
    %3577 = sbr.rel (0) target = $region21
  $region20: #{forward.1} parent=0 // pred_region
    _
  $region21: #{forward.1} parent=0 // pred_fallthru
    _

</llo_original>
